<compile_context>
chip_gen: v6e
topology: v6e:2x2x1
jax: 0.10.0
libtpu: 0.0.40
codegen_flags: <defaults>
</compile_context>

<pallas_src>
import functools
import math

import jax
import jax.numpy as jnp
from jax import lax
from jax.experimental import pallas as pl
from jax.experimental.pallas import tpu as pltpu


def _ceil_div(a, b):
    return -(-a // b)


def _convblock_kernel(x_ref, halo_ref, w_ref, b_ref, o_ref, band_ref, *,
                      k, wp, th, cout, pixel_norm):
    """One (image, row-band) grid step: th output rows x Wp columns (wide)."""
    tm = th * wp
    # Assemble the padded-input row band (main block + halo rows) in VMEM (bf16).
    band_ref[0:tm, :] = x_ref[0]
    band_ref[tm:, :] = halo_ref[0]

    cout_pad = w_ref.shape[2]
    acc = jnp.zeros((tm, cout_pad), dtype=jnp.float32)
    # k*k shifted taps; static offsets -> plain VMEM slices feeding the MXU.
    for dy in range(k):
        for dx in range(k):
            lhs = band_ref[dy * wp + dx: dy * wp + dx + tm, :]
            acc = acc + jnp.dot(lhs, w_ref[dy * k + dx],
                                preferred_element_type=jnp.float32)

    y = acc + b_ref[...]                          # bias, f32
    if pixel_norm:
        # Mean over the *real* channels only (padded lanes are exactly zero).
        mean_sq = jnp.sum(y * y, axis=-1, keepdims=True) * (1.0 / cout)
        y = y * lax.rsqrt(mean_sq + 1e-8)         # EUP rsqrt, no vector divide
    y = jnp.where(y >= 0.0, y, 0.2 * y)           # LeakyReLU(0.2)
    o_ref[0] = y.astype(o_ref.dtype)


@functools.partial(jax.jit,
                   static_argnames=("kernel", "pad", "pixel_norm", "band_rows"))
def conv_block(x, weight, bias, *, kernel, pad, pixel_norm=True, band_rows=None):
    """x: (N, Cin, H, W) f32; weight: (Cout, Cin, k, k); bias: (Cout,)."""
    N, Cin, H, W = x.shape
    Cout = weight.shape[0]
    k = kernel

    Ho = H + 2 * pad - k + 1
    Wo = W + 2 * pad - k + 1
    Wp = W + 2 * pad
    assert Ho > 0 and Wo > 0

    # --- static tiling (python ints) ---------------------------------------
    # smallest row count q with (q * Wp) % 8 == 0  (sublane-aligned blocks)
    q = 8 // math.gcd(Wp, 8)
    # halo rows: cover the (k-1)-row shift plus the dx wrap into one more row
    need_elems = (k - 1) * (Wp + 1)
    h_halo = max(q, q * _ceil_div(need_elems, q * Wp))
    if band_rows is None:
        band_rows = max(1, 1024 // Wp)            # aim for ~1024 matmul rows/tile
    th = h_halo * max(1, _ceil_div(band_rows, h_halo))
    th = min(th, h_halo * _ceil_div(Ho, h_halo))  # don't exceed the image
    nb = _ceil_div(Ho, th)
    tm = th * Wp                                  # matmul rows per grid step
    Ho_pad = nb * th
    R = Ho_pad + h_halo                           # padded-input rows kept in HBM
    Cout_pad = _ceil_div(Cout, 128) * 128         # lane-dense output stores

    # --- operand prep (small, single fused XLA passes) ----------------------
    xq = jnp.transpose(x.astype(jnp.bfloat16), (0, 2, 3, 1))       # NHWC, bf16
    xq = jnp.pad(xq, ((0, 0), (pad, R - H - pad), (pad, pad), (0, 0)))
    xflat = xq.reshape(N, R * Wp, Cin)

    fan_in = Cin * k * k                           # EqualLR scaling
    w_scaled = weight.astype(jnp.float32) * float(math.sqrt(2.0 / fan_in))
    w_taps = w_scaled.transpose(2, 3, 1, 0).reshape(k * k, Cin, Cout)
    w_taps = jnp.pad(w_taps, ((0, 0), (0, 0), (0, Cout_pad - Cout)))
    w_taps = w_taps.astype(jnp.bfloat16)
    b_mat = jnp.pad(bias.astype(jnp.float32).reshape(1, Cout),
                    ((0, 0), (0, Cout_pad - Cout)))

    # --- VMEM budget / cost hint --------------------------------------------
    vmem_est = (2 * tm * Cin * 2 + 2 * h_halo * Wp * Cin * 2          # inputs
                + 2 * k * k * Cin * Cout_pad * 2 + 2 * Cout_pad * 4   # w, bias
                + 2 * tm * Cout_pad * 4                               # out blocks
                + (th + h_halo) * Wp * Cin * 2                        # band scratch
                + tm * Cout_pad * 4                                   # accumulator
                + (4 << 20))                                          # headroom
    vmem_limit = int(min(64 * 1024 * 1024, max(32 * 1024 * 1024, vmem_est)))

    flops = 2 * N * nb * tm * Cin * k * k * Cout_pad
    bytes_accessed = (N * R * Wp * Cin * 2 + N * nb * h_halo * Wp * Cin * 2
                      + k * k * Cin * Cout_pad * 2 + Cout_pad * 4
                      + N * Ho_pad * Wp * Cout_pad * 4)
    transcendentals = N * nb * tm if pixel_norm else 0

    kernel_fn = functools.partial(_convblock_kernel, k=k, wp=Wp, th=th,
                                  cout=Cout, pixel_norm=pixel_norm)
    halo_stride = th // h_halo

    out_flat = pl.pallas_call(
        kernel_fn,
        out_shape=jax.ShapeDtypeStruct((N, Ho_pad * Wp, Cout_pad), x.dtype),
        grid_spec=pltpu.PrefetchScalarGridSpec(
            num_scalar_prefetch=0,
            grid=(N, nb),
            in_specs=[
                # main band: th rows worth of padded input (auto-pipelined)
                pl.BlockSpec((1, tm, Cin), lambda n, b: (n, b, 0)),
                # halo: the next h_halo padded-input rows (same array, shifted map)
                pl.BlockSpec((1, h_halo * Wp, Cin),
                             lambda n, b: (n, (b + 1) * halo_stride, 0)),
                # per-tap weights and bias, VMEM-resident across the grid
                pl.BlockSpec((k * k, Cin, Cout_pad), lambda n, b: (0, 0, 0)),
                pl.BlockSpec((1, Cout_pad), lambda n, b: (0, 0)),
            ],
            out_specs=pl.BlockSpec((1, tm, Cout_pad), lambda n, b: (n, b, 0)),
            scratch_shapes=[
                pltpu.VMEM(((th + h_halo) * Wp, Cin), jnp.bfloat16),
            ],
        ),
        compiler_params=pltpu.CompilerParams(
            dimension_semantics=("parallel", "parallel"),
            vmem_limit_bytes=vmem_limit),
        cost_estimate=pl.CostEstimate(flops=flops,
                                      transcendentals=transcendentals,
                                      bytes_accessed=bytes_accessed),
    )(xflat, xflat, w_taps, b_mat)

    # (N, Ho_pad, Wp, Cout_pad) -> valid region -> NCHW
    out = out_flat.reshape(N, Ho_pad, Wp, Cout_pad)[:, :Ho, :Wo, :Cout]
    return jnp.transpose(out, (0, 3, 1, 2))


def _reference(x, weight, bias, kernel, pad):
    """Pure-JAX f32 reference matching the PyTorch forward."""
    fan_in = weight.shape[1] * kernel * kernel
    w = weight * jnp.float32(math.sqrt(2.0 / fan_in))
    y = lax.conv_general_dilated(
        x, w, window_strides=(1, 1), padding=[(pad, pad), (pad, pad)],
        dimension_numbers=("NCHW", "OIHW", "NCHW"))
    y = y + bias.reshape(1, -1, 1, 1)
    y = y / jnp.sqrt(jnp.mean(y * y, axis=1, keepdims=True) + 1e-8)
    return jnp.where(y >= 0, y, 0.2 * y)


if __name__ == "__main__":
    # ConvBlock(in_channel=4, out_channel=8, kernel=3, pad=1, pixel_norm=True)
    N, Cin, H, W = 2, 4, 16, 16
    Cout, kern, pad = 8, 3, 1

    key = jax.random.PRNGKey(0)
    kx, kw, kb = jax.random.split(key, 3)
    x = jax.random.normal(kx, (N, Cin, H, W), dtype=jnp.float32)
    # EqualConv2d.__init__: conv.weight.data.normal_(); bias is a free parameter
    weight = jax.random.normal(kw, (Cout, Cin, kern, kern), dtype=jnp.float32)
    bias = 0.5 * jax.random.normal(kb, (Cout,), dtype=jnp.float32)

    ref = _reference(x, weight, bias, kern, pad)

    # Default (single-band) tiling.
    out = jax.block_until_ready(conv_block(x, weight, bias, kernel=kern, pad=pad))
    assert out.shape == (N, Cout, H, W), out.shape
    err = float(jnp.max(jnp.abs(out - ref)))
    # bf16 MXU inputs -> loosened tolerance vs. the f32 reference.
    assert jnp.allclose(out, ref, atol=5e-2, rtol=5e-2), err

    # Multi-band tiling path (2 bands of 8 output rows).
    out2 = jax.block_until_ready(
        conv_block(x, weight, bias, kernel=kern, pad=pad, band_rows=8))
    err2 = float(jnp.max(jnp.abs(out2 - ref)))
    assert jnp.allclose(out2, ref, atol=5e-2, rtol=5e-2), err2

    print("KERNEL_OK")
</pallas_src>

<mosaic_0001>
module attributes {stable_mosaic.version = 11 : i64} {
  func.func @_convblock_kernel(%arg0: i32, %arg1: i32, %arg2: memref<1x288x4xbf16, #tpu.memory_space<vmem>>, %arg3: memref<1x72x4xbf16, #tpu.memory_space<vmem>>, %arg4: memref<9x4x128xbf16, #tpu.memory_space<vmem>>, %arg5: memref<1x128xf32, #tpu.memory_space<vmem>>, %arg6: memref<1x288x128xf32, #tpu.memory_space<vmem>>, %arg7: memref<360x4xbf16, #tpu.memory_space<vmem>>) attributes {dimension_semantics = [#tpu.dimension_semantics<parallel>, #tpu.dimension_semantics<parallel>], iteration_bounds = array<i64: 2, 1>, scalar_prefetch = 0 : i64, scratch_operands = 1 : i64, tpu.core_type = #tpu.core_type<tc>, window_params = [{transform_indices = @transform_0, window_bounds = array<i64: 1, 288, 4>}, {transform_indices = @transform_1, window_bounds = array<i64: 1, 72, 4>}, {pipeline_mode = #tpu.pipeline_mode<synchronous>, transform_indices = @transform_2, window_bounds = array<i64: 9, 4, 128>}, {pipeline_mode = #tpu.pipeline_mode<synchronous>, transform_indices = @transform_3, window_bounds = array<i64: 1, 128>}, {transform_indices = @transform_4, window_bounds = array<i64: 1, 288, 128>}]} {
    %c0 = arith.constant 0 : index
    %c0_0 = arith.constant 0 : index
    %c0_1 = arith.constant 0 : index
    %0 = vector.load %arg2[%c0, %c0_0, %c0_1] : memref<1x288x4xbf16, #tpu.memory_space<vmem>>, vector<1x288x4xbf16>
    %1 = vector.shape_cast %0 : vector<1x288x4xbf16> to vector<288x4xbf16>
    %c0_2 = arith.constant 0 : index
    %c0_3 = arith.constant 0 : index
    %2 = vector.load %arg7[%c0_2, %c0_3] : memref<360x4xbf16, #tpu.memory_space<vmem>>, vector<288x4xbf16>
    tpu.vector_store %arg7[%c0_2, %c0_3], %1 {strides = array<i32>} : memref<360x4xbf16, #tpu.memory_space<vmem>>, vector<288x4xbf16>,
    %c0_4 = arith.constant 0 : index
    %c0_5 = arith.constant 0 : index
    %c0_6 = arith.constant 0 : index
    %3 = vector.load %arg3[%c0_4, %c0_5, %c0_6] : memref<1x72x4xbf16, #tpu.memory_space<vmem>>, vector<1x72x4xbf16>
    %4 = vector.shape_cast %3 : vector<1x72x4xbf16> to vector<72x4xbf16>
    %c288 = arith.constant 288 : index
    %c0_7 = arith.constant 0 : index
    %5 = vector.load %arg7[%c288, %c0_7] : memref<360x4xbf16, #tpu.memory_space<vmem>>, vector<72x4xbf16>
    tpu.vector_store %arg7[%c288, %c0_7], %4 {strides = array<i32>} : memref<360x4xbf16, #tpu.memory_space<vmem>>, vector<72x4xbf16>,
    %cst = arith.constant 0.000000e+00 : f32
    %6 = vector.broadcast %cst : f32 to vector<288x128xf32>
    %c0_8 = arith.constant 0 : index
    %c0_9 = arith.constant 0 : index
    %7 = vector.load %arg7[%c0_8, %c0_9] : memref<360x4xbf16, #tpu.memory_space<vmem>>, vector<288x4xbf16>
    %c0_10 = arith.constant 0 : index
    %c0_11 = arith.constant 0 : index
    %c0_12 = arith.constant 0 : index
    %8 = vector.load %arg4[%c0_10, %c0_11, %c0_12] : memref<9x4x128xbf16, #tpu.memory_space<vmem>>, vector<1x4x128xbf16>
    %9 = vector.shape_cast %8 : vector<1x4x128xbf16> to vector<4x128xbf16>
    %cst_13 = arith.constant dense<0.000000e+00> : vector<288x128xf32>
    %10 = tpu.matmul %7, %9, %cst_13 {dimension_numbers = #tpu.dot_dimension_numbers<[1], [0], [0], [1], [0, 0, 1, 1], [], []>} : vector<288x4xbf16>, vector<4x128xbf16>, vector<288x128xf32> -> vector<288x128xf32>
    %11 = arith.addf %6, %10 : vector<288x128xf32>
    %c1 = arith.constant 1 : index
    %c0_14 = arith.constant 0 : index
    %12 = vector.load %arg7[%c1, %c0_14] : memref<360x4xbf16, #tpu.memory_space<vmem>>, vector<288x4xbf16>
    %c1_15 = arith.constant 1 : index
    %c0_16 = arith.constant 0 : index
    %c0_17 = arith.constant 0 : index
    %13 = vector.load %arg4[%c1_15, %c0_16, %c0_17] : memref<9x4x128xbf16, #tpu.memory_space<vmem>>, vector<1x4x128xbf16>
    %14 = vector.shape_cast %13 : vector<1x4x128xbf16> to vector<4x128xbf16>
    %cst_18 = arith.constant dense<0.000000e+00> : vector<288x128xf32>
    %15 = tpu.matmul %12, %14, %cst_18 {dimension_numbers = #tpu.dot_dimension_numbers<[1], [0], [0], [1], [0, 0, 1, 1], [], []>} : vector<288x4xbf16>, vector<4x128xbf16>, vector<288x128xf32> -> vector<288x128xf32>
    %16 = arith.addf %11, %15 : vector<288x128xf32>
    %c2 = arith.constant 2 : index
    %c0_19 = arith.constant 0 : index
    %17 = vector.load %arg7[%c2, %c0_19] : memref<360x4xbf16, #tpu.memory_space<vmem>>, vector<288x4xbf16>
    %c2_20 = arith.constant 2 : index
    %c0_21 = arith.constant 0 : index
    %c0_22 = arith.constant 0 : index
    %18 = vector.load %arg4[%c2_20, %c0_21, %c0_22] : memref<9x4x128xbf16, #tpu.memory_space<vmem>>, vector<1x4x128xbf16>
    %19 = vector.shape_cast %18 : vector<1x4x128xbf16> to vector<4x128xbf16>
    %cst_23 = arith.constant dense<0.000000e+00> : vector<288x128xf32>
    %20 = tpu.matmul %17, %19, %cst_23 {dimension_numbers = #tpu.dot_dimension_numbers<[1], [0], [0], [1], [0, 0, 1, 1], [], []>} : vector<288x4xbf16>, vector<4x128xbf16>, vector<288x128xf32> -> vector<288x128xf32>
    %21 = arith.addf %16, %20 : vector<288x128xf32>
    %c18 = arith.constant 18 : index
    %c0_24 = arith.constant 0 : index
    %22 = vector.load %arg7[%c18, %c0_24] : memref<360x4xbf16, #tpu.memory_space<vmem>>, vector<288x4xbf16>
    %c3 = arith.constant 3 : index
    %c0_25 = arith.constant 0 : index
    %c0_26 = arith.constant 0 : index
    %23 = vector.load %arg4[%c3, %c0_25, %c0_26] : memref<9x4x128xbf16, #tpu.memory_space<vmem>>, vector<1x4x128xbf16>
    %24 = vector.shape_cast %23 : vector<1x4x128xbf16> to vector<4x128xbf16>
    %cst_27 = arith.constant dense<0.000000e+00> : vector<288x128xf32>
    %25 = tpu.matmul %22, %24, %cst_27 {dimension_numbers = #tpu.dot_dimension_numbers<[1], [0], [0], [1], [0, 0, 1, 1], [], []>} : vector<288x4xbf16>, vector<4x128xbf16>, vector<288x128xf32> -> vector<288x128xf32>
    %26 = arith.addf %21, %25 : vector<288x128xf32>
    %c19 = arith.constant 19 : index
    %c0_28 = arith.constant 0 : index
    %27 = vector.load %arg7[%c19, %c0_28] : memref<360x4xbf16, #tpu.memory_space<vmem>>, vector<288x4xbf16>
    %c4 = arith.constant 4 : index
    %c0_29 = arith.constant 0 : index
    %c0_30 = arith.constant 0 : index
    %28 = vector.load %arg4[%c4, %c0_29, %c0_30] : memref<9x4x128xbf16, #tpu.memory_space<vmem>>, vector<1x4x128xbf16>
    %29 = vector.shape_cast %28 : vector<1x4x128xbf16> to vector<4x128xbf16>
    %cst_31 = arith.constant dense<0.000000e+00> : vector<288x128xf32>
    %30 = tpu.matmul %27, %29, %cst_31 {dimension_numbers = #tpu.dot_dimension_numbers<[1], [0], [0], [1], [0, 0, 1, 1], [], []>} : vector<288x4xbf16>, vector<4x128xbf16>, vector<288x128xf32> -> vector<288x128xf32>
    %31 = arith.addf %26, %30 : vector<288x128xf32>
    %c20 = arith.constant 20 : index
    %c0_32 = arith.constant 0 : index
    %32 = vector.load %arg7[%c20, %c0_32] : memref<360x4xbf16, #tpu.memory_space<vmem>>, vector<288x4xbf16>
    %c5 = arith.constant 5 : index
    %c0_33 = arith.constant 0 : index
    %c0_34 = arith.constant 0 : index
    %33 = vector.load %arg4[%c5, %c0_33, %c0_34] : memref<9x4x128xbf16, #tpu.memory_space<vmem>>, vector<1x4x128xbf16>
    %34 = vector.shape_cast %33 : vector<1x4x128xbf16> to vector<4x128xbf16>
    %cst_35 = arith.constant dense<0.000000e+00> : vector<288x128xf32>
    %35 = tpu.matmul %32, %34, %cst_35 {dimension_numbers = #tpu.dot_dimension_numbers<[1], [0], [0], [1], [0, 0, 1, 1], [], []>} : vector<288x4xbf16>, vector<4x128xbf16>, vector<288x128xf32> -> vector<288x128xf32>
    %36 = arith.addf %31, %35 : vector<288x128xf32>
    %c36 = arith.constant 36 : index
    %c0_36 = arith.constant 0 : index
    %37 = vector.load %arg7[%c36, %c0_36] : memref<360x4xbf16, #tpu.memory_space<vmem>>, vector<288x4xbf16>
    %c6 = arith.constant 6 : index
    %c0_37 = arith.constant 0 : index
    %c0_38 = arith.constant 0 : index
    %38 = vector.load %arg4[%c6, %c0_37, %c0_38] : memref<9x4x128xbf16, #tpu.memory_space<vmem>>, vector<1x4x128xbf16>
    %39 = vector.shape_cast %38 : vector<1x4x128xbf16> to vector<4x128xbf16>
    %cst_39 = arith.constant dense<0.000000e+00> : vector<288x128xf32>
    %40 = tpu.matmul %37, %39, %cst_39 {dimension_numbers = #tpu.dot_dimension_numbers<[1], [0], [0], [1], [0, 0, 1, 1], [], []>} : vector<288x4xbf16>, vector<4x128xbf16>, vector<288x128xf32> -> vector<288x128xf32>
    %41 = arith.addf %36, %40 : vector<288x128xf32>
    %c37 = arith.constant 37 : index
    %c0_40 = arith.constant 0 : index
    %42 = vector.load %arg7[%c37, %c0_40] : memref<360x4xbf16, #tpu.memory_space<vmem>>, vector<288x4xbf16>
    %c7 = arith.constant 7 : index
    %c0_41 = arith.constant 0 : index
    %c0_42 = arith.constant 0 : index
    %43 = vector.load %arg4[%c7, %c0_41, %c0_42] : memref<9x4x128xbf16, #tpu.memory_space<vmem>>, vector<1x4x128xbf16>
    %44 = vector.shape_cast %43 : vector<1x4x128xbf16> to vector<4x128xbf16>
    %cst_43 = arith.constant dense<0.000000e+00> : vector<288x128xf32>
    %45 = tpu.matmul %42, %44, %cst_43 {dimension_numbers = #tpu.dot_dimension_numbers<[1], [0], [0], [1], [0, 0, 1, 1], [], []>} : vector<288x4xbf16>, vector<4x128xbf16>, vector<288x128xf32> -> vector<288x128xf32>
    %46 = arith.addf %41, %45 : vector<288x128xf32>
    %c38 = arith.constant 38 : index
    %c0_44 = arith.constant 0 : index
    %47 = vector.load %arg7[%c38, %c0_44] : memref<360x4xbf16, #tpu.memory_space<vmem>>, vector<288x4xbf16>
    %c8 = arith.constant 8 : index
    %c0_45 = arith.constant 0 : index
    %c0_46 = arith.constant 0 : index
    %48 = vector.load %arg4[%c8, %c0_45, %c0_46] : memref<9x4x128xbf16, #tpu.memory_space<vmem>>, vector<1x4x128xbf16>
    %49 = vector.shape_cast %48 : vector<1x4x128xbf16> to vector<4x128xbf16>
    %cst_47 = arith.constant dense<0.000000e+00> : vector<288x128xf32>
    %50 = tpu.matmul %47, %49, %cst_47 {dimension_numbers = #tpu.dot_dimension_numbers<[1], [0], [0], [1], [0, 0, 1, 1], [], []>} : vector<288x4xbf16>, vector<4x128xbf16>, vector<288x128xf32> -> vector<288x128xf32>
    %51 = arith.addf %46, %50 : vector<288x128xf32>
    %c0_48 = arith.constant 0 : index
    %c0_49 = arith.constant 0 : index
    %52 = vector.load %arg5[%c0_48, %c0_49] : memref<1x128xf32, #tpu.memory_space<vmem>>, vector<1x128xf32>
    %53 = vector.broadcast %52 : vector<1x128xf32> to vector<288x128xf32>
    %54 = arith.addf %51, %53 : vector<288x128xf32>
    %55 = arith.mulf %54, %54 : vector<288x128xf32>
    %cst_50 = arith.constant dense<0.000000e+00> : vector<288xf32>
    %56 = vector.multi_reduction <add>, %55, %cst_50 [1] : vector<288x128xf32> to vector<288xf32>
    %57 = vector.shape_cast %56 : vector<288xf32> to vector<288x1xf32>
    %cst_51 = arith.constant 1.250000e-01 : f32
    %58 = vector.broadcast %cst_51 : f32 to vector<288x1xf32>
    %59 = arith.mulf %57, %58 : vector<288x1xf32>
    %cst_52 = arith.constant 9.99999993E-9 : f32
    %60 = vector.broadcast %cst_52 : f32 to vector<288x1xf32>
    %61 = arith.addf %59, %60 : vector<288x1xf32>
    %62 = math.rsqrt %61 : vector<288x1xf32>
    %63 = vector.broadcast %62 : vector<288x1xf32> to vector<288x128xf32>
    %64 = arith.mulf %54, %63 : vector<288x128xf32>
    %cst_53 = arith.constant 0.000000e+00 : f32
    %65 = vector.broadcast %cst_53 : f32 to vector<288x128xf32>
    %66 = arith.cmpf oge, %64, %65 : vector<288x128xf32>
    %cst_54 = arith.constant 2.000000e-01 : f32
    %67 = vector.broadcast %cst_54 : f32 to vector<288x128xf32>
    %68 = arith.mulf %67, %64 : vector<288x128xf32>
    %69 = arith.select %66, %64, %68 : vector<288x128xi1>, vector<288x128xf32>
    %c0_55 = arith.constant 0 : index
    %c0_56 = arith.constant 0 : index
    %c0_57 = arith.constant 0 : index
    %70 = vector.load %arg6[%c0_55, %c0_56, %c0_57] : memref<1x288x128xf32, #tpu.memory_space<vmem>>, vector<1x288x128xf32>
    %71 = vector.shape_cast %70 : vector<1x288x128xf32> to vector<288x128xf32>
    %72 = vector.shape_cast %69 : vector<288x128xf32> to vector<1x288x128xf32>
    tpu.vector_store %arg6[%c0_55, %c0_56, %c0_57], %72 {strides = array<i32>} : memref<1x288x128xf32, #tpu.memory_space<vmem>>, vector<1x288x128xf32>,
    return
  }
  func.func @transform_0(%arg0: i32, %arg1: i32) -> (i32, i32, i32) {
    %c0_i32 = arith.constant 0 : i32
    %c0_i32_0 = arith.constant 0 : i32
    return %arg0, %arg1, %c0_i32 : i32, i32, i32
  }
  func.func @transform_1(%arg0: i32, %arg1: i32) -> (i32, i32, i32) {
    %c1_i32 = arith.constant 1 : i32
    %0 = arith.addi %arg1, %c1_i32 : i32
    %c4_i32 = arith.constant 4 : i32
    %1 = arith.muli %0, %c4_i32 : i32
    %c0_i32 = arith.constant 0 : i32
    %c0_i32_0 = arith.constant 0 : i32
    return %arg0, %1, %c0_i32 : i32, i32, i32
  }
  func.func @transform_2(%arg0: i32, %arg1: i32) -> (i32, i32, i32) {
    %c0_i32 = arith.constant 0 : i32
    %c0_i32_0 = arith.constant 0 : i32
    %c0_i32_1 = arith.constant 0 : i32
    %c0_i32_2 = arith.constant 0 : i32
    return %c0_i32, %c0_i32_0, %c0_i32_1 : i32, i32, i32
  }
  func.func @transform_3(%arg0: i32, %arg1: i32) -> (i32, i32) {
    %c0_i32 = arith.constant 0 : i32
    %c0_i32_0 = arith.constant 0 : i32
    %c0_i32_1 = arith.constant 0 : i32
    return %c0_i32, %c0_i32_0 : i32, i32
  }
  func.func @transform_4(%arg0: i32, %arg1: i32) -> (i32, i32, i32) {
    %c0_i32 = arith.constant 0 : i32
    %c0_i32_0 = arith.constant 0 : i32
    return %arg0, %arg1, %c0_i32 : i32, i32, i32
  }
}

</mosaic_0001>

<llo_original>
// kernel: conv_block.1
$region0: #{conv_block.1}
  #allocation0 [shape = 'u32[]', space=smem, size = 0x4, offset = 0x4, fixed_abs, tag = 'smem constant byte address 0x4 - core index']
  #allocation1 [shape = 'u32[144,128]{1,0:T(1,128)}', space=vmem, size = 0x12000, scoped, tag = 'internal scratch']
  #allocation2 [shape = 'bf16[360,4]{1,0:T(8,128)(2,1)}', space=vmem, size = 0x16800, scoped, tag = 'scratch operand']
  %s0 = inlined_call_operand.vmem [shape: bf16[2,360,4], index: 0, kind: input, shape index: {}, may-alias: {0,1}]
  %s1 = inlined_call_operand.vmem [shape: bf16[2,360,4], index: 1, kind: input, shape index: {}, may-alias: {0,1}]
  %s2 = inlined_call_operand.vmem [shape: bf16[9,4,128], index: 2, kind: input, shape index: {}]
  %s3 = inlined_call_operand.vmem [shape: f32[1,128], index: 3, kind: input, shape index: {}]
  %s4 = inlined_call_operand.vmem [shape: f32[2,288,128], index: 4, kind: output, shape index: {}]
  %s5 = sld [smem:[#allocation0]]
  $region49: #{conv_block.1} parent=0
    _
  %s7 = ssub.s32 1, %s5
  %s8 = scalar_select 0, %s7, %s5
  loop: start=0, step=1, limit=4
  $region2: #{conv_block.1} parent=0 // loop_pre_header
    _
  $region3: #{conv_block.1} parent=0 // loop_header
    %s10 = sphi 0, %s14
    %p11 = scmp.ge.s32.totalorder %s10, 4
    %s17 = sphi 0, %s29
    %s18 = sphi 0, %s25
    %s19 = sphi 0, %s17
    %s20 = sphi 0, %s18
    %s21 = sphi 0, %s19
    %s22 = sphi 0, %s20
    %s34 = sphi 0, %s36
    %s37 = sphi 0, %s34
    %s38 = sphi 0, %s37
    %s54 = sphi 0, %s38
    %s66 = sphi 0, %s68
    %s69 = sphi 0, %s66
    %s70 = sphi 0, %s69
    %s86 = sphi 0, %s70
    %s90 = sphi 0, %s90
    %s92 = sphi 0, %s90
    %s93 = sphi 0, %s92
    %s107 = sphi 0, %s93
    %s111 = sphi 0, %s111
    %s113 = sphi 0, %s111
    %s114 = sphi 0, %s113
    %s128 = sphi 0, %s114
    %s136 = sphi 0, %s138
    %s139 = sphi 0, %s136
    %s140 = sphi 0, %s139
    %s156 = sphi 0, %s140
  $region4: #{conv_block.1} parent=0 // loop_header_branch
    %13 = sbr.rel (%p11) target = $region8
  $region5: #{conv_block.1} parent=0 // loop_body
    %s15 = ssub.s32 %s10, 1
    %s16 = ssub.s32 %s10, 2
    %s23 = sadd.s32 1, %s18
    %p24 = scmp.ge.s32.totalorder %s23, 1
    %s25 = scalar_select %p24, 0, %s23
    %s26 = sadd.s32 1, %s17
    %s27 = scalar_select %p24, %s26, %s17
    %p28 = scmp.ge.s32.totalorder %s27, 2
    %s29 = scalar_select %p28, 0, %s27
    %s30 = ssub.s32 %s17, %s29
    %s31 = ssub.s32 %s18, %s25
    %s32 = sor.u32 %s30, %s31
    %p33 = scmp.eq.s32.totalorder %s32, 0
    %s35 = sadd.s32 %s34, 1
    %s36 = scalar_select %p33, %s34, %s35
    %p39 = pneg %p33
    %p40 = scmp.eq.s32.totalorder %s10, 1
    %p41 = por %p39, %p40
    %p42 = scmp.ne.s32.totalorder %s34, %s37
    %p43 = scmp.eq.s32.totalorder %s10, 0
    %p44 = por %p42, %p43
    %p45 = scmp.ne.s32.totalorder %s34, %s37
    %p46 = scmp.eq.s32.totalorder %s15, 1
    %p47 = por %p45, %p46
    %p48 = scmp.ne.s32.totalorder %s37, %s38
    %p49 = scmp.eq.s32.totalorder %s15, 0
    %p50 = por %p48, %p49
    %p51 = scmp.ne.s32.totalorder %s37, %s38
    %p52 = scmp.eq.s32.totalorder %s16, 1
    %p53 = por %p51, %p52
    %p55 = scmp.ne.s32.totalorder %s38, %s54
    %p56 = scmp.eq.s32.totalorder %s16, 0
    %p57 = por %p55, %p56
    %s58 = sadd.s32 %s18, 1
    %s59 = smul.u32 %s58, 4
    %s60 = sadd.s32 %s25, 1
    %s61 = smul.u32 %s60, 4
    %s62 = ssub.s32 %s17, %s29
    %s63 = ssub.s32 %s59, %s61
    %s64 = sor.u32 %s62, %s63
    %p65 = scmp.eq.s32.totalorder %s64, 0
    %s67 = sadd.s32 %s66, 1
    %s68 = scalar_select %p65, %s66, %s67
    %p71 = pneg %p65
    %p72 = scmp.eq.s32.totalorder %s10, 1
    %p73 = por %p71, %p72
    %p74 = scmp.ne.s32.totalorder %s66, %s69
    %p75 = scmp.eq.s32.totalorder %s10, 0
    %p76 = por %p74, %p75
    %p77 = scmp.ne.s32.totalorder %s66, %s69
    %p78 = scmp.eq.s32.totalorder %s15, 1
    %p79 = por %p77, %p78
    %p80 = scmp.ne.s32.totalorder %s69, %s70
    %p81 = scmp.eq.s32.totalorder %s15, 0
    %p82 = por %p80, %p81
    %p83 = scmp.ne.s32.totalorder %s69, %s70
    %p84 = scmp.eq.s32.totalorder %s16, 1
    %p85 = por %p83, %p84
    %p87 = scmp.ne.s32.totalorder %s70, %s86
    %p88 = scmp.eq.s32.totalorder %s16, 0
    %p89 = por %p87, %p88
    %s91 = sadd.s32 %s90, 1
    %p94 = scmp.eq.s32.totalorder %s10, 1
    %p95 = scmp.ne.s32.totalorder %s90, %s92
    %p96 = scmp.eq.s32.totalorder %s10, 0
    %p97 = por %p95, %p96
    %p98 = scmp.ne.s32.totalorder %s90, %s92
    %p99 = scmp.eq.s32.totalorder %s15, 1
    %p100 = por %p98, %p99
    %p101 = scmp.ne.s32.totalorder %s92, %s93
    %p102 = scmp.eq.s32.totalorder %s15, 0
    %p103 = por %p101, %p102
    %p104 = scmp.ne.s32.totalorder %s92, %s93
    %p105 = scmp.eq.s32.totalorder %s16, 1
    %p106 = por %p104, %p105
    %p108 = scmp.ne.s32.totalorder %s93, %s107
    %p109 = scmp.eq.s32.totalorder %s16, 0
    %p110 = por %p108, %p109
    %s112 = sadd.s32 %s111, 1
    %p115 = scmp.eq.s32.totalorder %s10, 1
    %p116 = scmp.ne.s32.totalorder %s111, %s113
    %p117 = scmp.eq.s32.totalorder %s10, 0
    %p118 = por %p116, %p117
    %p119 = scmp.ne.s32.totalorder %s111, %s113
    %p120 = scmp.eq.s32.totalorder %s15, 1
    %p121 = por %p119, %p120
    %p122 = scmp.ne.s32.totalorder %s113, %s114
    %p123 = scmp.eq.s32.totalorder %s15, 0
    %p124 = por %p122, %p123
    %p125 = scmp.ne.s32.totalorder %s113, %s114
    %p126 = scmp.eq.s32.totalorder %s16, 1
    %p127 = por %p125, %p126
    %p129 = scmp.ne.s32.totalorder %s114, %s128
    %p130 = scmp.eq.s32.totalorder %s16, 0
    %p131 = por %p129, %p130
    %s132 = ssub.s32 %s17, %s29
    %s133 = ssub.s32 %s18, %s25
    %s134 = sor.u32 %s132, %s133
    %p135 = scmp.eq.s32.totalorder %s134, 0
    %s137 = sadd.s32 %s136, 1
    %s138 = scalar_select %p135, %s136, %s137
    %p141 = pneg %p135
    %p142 = scmp.eq.s32.totalorder %s10, 1
    %p143 = por %p141, %p142
    %p144 = scmp.ne.s32.totalorder %s136, %s139
    %p145 = scmp.eq.s32.totalorder %s10, 0
    %p146 = por %p144, %p145
    %p147 = scmp.ne.s32.totalorder %s136, %s139
    %p148 = scmp.eq.s32.totalorder %s15, 1
    %p149 = por %p147, %p148
    %p150 = scmp.ne.s32.totalorder %s139, %s140
    %p151 = scmp.eq.s32.totalorder %s15, 0
    %p152 = por %p150, %p151
    %p153 = scmp.ne.s32.totalorder %s139, %s140
    %p154 = scmp.eq.s32.totalorder %s16, 1
    %p155 = por %p153, %p154
    %p157 = scmp.ne.s32.totalorder %s140, %s156
    %p158 = scmp.eq.s32.totalorder %s16, 0
    %p159 = por %p157, %p158
    %p160 = scmp.le.s32.totalorder 1, %s10
    %p161 = scmp.lt.s32.totalorder %s10, 3
    %p162 = pnand %p160, %p161
    %p163 = pneg %p162
    // Predicated region
    $region9: #{conv_block.1} parent=5 // pred_check
      _
    $region10: #{conv_block.1} parent=5 // pred_check_branch
      %165 = sbr.rel (%p162) target = $region12
    $region11: #{conv_block.1} parent=5 // pred_region
      %s166 = ssub.s32 %s10, 1
      // Predicated region
      $region13: #{conv_block.1} parent=11 // pred_check
        %p167 = pneg %p103
      $region14: #{conv_block.1} parent=11 // pred_check_branch
        %169 = sbr.rel (%p167) target = $region16
      $region15: #{conv_block.1} parent=11 // pred_region
        _
      $region16: #{conv_block.1} parent=11 // pred_fallthru
        _
      // Predicated region
      $region17: #{conv_block.1} parent=11 // pred_check
        %p170 = pneg %p124
      $region18: #{conv_block.1} parent=11 // pred_check_branch
        %172 = sbr.rel (%p170) target = $region20
      $region19: #{conv_block.1} parent=11 // pred_region
        _
      $region20: #{conv_block.1} parent=11 // pred_fallthru
        _
    $region12: #{conv_block.1} parent=5 // pred_fallthru
      _
    %p173 = scmp.lt.s32.totalorder %s10, 2
    // Predicated region
    $region21: #{conv_block.1} parent=5 // pred_check
      %p174 = pneg %p173
    $region22: #{conv_block.1} parent=5 // pred_check_branch
      %176 = sbr.rel (%p174) target = $region24
    $region23: #{conv_block.1} parent=5 // pred_region
      // Predicated region
      $region25: #{conv_block.1} parent=23 // pred_check
        %p177 = pneg %p44
      $region26: #{conv_block.1} parent=23 // pred_check_branch
        %179 = sbr.rel (%p177) target = $region28
      $region27: #{conv_block.1} parent=23 // pred_region
        %s180 = smul.u32 36, %s18
        %s181 = ssub.s32 45, %s180
        %p182 = scmp.lt.s32.totalorder %s181, 36
        %s183 = scalar_select %p182, %s181, 36
        %s184 = smul.u32 64, %s183
        %p185 = scmp.lt.s32.totalorder %s17, 1
        %s186 = scalar_select %p185, %s17, 1
        %p187 = scmp.lt.s32.totalorder %s180, 44
        %s188 = scalar_select %p187, %s180, 44
        %s189 = smul.addr %s186, 45
        %s190 = sadd.s32 %s188, %s189
        %s191 = smul.addr %s190, 4
        %s192 = scalar_lea.vmem %s0, %s191
        %s193 = smul.u32 36, %s18
        %s194 = ssub.s32 45, %s193
        %p195 = scmp.lt.s32.totalorder %s194, 36
        %s196 = scalar_select %p195, %s194, 36
        %s197 = smul.u32 64, %s196
      $region28: #{conv_block.1} parent=23 // pred_fallthru
        _
      // Predicated region
      $region29: #{conv_block.1} parent=23 // pred_check
        %p198 = pneg %p76
      $region30: #{conv_block.1} parent=23 // pred_check_branch
        %200 = sbr.rel (%p198) target = $region32
      $region31: #{conv_block.1} parent=23 // pred_region
        %s201 = sadd.s32 %s18, 1
        %s202 = smul.u32 %s201, 4
        %s203 = smul.u32 9, %s202
        %p204 = scmp.lt.s32.totalorder %s17, 1
        %s205 = scalar_select %p204, %s17, 1
        %p206 = scmp.lt.s32.totalorder %s203, 44
        %s207 = scalar_select %p206, %s203, 44
        %s208 = smul.addr %s205, 45
        %s209 = sadd.s32 %s207, %s208
        %s210 = smul.addr %s209, 4
        %s211 = scalar_lea.vmem %s1, %s210
        %s212 = sadd.s32 %s18, 1
        %s213 = smul.u32 %s212, 4
        %s214 = smul.u32 9, %s213
      $region32: #{conv_block.1} parent=23 // pred_fallthru
        _
    $region24: #{conv_block.1} parent=5 // pred_fallthru
      _
    %p215 = scmp.le.s32.totalorder 1, %s10
    %p216 = scmp.lt.s32.totalorder %s10, 3
    %p217 = pnand %p215, %p216
    %p218 = pneg %p217
    // Predicated region
    $region33: #{conv_block.1} parent=5 // pred_check
      _
    $region34: #{conv_block.1} parent=5 // pred_check_branch
      %220 = sbr.rel (%p217) target = $region36
    $region35: #{conv_block.1} parent=5 // pred_region
      %s221 = ssub.s32 %s10, 1
      %s222 = smul.u32 36, %s20
      %s223 = ssub.s32 45, %s222
      %p224 = scmp.lt.s32.totalorder %s223, 36
      %s225 = scalar_select %p224, %s223, 36
      %s226 = smul.u32 64, %s225
      %p227 = scmp.lt.s32.totalorder %s19, 1
      %s228 = scalar_select %p227, %s19, 1
      %p229 = scmp.lt.s32.totalorder %s222, 44
      %s230 = scalar_select %p229, %s222, 44
      %s231 = smul.addr %s228, 45
      %s232 = sadd.s32 %s230, %s231
      %s233 = smul.addr %s232, 4
      %s234 = scalar_lea.vmem %s0, %s233
      %p235 = pneg %p50
      %p236 = pneg %p47
      %s237 = sadd.s32 %s20, 1
      %s238 = smul.u32 %s237, 4
      %s239 = smul.u32 9, %s238
      %p240 = scmp.lt.s32.totalorder %s19, 1
      %s241 = scalar_select %p240, %s19, 1
      %p242 = scmp.lt.s32.totalorder %s239, 44
      %s243 = scalar_select %p242, %s239, 44
      %s244 = smul.addr %s241, 45
      %s245 = sadd.s32 %s243, %s244
      %s246 = smul.addr %s245, 4
      %s247 = scalar_lea.vmem %s1, %s246
      %p248 = pneg %p82
      %p249 = pneg %p79
      %p250 = pneg %p103
      %p251 = pneg %p100
      %p252 = pneg %p124
      %p253 = pneg %p121
      %p254 = pneg %p152
      %p255 = pneg %p149
      %s256 = smul.u32 36, %s20
      %p257 = scmp.lt.s32.totalorder %s19, 1
      %s258 = scalar_select %p257, %s19, 1
      %p259 = scmp.lt.s32.totalorder %s256, 35
      %s260 = scalar_select %p259, %s256, 35
      %s261 = smul.addr %s258, 36
      %s262 = sadd.s32 %s260, %s261
      %s263 = smul.addr %s262, 8
      %s264 = scalar_lea.vmem %s4, %s263
      %s265 = smul.u32 36, %s20
      %s266 = ssub.s32 45, %s265
      %p267 = scmp.lt.s32.totalorder %s266, 36
      %s268 = scalar_select %p267, %s266, 36
      %s269 = smul.u32 64, %s268
      %p270 = scmp.lt.s32.totalorder %s19, 1
      %s271 = scalar_select %p270, %s19, 1
      %p272 = scmp.lt.s32.totalorder %s265, 44
      %s273 = scalar_select %p272, %s265, 44
      %s274 = smul.addr %s271, 45
      %s275 = sadd.s32 %s273, %s274
      %s276 = smul.addr %s275, 4
      %s277 = scalar_lea.vmem %s0, %s276
      %s278 = smul.u32 36, %s20
      %s279 = ssub.s32 45, %s278
      %p280 = scmp.lt.s32.totalorder %s279, 36
      %s281 = scalar_select %p280, %s279, 36
      %s282 = smul.u32 64, %s281
      %s283 = sadd.s32 %s20, 1
      %s284 = smul.u32 %s283, 4
      %s285 = smul.u32 9, %s284
      %p286 = scmp.lt.s32.totalorder %s19, 1
      %s287 = scalar_select %p286, %s19, 1
      %p288 = scmp.lt.s32.totalorder %s285, 44
      %s289 = scalar_select %p288, %s285, 44
      %s290 = smul.addr %s287, 45
      %s291 = sadd.s32 %s289, %s290
      %s292 = smul.addr %s291, 4
      %s293 = scalar_lea.vmem %s1, %s292
      %s294 = sadd.s32 %s20, 1
      %s295 = smul.u32 %s294, 4
      %s296 = smul.u32 9, %s295
      %s297 = smul.u32 36, %s20
      %p298 = scmp.lt.s32.totalorder %s19, 1
      %s299 = scalar_select %p298, %s19, 1
      %p300 = scmp.lt.s32.totalorder %s297, 35
      %s301 = scalar_select %p300, %s297, 35
      %s302 = smul.addr %s299, 36
      %s303 = sadd.s32 %s301, %s302
      %s304 = smul.addr %s303, 8
      %s305 = scalar_lea.vmem %s4, %s304
      %s306 = smul.u32 36, %s20
      %v308 = vld [vmem:[%s277] sm:$0xf]
      %v309 = vld [vmem:[%s277 + $0x4] sm:$0xf]
      %v310 = vld [vmem:[%s277 + $0x8] sm:$0xf]
      %v311 = vld [vmem:[%s277 + $0xc] sm:$0xf]
      %v312 = vld [vmem:[%s277 + $0x10] sm:$0xf]
      %v313 = vld [vmem:[%s277 + $0x14] sm:$0xf]
      %v314 = vld [vmem:[%s277 + $0x18] sm:$0xf]
      %v315 = vld [vmem:[%s277 + $0x1c] sm:$0xf]
      %v316 = vld [vmem:[%s277 + $0x20] sm:$0xf]
      %v317 = vld [vmem:[%s277 + $0x24] sm:$0xf]
      %v318 = vld [vmem:[%s277 + $0x28] sm:$0xf]
      %v319 = vld [vmem:[%s277 + $0x2c] sm:$0xf]
      %v320 = vld [vmem:[%s277 + $0x30] sm:$0xf]
      %v321 = vld [vmem:[%s277 + $0x34] sm:$0xf]
      %v322 = vld [vmem:[%s277 + $0x38] sm:$0xf]
      %v323 = vld [vmem:[%s277 + $0x3c] sm:$0xf]
      %v324 = vld [vmem:[%s277 + $0x40] sm:$0xf]
      %v325 = vld [vmem:[%s277 + $0x44] sm:$0xf]
      %v326 = vld [vmem:[%s277 + $0x48] sm:$0xf]
      %v327 = vld [vmem:[%s277 + $0x4c] sm:$0xf]
      %v328 = vld [vmem:[%s277 + $0x50] sm:$0xf]
      %v329 = vld [vmem:[%s277 + $0x54] sm:$0xf]
      %v330 = vld [vmem:[%s277 + $0x58] sm:$0xf]
      %v331 = vld [vmem:[%s277 + $0x5c] sm:$0xf]
      %v332 = vld [vmem:[%s277 + $0x60] sm:$0xf]
      %v333 = vld [vmem:[%s277 + $0x64] sm:$0xf]
      %v334 = vld [vmem:[%s277 + $0x68] sm:$0xf]
      %v335 = vld [vmem:[%s277 + $0x6c] sm:$0xf]
      %v336 = vld [vmem:[%s277 + $0x70] sm:$0xf]
      %v337 = vld [vmem:[%s277 + $0x74] sm:$0xf]
      %v338 = vld [vmem:[%s277 + $0x78] sm:$0xf]
      %v339 = vld [vmem:[%s277 + $0x7c] sm:$0xf]
      %v340 = vld [vmem:[%s277 + $0x80] sm:$0xf]
      %v341 = vld [vmem:[%s277 + $0x84] sm:$0xf]
      %v342 = vld [vmem:[%s277 + $0x88] sm:$0xf]
      %v343 = vld [vmem:[%s277 + $0x8c] sm:$0xf]
      %vm344 = vcmask 27648
      %345 = vst.msk [vmem:[#allocation2] sm:$0xf] %vm344, %v308
      %346 = vst.msk [vmem:[#allocation2 + $0x4] sm:$0xf] %vm344, %v309
      %347 = vst.msk [vmem:[#allocation2 + $0x8] sm:$0xf] %vm344, %v310
      %348 = vst.msk [vmem:[#allocation2 + $0xc] sm:$0xf] %vm344, %v311
      %349 = vst.msk [vmem:[#allocation2 + $0x10] sm:$0xf] %vm344, %v312
      %350 = vst.msk [vmem:[#allocation2 + $0x14] sm:$0xf] %vm344, %v313
      %351 = vst.msk [vmem:[#allocation2 + $0x18] sm:$0xf] %vm344, %v314
      %352 = vst.msk [vmem:[#allocation2 + $0x1c] sm:$0xf] %vm344, %v315
      %353 = vst.msk [vmem:[#allocation2 + $0x20] sm:$0xf] %vm344, %v316
      %354 = vst.msk [vmem:[#allocation2 + $0x24] sm:$0xf] %vm344, %v317
      %355 = vst.msk [vmem:[#allocation2 + $0x28] sm:$0xf] %vm344, %v318
      %356 = vst.msk [vmem:[#allocation2 + $0x2c] sm:$0xf] %vm344, %v319
      %357 = vst.msk [vmem:[#allocation2 + $0x30] sm:$0xf] %vm344, %v320
      %358 = vst.msk [vmem:[#allocation2 + $0x34] sm:$0xf] %vm344, %v321
      %359 = vst.msk [vmem:[#allocation2 + $0x38] sm:$0xf] %vm344, %v322
      %360 = vst.msk [vmem:[#allocation2 + $0x3c] sm:$0xf] %vm344, %v323
      %361 = vst.msk [vmem:[#allocation2 + $0x40] sm:$0xf] %vm344, %v324
      %362 = vst.msk [vmem:[#allocation2 + $0x44] sm:$0xf] %vm344, %v325
      %363 = vst.msk [vmem:[#allocation2 + $0x48] sm:$0xf] %vm344, %v326
      %364 = vst.msk [vmem:[#allocation2 + $0x4c] sm:$0xf] %vm344, %v327
      %365 = vst.msk [vmem:[#allocation2 + $0x50] sm:$0xf] %vm344, %v328
      %366 = vst.msk [vmem:[#allocation2 + $0x54] sm:$0xf] %vm344, %v329
      %367 = vst.msk [vmem:[#allocation2 + $0x58] sm:$0xf] %vm344, %v330
      %368 = vst.msk [vmem:[#allocation2 + $0x5c] sm:$0xf] %vm344, %v331
      %369 = vst.msk [vmem:[#allocation2 + $0x60] sm:$0xf] %vm344, %v332
      %370 = vst.msk [vmem:[#allocation2 + $0x64] sm:$0xf] %vm344, %v333
      %371 = vst.msk [vmem:[#allocation2 + $0x68] sm:$0xf] %vm344, %v334
      %372 = vst.msk [vmem:[#allocation2 + $0x6c] sm:$0xf] %vm344, %v335
      %373 = vst.msk [vmem:[#allocation2 + $0x70] sm:$0xf] %vm344, %v336
      %374 = vst.msk [vmem:[#allocation2 + $0x74] sm:$0xf] %vm344, %v337
      %375 = vst.msk [vmem:[#allocation2 + $0x78] sm:$0xf] %vm344, %v338
      %376 = vst.msk [vmem:[#allocation2 + $0x7c] sm:$0xf] %vm344, %v339
      %377 = vst.msk [vmem:[#allocation2 + $0x80] sm:$0xf] %vm344, %v340
      %378 = vst.msk [vmem:[#allocation2 + $0x84] sm:$0xf] %vm344, %v341
      %379 = vst.msk [vmem:[#allocation2 + $0x88] sm:$0xf] %vm344, %v342
      %380 = vst.msk [vmem:[#allocation2 + $0x8c] sm:$0xf] %vm344, %v343
      %v381 = vld [vmem:[%s293] sm:$0xf]
      %v382 = vld [vmem:[%s293 + $0x4] sm:$0xf]
      %v383 = vld [vmem:[%s293 + $0x8] sm:$0xf]
      %v384 = vld [vmem:[%s293 + $0xc] sm:$0xf]
      %v385 = vld [vmem:[%s293 + $0x10] sm:$0xf]
      %v386 = vld [vmem:[%s293 + $0x14] sm:$0xf]
      %v387 = vld [vmem:[%s293 + $0x18] sm:$0xf]
      %v388 = vld [vmem:[%s293 + $0x1c] sm:$0xf]
      %v389 = vld [vmem:[%s293 + $0x20] sm:$0xf]
      %390 = vst.msk [vmem:[#allocation2 + $0x90] sm:$0xf] %vm344, %v381
      %391 = vst.msk [vmem:[#allocation2 + $0x94] sm:$0xf] %vm344, %v382
      %392 = vst.msk [vmem:[#allocation2 + $0x98] sm:$0xf] %vm344, %v383
      %393 = vst.msk [vmem:[#allocation2 + $0x9c] sm:$0xf] %vm344, %v384
      %394 = vst.msk [vmem:[#allocation2 + $0xa0] sm:$0xf] %vm344, %v385
      %395 = vst.msk [vmem:[#allocation2 + $0xa4] sm:$0xf] %vm344, %v386
      %396 = vst.msk [vmem:[#allocation2 + $0xa8] sm:$0xf] %vm344, %v387
      %397 = vst.msk [vmem:[#allocation2 + $0xac] sm:$0xf] %vm344, %v388
      %398 = vst.msk [vmem:[#allocation2 + $0xb0] sm:$0xf] %vm344, %v389
      %v399 = vld [vmem:[#allocation2] sm:$0xf]
      %v400 = vld [vmem:[#allocation2 + $0x4] sm:$0xf]
      %v401 = vld [vmem:[#allocation2 + $0x8] sm:$0xf]
      %v402 = vld [vmem:[#allocation2 + $0xc] sm:$0xf]
      %v403 = vld [vmem:[#allocation2 + $0x10] sm:$0xf]
      %v404 = vld [vmem:[#allocation2 + $0x14] sm:$0xf]
      %v405 = vld [vmem:[#allocation2 + $0x18] sm:$0xf]
      %v406 = vld [vmem:[#allocation2 + $0x1c] sm:$0xf]
      %v407 = vld [vmem:[#allocation2 + $0x20] sm:$0xf]
      %v408 = vld [vmem:[#allocation2 + $0x24] sm:$0xf]
      %v409 = vld [vmem:[#allocation2 + $0x28] sm:$0xf]
      %v410 = vld [vmem:[#allocation2 + $0x2c] sm:$0xf]
      %v411 = vld [vmem:[#allocation2 + $0x30] sm:$0xf]
      %v412 = vld [vmem:[#allocation2 + $0x34] sm:$0xf]
      %v413 = vld [vmem:[#allocation2 + $0x38] sm:$0xf]
      %v414 = vld [vmem:[#allocation2 + $0x3c] sm:$0xf]
      %v415 = vld [vmem:[#allocation2 + $0x40] sm:$0xf]
      %v416 = vld [vmem:[#allocation2 + $0x44] sm:$0xf]
      %v417 = vld [vmem:[#allocation2 + $0x48] sm:$0xf]
      %v418 = vld [vmem:[#allocation2 + $0x4c] sm:$0xf]
      %v419 = vld [vmem:[#allocation2 + $0x50] sm:$0xf]
      %v420 = vld [vmem:[#allocation2 + $0x54] sm:$0xf]
      %v421 = vld [vmem:[#allocation2 + $0x58] sm:$0xf]
      %v422 = vld [vmem:[#allocation2 + $0x5c] sm:$0xf]
      %v423 = vld [vmem:[#allocation2 + $0x60] sm:$0xf]
      %v424 = vld [vmem:[#allocation2 + $0x64] sm:$0xf]
      %v425 = vld [vmem:[#allocation2 + $0x68] sm:$0xf]
      %v426 = vld [vmem:[#allocation2 + $0x6c] sm:$0xf]
      %v427 = vld [vmem:[#allocation2 + $0x70] sm:$0xf]
      %v428 = vld [vmem:[#allocation2 + $0x74] sm:$0xf]
      %v429 = vld [vmem:[#allocation2 + $0x78] sm:$0xf]
      %v430 = vld [vmem:[#allocation2 + $0x7c] sm:$0xf]
      %v431 = vld [vmem:[#allocation2 + $0x80] sm:$0xf]
      %v432 = vld [vmem:[#allocation2 + $0x84] sm:$0xf]
      %v433 = vld [vmem:[#allocation2 + $0x88] sm:$0xf]
      %v434 = vld [vmem:[#allocation2 + $0x8c] sm:$0xf]
      %v435 = vld [vmem:[%s2] sm:$0x3]
      %v436 = vld [vmem:[#allocation2 + $0x90] sm:$0x1]
      %s437 = scalar_lea.vmem %s2, 2
      %v438 = vld [vmem:[%s437] sm:$0x3]
      %v476 = vunpack.c.l.b16 %v399
      %v477 = vunpack.c.l.b16 %v400
      %v478 = vunpack.c.l.b16 %v401
      %v479 = vunpack.c.l.b16 %v402
      %v480 = vunpack.c.l.b16 %v403
      %v481 = vunpack.c.l.b16 %v404
      %v482 = vunpack.c.l.b16 %v405
      %v483 = vunpack.c.l.b16 %v406
      %v484 = vunpack.c.l.b16 %v407
      %v485 = vunpack.c.l.b16 %v408
      %v486 = vunpack.c.l.b16 %v409
      %v487 = vunpack.c.l.b16 %v410
      %v488 = vunpack.c.l.b16 %v411
      %v489 = vunpack.c.l.b16 %v412
      %v490 = vunpack.c.l.b16 %v413
      %v491 = vunpack.c.l.b16 %v414
      %v492 = vunpack.c.l.b16 %v415
      %v493 = vunpack.c.l.b16 %v416
      %v494 = vunpack.c.l.b16 %v417
      %v495 = vunpack.c.l.b16 %v418
      %v496 = vunpack.c.l.b16 %v419
      %v497 = vunpack.c.l.b16 %v420
      %v498 = vunpack.c.l.b16 %v421
      %v499 = vunpack.c.l.b16 %v422
      %v500 = vunpack.c.l.b16 %v423
      %v501 = vunpack.c.l.b16 %v424
      %v502 = vunpack.c.l.b16 %v425
      %v503 = vunpack.c.l.b16 %v426
      %v504 = vunpack.c.l.b16 %v427
      %v505 = vunpack.c.l.b16 %v428
      %v506 = vunpack.c.l.b16 %v429
      %v507 = vunpack.c.l.b16 %v430
      %v508 = vunpack.c.l.b16 %v431
      %v509 = vunpack.c.l.b16 %v432
      %v510 = vunpack.c.l.b16 %v433
      %v511 = vunpack.c.l.b16 %v434
      %v512 = vunpack.c.l.b16 %v436
      %v513 = vpack.c.b16 %v477, %v476
      %v514 = vpack.c.b16 %v479, %v478
      %v515 = vpack.c.b16 %v481, %v480
      %v516 = vpack.c.b16 %v483, %v482
      %v517 = vpack.c.b16 %v485, %v484
      %v518 = vpack.c.b16 %v487, %v486
      %v519 = vpack.c.b16 %v489, %v488
      %v520 = vpack.c.b16 %v491, %v490
      %v521 = vpack.c.b16 %v493, %v492
      %v522 = vpack.c.b16 %v495, %v494
      %v523 = vpack.c.b16 %v497, %v496
      %v524 = vpack.c.b16 %v499, %v498
      %v525 = vpack.c.b16 %v501, %v500
      %v526 = vpack.c.b16 %v503, %v502
      %v527 = vpack.c.b16 %v505, %v504
      %v528 = vpack.c.b16 %v507, %v506
      %v529 = vpack.c.b16 %v509, %v508
      %v530 = vpack.c.b16 %v511, %v510
      %v531 = vpack.c.b16 %v512, %v512
      %vm532 = vsmask.f32 7424
      %v534 = vshrl.u32 %v513, 16
      %v536 = vshll.u32 %v513, 16
      %v538 = vrot.slane %v536, 1
      %v539 = vor.u32 %v534, %v538
      %v541 = vshll.u32 %v514, 16
      %v543 = vrot.slane %v541, 1
      %v544 = vsel %vm532, %v539, %v543
      %v545 = vshrl.u32 %v514, 16
      %v547 = vor.u32 %v545, %v543
      %v549 = vshll.u32 %v515, 16
      %v551 = vrot.slane %v549, 1
      %v552 = vsel %vm532, %v547, %v551
      %v553 = vshrl.u32 %v515, 16
      %v555 = vor.u32 %v553, %v551
      %v557 = vshll.u32 %v516, 16
      %v559 = vrot.slane %v557, 1
      %v560 = vsel %vm532, %v555, %v559
      %v561 = vshrl.u32 %v516, 16
      %v563 = vor.u32 %v561, %v559
      %v565 = vshll.u32 %v517, 16
      %v567 = vrot.slane %v565, 1
      %v568 = vsel %vm532, %v563, %v567
      %v569 = vshrl.u32 %v517, 16
      %v571 = vor.u32 %v569, %v567
      %v573 = vshll.u32 %v518, 16
      %v575 = vrot.slane %v573, 1
      %v576 = vsel %vm532, %v571, %v575
      %v577 = vshrl.u32 %v518, 16
      %v579 = vor.u32 %v577, %v575
      %v581 = vshll.u32 %v519, 16
      %v583 = vrot.slane %v581, 1
      %v584 = vsel %vm532, %v579, %v583
      %v585 = vshrl.u32 %v519, 16
      %v587 = vor.u32 %v585, %v583
      %v589 = vshll.u32 %v520, 16
      %v591 = vrot.slane %v589, 1
      %v592 = vsel %vm532, %v587, %v591
      %v593 = vshrl.u32 %v520, 16
      %v595 = vor.u32 %v593, %v591
      %v597 = vshll.u32 %v521, 16
      %v599 = vrot.slane %v597, 1
      %v600 = vsel %vm532, %v595, %v599
      %v601 = vshrl.u32 %v521, 16
      %v603 = vor.u32 %v601, %v599
      %v605 = vshll.u32 %v522, 16
      %v607 = vrot.slane %v605, 1
      %v608 = vsel %vm532, %v603, %v607
      %v609 = vshrl.u32 %v522, 16
      %v611 = vor.u32 %v609, %v607
      %v613 = vshll.u32 %v523, 16
      %v615 = vrot.slane %v613, 1
      %v616 = vsel %vm532, %v611, %v615
      %v617 = vshrl.u32 %v523, 16
      %v619 = vor.u32 %v617, %v615
      %v621 = vshll.u32 %v524, 16
      %v623 = vrot.slane %v621, 1
      %v624 = vsel %vm532, %v619, %v623
      %v625 = vshrl.u32 %v524, 16
      %v627 = vor.u32 %v625, %v623
      %v629 = vshll.u32 %v525, 16
      %v631 = vrot.slane %v629, 1
      %v632 = vsel %vm532, %v627, %v631
      %v633 = vshrl.u32 %v525, 16
      %v635 = vor.u32 %v633, %v631
      %v637 = vshll.u32 %v526, 16
      %v639 = vrot.slane %v637, 1
      %v640 = vsel %vm532, %v635, %v639
      %v641 = vshrl.u32 %v526, 16
      %v643 = vor.u32 %v641, %v639
      %v645 = vshll.u32 %v527, 16
      %v647 = vrot.slane %v645, 1
      %v648 = vsel %vm532, %v643, %v647
      %v649 = vshrl.u32 %v527, 16
      %v651 = vor.u32 %v649, %v647
      %v653 = vshll.u32 %v528, 16
      %v655 = vrot.slane %v653, 1
      %v656 = vsel %vm532, %v651, %v655
      %v657 = vshrl.u32 %v528, 16
      %v659 = vor.u32 %v657, %v655
      %v661 = vshll.u32 %v529, 16
      %v663 = vrot.slane %v661, 1
      %v664 = vsel %vm532, %v659, %v663
      %v665 = vshrl.u32 %v529, 16
      %v667 = vor.u32 %v665, %v663
      %v669 = vshll.u32 %v530, 16
      %v671 = vrot.slane %v669, 1
      %v672 = vsel %vm532, %v667, %v671
      %v673 = vshrl.u32 %v530, 16
      %v675 = vor.u32 %v673, %v671
      %v677 = vshll.u32 %v531, 16
      %v679 = vrot.slane %v677, 1
      %v680 = vsel %vm532, %v675, %v679
      %vm681 = vcmask 31744
      %v683 = vsel %vm681, %v544, 0
      %v686 = vsel %vm681, %v552, 0
      %v689 = vsel %vm681, %v560, 0
      %v692 = vsel %vm681, %v568, 0
      %v695 = vsel %vm681, %v576, 0
      %v698 = vsel %vm681, %v584, 0
      %v701 = vsel %vm681, %v592, 0
      %v704 = vsel %vm681, %v600, 0
      %v707 = vsel %vm681, %v608, 0
      %v710 = vsel %vm681, %v616, 0
      %v713 = vsel %vm681, %v624, 0
      %v716 = vsel %vm681, %v632, 0
      %v719 = vsel %vm681, %v640, 0
      %v722 = vsel %vm681, %v648, 0
      %v725 = vsel %vm681, %v656, 0
      %v728 = vsel %vm681, %v664, 0
      %v731 = vsel %vm681, %v672, 0
      %v734 = vsel %vm681, %v680, 0
      %vm736 = vcmask 1041408
      %v738 = vsel %vm736, %v438, 0
      %740 = vmatprep.subr.bf16.mxu0 0
      %741 = vmatpush1.bf16.msra.mxu0 0
      %742 = vmatprep.subr.bf16.mxu0 0
      %743 = vmatpush1.bf16.msra.mxu0 0
      %744 = vmatprep.subr.bf16.mxu0 0
      %745 = vmatpush1.bf16.msra.mxu0 0
      %746 = vmatprep.subr.bf16.mxu0 0
      %747 = vmatpush1.bf16.msra.mxu0 0
      %748 = vmatprep.subr.bf16.mxu0 0
      %749 = vmatpush1.bf16.msra.mxu0 0
      %750 = vmatprep.subr.bf16.mxu0 0
      %751 = vmatpush1.bf16.msra.mxu0 0
      %752 = vmatprep.subr.bf16.mxu0 0
      %753 = vmatpush1.bf16.msra.mxu0 0
      %754 = vmatprep.subr.bf16.mxu0 0
      %755 = vmatpush1.bf16.msra.mxu0 %v738
      %756 = vmatprep.subr.bf16.mxu0 0
      %757 = vmatpush2.bf16.msra.mxu0 0
      %758 = vmatprep.subr.bf16.mxu0 0
      %759 = vmatpush2.bf16.msra.mxu0 0
      %760 = vmatprep.subr.bf16.mxu0 0
      %761 = vmatpush2.bf16.msra.mxu0 0
      %762 = vmatprep.subr.bf16.mxu0 0
      %763 = vmatpush2.bf16.msra.mxu0 0
      %764 = vmatprep.subr.bf16.mxu0 0
      %765 = vmatpush2.bf16.msra.mxu0 0
      %766 = vmatprep.subr.bf16.mxu0 0
      %767 = vmatpush2.bf16.msra.mxu0 0
      %768 = vmatprep.subr.bf16.mxu0 0
      %769 = vmatpush2.bf16.msra.mxu0 0
      %770 = vmatprep.subr.bf16.mxu0 0
      %771 = vmatpush2.bf16.msra.mxu0 0
      %772 = vmatprep.mubr.bf16.mxu0 0
      %773 = vmatmul.mubr.bf16.gmra.mxu0 %v683
      %v774 = vpop.f32.mrf.mxu0
      %v775 = vadd.f32 0.0, %v774
      %v776 = vpop.f32.mrf.mxu0
      %v777 = vpop.f32.mrf.mxu0
      %v778 = vadd.f32 0.0, %v777
      %v779 = vpop.f32.mrf.mxu0
      %780 = vmatprep.mubr.bf16.mxu0 0
      %781 = vmatmul.mubr.bf16.gmra.mxu0 %v686
      %v782 = vpop.f32.mrf.mxu0
      %v783 = vadd.f32 0.0, %v782
      %v784 = vpop.f32.mrf.mxu0
      %v785 = vpop.f32.mrf.mxu0
      %v786 = vadd.f32 0.0, %v785
      %v787 = vpop.f32.mrf.mxu0
      %788 = vmatprep.mubr.bf16.mxu0 0
      %789 = vmatmul.mubr.bf16.gmra.mxu0 %v689
      %v790 = vpop.f32.mrf.mxu0
      %v791 = vadd.f32 0.0, %v790
      %v792 = vpop.f32.mrf.mxu0
      %v793 = vpop.f32.mrf.mxu0
      %v794 = vadd.f32 0.0, %v793
      %v795 = vpop.f32.mrf.mxu0
      %796 = vmatprep.mubr.bf16.mxu0 0
      %797 = vmatmul.mubr.bf16.gmra.mxu0 %v692
      %v798 = vpop.f32.mrf.mxu0
      %v799 = vadd.f32 0.0, %v798
      %v800 = vpop.f32.mrf.mxu0
      %v801 = vpop.f32.mrf.mxu0
      %v802 = vadd.f32 0.0, %v801
      %v803 = vpop.f32.mrf.mxu0
      %804 = vmatprep.mubr.bf16.mxu0 0
      %805 = vmatmul.mubr.bf16.gmra.mxu0 %v695
      %v806 = vpop.f32.mrf.mxu0
      %v807 = vadd.f32 0.0, %v806
      %v808 = vpop.f32.mrf.mxu0
      %v809 = vpop.f32.mrf.mxu0
      %v810 = vadd.f32 0.0, %v809
      %v811 = vpop.f32.mrf.mxu0
      %812 = vmatprep.mubr.bf16.mxu0 0
      %813 = vmatmul.mubr.bf16.gmra.mxu0 %v698
      %v814 = vpop.f32.mrf.mxu0
      %v815 = vadd.f32 0.0, %v814
      %v816 = vpop.f32.mrf.mxu0
      %v817 = vpop.f32.mrf.mxu0
      %v818 = vadd.f32 0.0, %v817
      %v819 = vpop.f32.mrf.mxu0
      %820 = vmatprep.mubr.bf16.mxu0 0
      %821 = vmatmul.mubr.bf16.gmra.mxu0 %v701
      %v822 = vpop.f32.mrf.mxu0
      %v823 = vadd.f32 0.0, %v822
      %v824 = vpop.f32.mrf.mxu0
      %v825 = vpop.f32.mrf.mxu0
      %v826 = vadd.f32 0.0, %v825
      %v827 = vpop.f32.mrf.mxu0
      %828 = vmatprep.mubr.bf16.mxu0 0
      %829 = vmatmul.mubr.bf16.gmra.mxu0 %v704
      %v830 = vpop.f32.mrf.mxu0
      %v831 = vadd.f32 0.0, %v830
      %v832 = vpop.f32.mrf.mxu0
      %v833 = vpop.f32.mrf.mxu0
      %v834 = vadd.f32 0.0, %v833
      %v835 = vpop.f32.mrf.mxu0
      %836 = vmatprep.mubr.bf16.mxu0 0
      %837 = vmatmul.mubr.bf16.gmra.mxu0 %v707
      %v838 = vpop.f32.mrf.mxu0
      %v839 = vadd.f32 0.0, %v838
      %v840 = vpop.f32.mrf.mxu0
      %v841 = vpop.f32.mrf.mxu0
      %v842 = vadd.f32 0.0, %v841
      %v843 = vpop.f32.mrf.mxu0
      %844 = vmatprep.mubr.bf16.mxu0 0
      %845 = vmatmul.mubr.bf16.gmra.mxu0 %v710
      %v846 = vpop.f32.mrf.mxu0
      %v847 = vadd.f32 0.0, %v846
      %v848 = vpop.f32.mrf.mxu0
      %v849 = vpop.f32.mrf.mxu0
      %v850 = vadd.f32 0.0, %v849
      %v851 = vpop.f32.mrf.mxu0
      %852 = vmatprep.mubr.bf16.mxu0 0
      %853 = vmatmul.mubr.bf16.gmra.mxu0 %v713
      %v854 = vpop.f32.mrf.mxu0
      %v855 = vadd.f32 0.0, %v854
      %v856 = vpop.f32.mrf.mxu0
      %v857 = vpop.f32.mrf.mxu0
      %v858 = vadd.f32 0.0, %v857
      %v859 = vpop.f32.mrf.mxu0
      %860 = vmatprep.mubr.bf16.mxu0 0
      %861 = vmatmul.mubr.bf16.gmra.mxu0 %v716
      %v862 = vpop.f32.mrf.mxu0
      %v863 = vadd.f32 0.0, %v862
      %v864 = vpop.f32.mrf.mxu0
      %v865 = vpop.f32.mrf.mxu0
      %v866 = vadd.f32 0.0, %v865
      %v867 = vpop.f32.mrf.mxu0
      %868 = vmatprep.mubr.bf16.mxu0 0
      %869 = vmatmul.mubr.bf16.gmra.mxu0 %v719
      %v870 = vpop.f32.mrf.mxu0
      %v871 = vadd.f32 0.0, %v870
      %v872 = vpop.f32.mrf.mxu0
      %v873 = vpop.f32.mrf.mxu0
      %v874 = vadd.f32 0.0, %v873
      %v875 = vpop.f32.mrf.mxu0
      %876 = vmatprep.mubr.bf16.mxu0 0
      %877 = vmatmul.mubr.bf16.gmra.mxu0 %v722
      %v878 = vpop.f32.mrf.mxu0
      %v879 = vadd.f32 0.0, %v878
      %v880 = vpop.f32.mrf.mxu0
      %v881 = vpop.f32.mrf.mxu0
      %v882 = vadd.f32 0.0, %v881
      %v883 = vpop.f32.mrf.mxu0
      %884 = vmatprep.mubr.bf16.mxu0 0
      %885 = vmatmul.mubr.bf16.gmra.mxu0 %v725
      %v886 = vpop.f32.mrf.mxu0
      %v887 = vadd.f32 0.0, %v886
      %v888 = vpop.f32.mrf.mxu0
      %v889 = vpop.f32.mrf.mxu0
      %v890 = vadd.f32 0.0, %v889
      %v891 = vpop.f32.mrf.mxu0
      %892 = vmatprep.mubr.bf16.mxu0 0
      %893 = vmatmul.mubr.bf16.gmra.mxu0 %v728
      %v894 = vpop.f32.mrf.mxu0
      %v895 = vadd.f32 0.0, %v894
      %v896 = vpop.f32.mrf.mxu0
      %v897 = vpop.f32.mrf.mxu0
      %v898 = vadd.f32 0.0, %v897
      %v899 = vpop.f32.mrf.mxu0
      %900 = vmatprep.mubr.bf16.mxu0 0
      %901 = vmatmul.mubr.bf16.gmra.mxu0 %v731
      %v902 = vpop.f32.mrf.mxu0
      %v903 = vadd.f32 0.0, %v902
      %v904 = vpop.f32.mrf.mxu0
      %v905 = vpop.f32.mrf.mxu0
      %v906 = vadd.f32 0.0, %v905
      %v907 = vpop.f32.mrf.mxu0
      %908 = vmatprep.mubr.bf16.mxu0 0
      %909 = vmatmul.mubr.bf16.gmra.mxu0 %v734
      %v910 = vpop.f32.mrf.mxu0
      %v911 = vadd.f32 0.0, %v910
      %v912 = vpop.f32.mrf.mxu0
      %v913 = vpop.f32.mrf.mxu0
      %v914 = vadd.f32 0.0, %v913
      %v915 = vpop.f32.mrf.mxu0
      %916 = vdwg.mxu0
      %v917 = vsel %vm681, %v513, 0
      %v919 = vsel %vm681, %v514, 0
      %v921 = vsel %vm681, %v515, 0
      %v923 = vsel %vm681, %v516, 0
      %v925 = vsel %vm681, %v517, 0
      %v927 = vsel %vm681, %v518, 0
      %v929 = vsel %vm681, %v519, 0
      %v931 = vsel %vm681, %v520, 0
      %v933 = vsel %vm681, %v521, 0
      %v935 = vsel %vm681, %v522, 0
      %v937 = vsel %vm681, %v523, 0
      %v939 = vsel %vm681, %v524, 0
      %v941 = vsel %vm681, %v525, 0
      %v943 = vsel %vm681, %v526, 0
      %v945 = vsel %vm681, %v527, 0
      %v947 = vsel %vm681, %v528, 0
      %v949 = vsel %vm681, %v529, 0
      %v951 = vsel %vm681, %v530, 0
      %v954 = vsel %vm736, %v435, 0
      %956 = vmatprep.subr.bf16.mxu0 0
      %957 = vmatpush1.bf16.msra.mxu0 0
      %958 = vmatprep.subr.bf16.mxu0 0
      %959 = vmatpush1.bf16.msra.mxu0 0
      %960 = vmatprep.subr.bf16.mxu0 0
      %961 = vmatpush1.bf16.msra.mxu0 0
      %962 = vmatprep.subr.bf16.mxu0 0
      %963 = vmatpush1.bf16.msra.mxu0 0
      %964 = vmatprep.subr.bf16.mxu0 0
      %965 = vmatpush1.bf16.msra.mxu0 0
      %966 = vmatprep.subr.bf16.mxu0 0
      %967 = vmatpush1.bf16.msra.mxu0 0
      %968 = vmatprep.subr.bf16.mxu0 0
      %969 = vmatpush1.bf16.msra.mxu0 0
      %970 = vmatprep.subr.bf16.mxu0 0
      %971 = vmatpush1.bf16.msra.mxu0 %v954
      %972 = vmatprep.subr.bf16.mxu0 0
      %973 = vmatpush2.bf16.msra.mxu0 0
      %974 = vmatprep.subr.bf16.mxu0 0
      %975 = vmatpush2.bf16.msra.mxu0 0
      %976 = vmatprep.subr.bf16.mxu0 0
      %977 = vmatpush2.bf16.msra.mxu0 0
      %978 = vmatprep.subr.bf16.mxu0 0
      %979 = vmatpush2.bf16.msra.mxu0 0
      %980 = vmatprep.subr.bf16.mxu0 0
      %981 = vmatpush2.bf16.msra.mxu0 0
      %982 = vmatprep.subr.bf16.mxu0 0
      %983 = vmatpush2.bf16.msra.mxu0 0
      %984 = vmatprep.subr.bf16.mxu0 0
      %985 = vmatpush2.bf16.msra.mxu0 0
      %986 = vmatprep.subr.bf16.mxu0 0
      %987 = vmatpush2.bf16.msra.mxu0 0
      %988 = vmatprep.mubr.bf16.mxu0 0
      %989 = vmatmul.mubr.bf16.gmra.mxu0 %v917
      %v990 = vpop.f32.mrf.mxu0
      %v991 = vadd.f32 %v775, %v990
      %v992 = vpop.f32.mrf.mxu0
      %v993 = vpop.f32.mrf.mxu0
      %v994 = vadd.f32 %v778, %v993
      %v995 = vpop.f32.mrf.mxu0
      %996 = vmatprep.mubr.bf16.mxu0 0
      %997 = vmatmul.mubr.bf16.gmra.mxu0 %v919
      %v998 = vpop.f32.mrf.mxu0
      %v999 = vadd.f32 %v783, %v998
      %v1000 = vpop.f32.mrf.mxu0
      %v1001 = vpop.f32.mrf.mxu0
      %v1002 = vadd.f32 %v786, %v1001
      %v1003 = vpop.f32.mrf.mxu0
      %1004 = vmatprep.mubr.bf16.mxu0 0
      %1005 = vmatmul.mubr.bf16.gmra.mxu0 %v921
      %v1006 = vpop.f32.mrf.mxu0
      %v1007 = vadd.f32 %v791, %v1006
      %v1008 = vpop.f32.mrf.mxu0
      %v1009 = vpop.f32.mrf.mxu0
      %v1010 = vadd.f32 %v794, %v1009
      %v1011 = vpop.f32.mrf.mxu0
      %1012 = vmatprep.mubr.bf16.mxu0 0
      %1013 = vmatmul.mubr.bf16.gmra.mxu0 %v923
      %v1014 = vpop.f32.mrf.mxu0
      %v1015 = vadd.f32 %v799, %v1014
      %v1016 = vpop.f32.mrf.mxu0
      %v1017 = vpop.f32.mrf.mxu0
      %v1018 = vadd.f32 %v802, %v1017
      %v1019 = vpop.f32.mrf.mxu0
      %1020 = vmatprep.mubr.bf16.mxu0 0
      %1021 = vmatmul.mubr.bf16.gmra.mxu0 %v925
      %v1022 = vpop.f32.mrf.mxu0
      %v1023 = vadd.f32 %v807, %v1022
      %v1024 = vpop.f32.mrf.mxu0
      %v1025 = vpop.f32.mrf.mxu0
      %v1026 = vadd.f32 %v810, %v1025
      %v1027 = vpop.f32.mrf.mxu0
      %1028 = vmatprep.mubr.bf16.mxu0 0
      %1029 = vmatmul.mubr.bf16.gmra.mxu0 %v927
      %v1030 = vpop.f32.mrf.mxu0
      %v1031 = vadd.f32 %v815, %v1030
      %v1032 = vpop.f32.mrf.mxu0
      %v1033 = vpop.f32.mrf.mxu0
      %v1034 = vadd.f32 %v818, %v1033
      %v1035 = vpop.f32.mrf.mxu0
      %1036 = vmatprep.mubr.bf16.mxu0 0
      %1037 = vmatmul.mubr.bf16.gmra.mxu0 %v929
      %v1038 = vpop.f32.mrf.mxu0
      %v1039 = vadd.f32 %v823, %v1038
      %v1040 = vpop.f32.mrf.mxu0
      %v1041 = vpop.f32.mrf.mxu0
      %v1042 = vadd.f32 %v826, %v1041
      %v1043 = vpop.f32.mrf.mxu0
      %1044 = vmatprep.mubr.bf16.mxu0 0
      %1045 = vmatmul.mubr.bf16.gmra.mxu0 %v931
      %v1046 = vpop.f32.mrf.mxu0
      %v1047 = vadd.f32 %v831, %v1046
      %v1048 = vpop.f32.mrf.mxu0
      %v1049 = vpop.f32.mrf.mxu0
      %v1050 = vadd.f32 %v834, %v1049
      %v1051 = vpop.f32.mrf.mxu0
      %1052 = vmatprep.mubr.bf16.mxu0 0
      %1053 = vmatmul.mubr.bf16.gmra.mxu0 %v933
      %v1054 = vpop.f32.mrf.mxu0
      %v1055 = vadd.f32 %v839, %v1054
      %v1056 = vpop.f32.mrf.mxu0
      %v1057 = vpop.f32.mrf.mxu0
      %v1058 = vadd.f32 %v842, %v1057
      %v1059 = vpop.f32.mrf.mxu0
      %1060 = vmatprep.mubr.bf16.mxu0 0
      %1061 = vmatmul.mubr.bf16.gmra.mxu0 %v935
      %v1062 = vpop.f32.mrf.mxu0
      %v1063 = vadd.f32 %v847, %v1062
      %v1064 = vpop.f32.mrf.mxu0
      %v1065 = vpop.f32.mrf.mxu0
      %v1066 = vadd.f32 %v850, %v1065
      %v1067 = vpop.f32.mrf.mxu0
      %1068 = vmatprep.mubr.bf16.mxu0 0
      %1069 = vmatmul.mubr.bf16.gmra.mxu0 %v937
      %v1070 = vpop.f32.mrf.mxu0
      %v1071 = vadd.f32 %v855, %v1070
      %v1072 = vpop.f32.mrf.mxu0
      %v1073 = vpop.f32.mrf.mxu0
      %v1074 = vadd.f32 %v858, %v1073
      %v1075 = vpop.f32.mrf.mxu0
      %1076 = vmatprep.mubr.bf16.mxu0 0
      %1077 = vmatmul.mubr.bf16.gmra.mxu0 %v939
      %v1078 = vpop.f32.mrf.mxu0
      %v1079 = vadd.f32 %v863, %v1078
      %v1080 = vpop.f32.mrf.mxu0
      %v1081 = vpop.f32.mrf.mxu0
      %v1082 = vadd.f32 %v866, %v1081
      %v1083 = vpop.f32.mrf.mxu0
      %1084 = vmatprep.mubr.bf16.mxu0 0
      %1085 = vmatmul.mubr.bf16.gmra.mxu0 %v941
      %v1086 = vpop.f32.mrf.mxu0
      %v1087 = vadd.f32 %v871, %v1086
      %v1088 = vpop.f32.mrf.mxu0
      %v1089 = vpop.f32.mrf.mxu0
      %v1090 = vadd.f32 %v874, %v1089
      %v1091 = vpop.f32.mrf.mxu0
      %1092 = vmatprep.mubr.bf16.mxu0 0
      %1093 = vmatmul.mubr.bf16.gmra.mxu0 %v943
      %v1094 = vpop.f32.mrf.mxu0
      %v1095 = vadd.f32 %v879, %v1094
      %v1096 = vpop.f32.mrf.mxu0
      %v1097 = vpop.f32.mrf.mxu0
      %v1098 = vadd.f32 %v882, %v1097
      %v1099 = vpop.f32.mrf.mxu0
      %1100 = vmatprep.mubr.bf16.mxu0 0
      %1101 = vmatmul.mubr.bf16.gmra.mxu0 %v945
      %v1102 = vpop.f32.mrf.mxu0
      %v1103 = vadd.f32 %v887, %v1102
      %v1104 = vpop.f32.mrf.mxu0
      %v1105 = vpop.f32.mrf.mxu0
      %v1106 = vadd.f32 %v890, %v1105
      %v1107 = vpop.f32.mrf.mxu0
      %1108 = vmatprep.mubr.bf16.mxu0 0
      %1109 = vmatmul.mubr.bf16.gmra.mxu0 %v947
      %v1110 = vpop.f32.mrf.mxu0
      %v1111 = vadd.f32 %v895, %v1110
      %v1112 = vpop.f32.mrf.mxu0
      %v1113 = vpop.f32.mrf.mxu0
      %v1114 = vadd.f32 %v898, %v1113
      %v1115 = vpop.f32.mrf.mxu0
      %1116 = vmatprep.mubr.bf16.mxu0 0
      %1117 = vmatmul.mubr.bf16.gmra.mxu0 %v949
      %v1118 = vpop.f32.mrf.mxu0
      %v1119 = vadd.f32 %v903, %v1118
      %v1120 = vpop.f32.mrf.mxu0
      %v1121 = vpop.f32.mrf.mxu0
      %v1122 = vadd.f32 %v906, %v1121
      %v1123 = vpop.f32.mrf.mxu0
      %1124 = vmatprep.mubr.bf16.mxu0 0
      %1125 = vmatmul.mubr.bf16.gmra.mxu0 %v951
      %v1126 = vpop.f32.mrf.mxu0
      %v1127 = vadd.f32 %v911, %v1126
      %v1128 = vpop.f32.mrf.mxu0
      %v1129 = vpop.f32.mrf.mxu0
      %v1130 = vadd.f32 %v914, %v1129
      %v1131 = vpop.f32.mrf.mxu0
      %1132 = vdwg.mxu0
      %v1133 = vld [vmem:[#allocation2] sm:$0xe]
      %s1134 = scalar_lea.vmem %s2, 4
      %v1135 = vld [vmem:[%s1134] sm:$0x3]
      %v1137 = vunpack.c.l.b16 %v1133
      %v1138 = vpack.c.b16 %v477, %v1137
      %vm1139 = vcmask 1046528
      %v1140 = vrot.slane %v1138, 1
      %v1141 = vrot.slane %v514, 1
      %v1142 = vsel %vm1139, %v1140, %v1141
      %v1143 = vrot.slane %v515, 1
      %v1144 = vsel %vm1139, %v1141, %v1143
      %v1145 = vrot.slane %v516, 1
      %v1146 = vsel %vm1139, %v1143, %v1145
      %v1147 = vrot.slane %v517, 1
      %v1148 = vsel %vm1139, %v1145, %v1147
      %v1149 = vrot.slane %v518, 1
      %v1150 = vsel %vm1139, %v1147, %v1149
      %v1151 = vrot.slane %v519, 1
      %v1152 = vsel %vm1139, %v1149, %v1151
      %v1153 = vrot.slane %v520, 1
      %v1154 = vsel %vm1139, %v1151, %v1153
      %v1155 = vrot.slane %v521, 1
      %v1156 = vsel %vm1139, %v1153, %v1155
      %v1157 = vrot.slane %v522, 1
      %v1158 = vsel %vm1139, %v1155, %v1157
      %v1159 = vrot.slane %v523, 1
      %v1160 = vsel %vm1139, %v1157, %v1159
      %v1161 = vrot.slane %v524, 1
      %v1162 = vsel %vm1139, %v1159, %v1161
      %v1163 = vrot.slane %v525, 1
      %v1164 = vsel %vm1139, %v1161, %v1163
      %v1165 = vrot.slane %v526, 1
      %v1166 = vsel %vm1139, %v1163, %v1165
      %v1167 = vrot.slane %v527, 1
      %v1168 = vsel %vm1139, %v1165, %v1167
      %v1169 = vrot.slane %v528, 1
      %v1170 = vsel %vm1139, %v1167, %v1169
      %v1171 = vrot.slane %v529, 1
      %v1172 = vsel %vm1139, %v1169, %v1171
      %v1173 = vrot.slane %v530, 1
      %v1174 = vsel %vm1139, %v1171, %v1173
      %v1175 = vrot.slane %v531, 1
      %v1176 = vsel %vm1139, %v1173, %v1175
      %v1178 = vsel %vm681, %v1142, 0
      %v1181 = vsel %vm681, %v1144, 0
      %v1184 = vsel %vm681, %v1146, 0
      %v1187 = vsel %vm681, %v1148, 0
      %v1190 = vsel %vm681, %v1150, 0
      %v1193 = vsel %vm681, %v1152, 0
      %v1196 = vsel %vm681, %v1154, 0
      %v1199 = vsel %vm681, %v1156, 0
      %v1202 = vsel %vm681, %v1158, 0
      %v1205 = vsel %vm681, %v1160, 0
      %v1208 = vsel %vm681, %v1162, 0
      %v1211 = vsel %vm681, %v1164, 0
      %v1214 = vsel %vm681, %v1166, 0
      %v1217 = vsel %vm681, %v1168, 0
      %v1220 = vsel %vm681, %v1170, 0
      %v1223 = vsel %vm681, %v1172, 0
      %v1226 = vsel %vm681, %v1174, 0
      %v1229 = vsel %vm681, %v1176, 0
      %v1232 = vsel %vm736, %v1135, 0
      %1234 = vmatprep.subr.bf16.mxu0 0
      %1235 = vmatpush1.bf16.msra.mxu0 0
      %1236 = vmatprep.subr.bf16.mxu0 0
      %1237 = vmatpush1.bf16.msra.mxu0 0
      %1238 = vmatprep.subr.bf16.mxu0 0
      %1239 = vmatpush1.bf16.msra.mxu0 0
      %1240 = vmatprep.subr.bf16.mxu0 0
      %1241 = vmatpush1.bf16.msra.mxu0 0
      %1242 = vmatprep.subr.bf16.mxu0 0
      %1243 = vmatpush1.bf16.msra.mxu0 0
      %1244 = vmatprep.subr.bf16.mxu0 0
      %1245 = vmatpush1.bf16.msra.mxu0 0
      %1246 = vmatprep.subr.bf16.mxu0 0
      %1247 = vmatpush1.bf16.msra.mxu0 0
      %1248 = vmatprep.subr.bf16.mxu0 0
      %1249 = vmatpush1.bf16.msra.mxu0 %v1232
      %1250 = vmatprep.subr.bf16.mxu0 0
      %1251 = vmatpush2.bf16.msra.mxu0 0
      %1252 = vmatprep.subr.bf16.mxu0 0
      %1253 = vmatpush2.bf16.msra.mxu0 0
      %1254 = vmatprep.subr.bf16.mxu0 0
      %1255 = vmatpush2.bf16.msra.mxu0 0
      %1256 = vmatprep.subr.bf16.mxu0 0
      %1257 = vmatpush2.bf16.msra.mxu0 0
      %1258 = vmatprep.subr.bf16.mxu0 0
      %1259 = vmatpush2.bf16.msra.mxu0 0
      %1260 = vmatprep.subr.bf16.mxu0 0
      %1261 = vmatpush2.bf16.msra.mxu0 0
      %1262 = vmatprep.subr.bf16.mxu0 0
      %1263 = vmatpush2.bf16.msra.mxu0 0
      %1264 = vmatprep.subr.bf16.mxu0 0
      %1265 = vmatpush2.bf16.msra.mxu0 0
      %1266 = vmatprep.mubr.bf16.mxu0 0
      %1267 = vmatmul.mubr.bf16.gmra.mxu0 %v1178
      %v1268 = vpop.f32.mrf.mxu0
      %v1269 = vadd.f32 0.0, %v1268
      %v1270 = vpop.f32.mrf.mxu0
      %v1271 = vpop.f32.mrf.mxu0
      %v1272 = vadd.f32 0.0, %v1271
      %v1273 = vpop.f32.mrf.mxu0
      %1274 = vmatprep.mubr.bf16.mxu0 0
      %1275 = vmatmul.mubr.bf16.gmra.mxu0 %v1181
      %v1276 = vpop.f32.mrf.mxu0
      %v1277 = vadd.f32 0.0, %v1276
      %v1278 = vpop.f32.mrf.mxu0
      %v1279 = vpop.f32.mrf.mxu0
      %v1280 = vadd.f32 0.0, %v1279
      %v1281 = vpop.f32.mrf.mxu0
      %1282 = vmatprep.mubr.bf16.mxu0 0
      %1283 = vmatmul.mubr.bf16.gmra.mxu0 %v1184
      %v1284 = vpop.f32.mrf.mxu0
      %v1285 = vadd.f32 0.0, %v1284
      %v1286 = vpop.f32.mrf.mxu0
      %v1287 = vpop.f32.mrf.mxu0
      %v1288 = vadd.f32 0.0, %v1287
      %v1289 = vpop.f32.mrf.mxu0
      %1290 = vmatprep.mubr.bf16.mxu0 0
      %1291 = vmatmul.mubr.bf16.gmra.mxu0 %v1187
      %v1292 = vpop.f32.mrf.mxu0
      %v1293 = vadd.f32 0.0, %v1292
      %v1294 = vpop.f32.mrf.mxu0
      %v1295 = vpop.f32.mrf.mxu0
      %v1296 = vadd.f32 0.0, %v1295
      %v1297 = vpop.f32.mrf.mxu0
      %1298 = vmatprep.mubr.bf16.mxu0 0
      %1299 = vmatmul.mubr.bf16.gmra.mxu0 %v1190
      %v1300 = vpop.f32.mrf.mxu0
      %v1301 = vadd.f32 0.0, %v1300
      %v1302 = vpop.f32.mrf.mxu0
      %v1303 = vpop.f32.mrf.mxu0
      %v1304 = vadd.f32 0.0, %v1303
      %v1305 = vpop.f32.mrf.mxu0
      %1306 = vmatprep.mubr.bf16.mxu0 0
      %1307 = vmatmul.mubr.bf16.gmra.mxu0 %v1193
      %v1308 = vpop.f32.mrf.mxu0
      %v1309 = vadd.f32 0.0, %v1308
      %v1310 = vpop.f32.mrf.mxu0
      %v1311 = vpop.f32.mrf.mxu0
      %v1312 = vadd.f32 0.0, %v1311
      %v1313 = vpop.f32.mrf.mxu0
      %1314 = vmatprep.mubr.bf16.mxu0 0
      %1315 = vmatmul.mubr.bf16.gmra.mxu0 %v1196
      %v1316 = vpop.f32.mrf.mxu0
      %v1317 = vadd.f32 0.0, %v1316
      %v1318 = vpop.f32.mrf.mxu0
      %v1319 = vpop.f32.mrf.mxu0
      %v1320 = vadd.f32 0.0, %v1319
      %v1321 = vpop.f32.mrf.mxu0
      %1322 = vmatprep.mubr.bf16.mxu0 0
      %1323 = vmatmul.mubr.bf16.gmra.mxu0 %v1199
      %v1324 = vpop.f32.mrf.mxu0
      %v1325 = vadd.f32 0.0, %v1324
      %v1326 = vpop.f32.mrf.mxu0
      %v1327 = vpop.f32.mrf.mxu0
      %v1328 = vadd.f32 0.0, %v1327
      %v1329 = vpop.f32.mrf.mxu0
      %1330 = vmatprep.mubr.bf16.mxu0 0
      %1331 = vmatmul.mubr.bf16.gmra.mxu0 %v1202
      %v1332 = vpop.f32.mrf.mxu0
      %v1333 = vadd.f32 0.0, %v1332
      %v1334 = vpop.f32.mrf.mxu0
      %v1335 = vpop.f32.mrf.mxu0
      %v1336 = vadd.f32 0.0, %v1335
      %v1337 = vpop.f32.mrf.mxu0
      %1338 = vmatprep.mubr.bf16.mxu0 0
      %1339 = vmatmul.mubr.bf16.gmra.mxu0 %v1205
      %v1340 = vpop.f32.mrf.mxu0
      %v1341 = vadd.f32 0.0, %v1340
      %v1342 = vpop.f32.mrf.mxu0
      %v1343 = vpop.f32.mrf.mxu0
      %v1344 = vadd.f32 0.0, %v1343
      %v1345 = vpop.f32.mrf.mxu0
      %1346 = vmatprep.mubr.bf16.mxu0 0
      %1347 = vmatmul.mubr.bf16.gmra.mxu0 %v1208
      %v1348 = vpop.f32.mrf.mxu0
      %v1349 = vadd.f32 0.0, %v1348
      %v1350 = vpop.f32.mrf.mxu0
      %v1351 = vpop.f32.mrf.mxu0
      %v1352 = vadd.f32 0.0, %v1351
      %v1353 = vpop.f32.mrf.mxu0
      %1354 = vmatprep.mubr.bf16.mxu0 0
      %1355 = vmatmul.mubr.bf16.gmra.mxu0 %v1211
      %v1356 = vpop.f32.mrf.mxu0
      %v1357 = vadd.f32 0.0, %v1356
      %v1358 = vpop.f32.mrf.mxu0
      %v1359 = vpop.f32.mrf.mxu0
      %v1360 = vadd.f32 0.0, %v1359
      %v1361 = vpop.f32.mrf.mxu0
      %1362 = vmatprep.mubr.bf16.mxu0 0
      %1363 = vmatmul.mubr.bf16.gmra.mxu0 %v1214
      %v1364 = vpop.f32.mrf.mxu0
      %v1365 = vadd.f32 0.0, %v1364
      %v1366 = vpop.f32.mrf.mxu0
      %v1367 = vpop.f32.mrf.mxu0
      %v1368 = vadd.f32 0.0, %v1367
      %v1369 = vpop.f32.mrf.mxu0
      %1370 = vmatprep.mubr.bf16.mxu0 0
      %1371 = vmatmul.mubr.bf16.gmra.mxu0 %v1217
      %v1372 = vpop.f32.mrf.mxu0
      %v1373 = vadd.f32 0.0, %v1372
      %v1374 = vpop.f32.mrf.mxu0
      %v1375 = vpop.f32.mrf.mxu0
      %v1376 = vadd.f32 0.0, %v1375
      %v1377 = vpop.f32.mrf.mxu0
      %1378 = vmatprep.mubr.bf16.mxu0 0
      %1379 = vmatmul.mubr.bf16.gmra.mxu0 %v1220
      %v1380 = vpop.f32.mrf.mxu0
      %v1381 = vadd.f32 0.0, %v1380
      %v1382 = vpop.f32.mrf.mxu0
      %v1383 = vpop.f32.mrf.mxu0
      %v1384 = vadd.f32 0.0, %v1383
      %v1385 = vpop.f32.mrf.mxu0
      %1386 = vmatprep.mubr.bf16.mxu0 0
      %1387 = vmatmul.mubr.bf16.gmra.mxu0 %v1223
      %v1388 = vpop.f32.mrf.mxu0
      %v1389 = vadd.f32 0.0, %v1388
      %v1390 = vpop.f32.mrf.mxu0
      %v1391 = vpop.f32.mrf.mxu0
      %v1392 = vadd.f32 0.0, %v1391
      %v1393 = vpop.f32.mrf.mxu0
      %1394 = vmatprep.mubr.bf16.mxu0 0
      %1395 = vmatmul.mubr.bf16.gmra.mxu0 %v1226
      %v1396 = vpop.f32.mrf.mxu0
      %v1397 = vadd.f32 0.0, %v1396
      %v1398 = vpop.f32.mrf.mxu0
      %v1399 = vpop.f32.mrf.mxu0
      %v1400 = vadd.f32 0.0, %v1399
      %v1401 = vpop.f32.mrf.mxu0
      %1402 = vmatprep.mubr.bf16.mxu0 0
      %1403 = vmatmul.mubr.bf16.gmra.mxu0 %v1229
      %v1404 = vpop.f32.mrf.mxu0
      %v1405 = vadd.f32 0.0, %v1404
      %v1406 = vpop.f32.mrf.mxu0
      %v1407 = vpop.f32.mrf.mxu0
      %v1408 = vadd.f32 0.0, %v1407
      %v1409 = vpop.f32.mrf.mxu0
      %1410 = vdwg.mxu0
      %v1411 = vadd.f32 %v991, %v1269
      %v1412 = vadd.f32 %v994, %v1272
      %v1413 = vadd.f32 %v999, %v1277
      %v1414 = vadd.f32 %v1002, %v1280
      %v1415 = vadd.f32 %v1007, %v1285
      %v1416 = vadd.f32 %v1010, %v1288
      %v1417 = vadd.f32 %v1015, %v1293
      %v1418 = vadd.f32 %v1018, %v1296
      %v1419 = vadd.f32 %v1023, %v1301
      %v1420 = vadd.f32 %v1026, %v1304
      %v1421 = vadd.f32 %v1031, %v1309
      %v1422 = vadd.f32 %v1034, %v1312
      %v1423 = vadd.f32 %v1039, %v1317
      %v1424 = vadd.f32 %v1042, %v1320
      %v1425 = vadd.f32 %v1047, %v1325
      %v1426 = vadd.f32 %v1050, %v1328
      %v1427 = vadd.f32 %v1055, %v1333
      %v1428 = vadd.f32 %v1058, %v1336
      %v1429 = vadd.f32 %v1063, %v1341
      %v1430 = vadd.f32 %v1066, %v1344
      %v1431 = vadd.f32 %v1071, %v1349
      %v1432 = vadd.f32 %v1074, %v1352
      %v1433 = vadd.f32 %v1079, %v1357
      %v1434 = vadd.f32 %v1082, %v1360
      %v1435 = vadd.f32 %v1087, %v1365
      %v1436 = vadd.f32 %v1090, %v1368
      %v1437 = vadd.f32 %v1095, %v1373
      %v1438 = vadd.f32 %v1098, %v1376
      %v1439 = vadd.f32 %v1103, %v1381
      %v1440 = vadd.f32 %v1106, %v1384
      %v1441 = vadd.f32 %v1111, %v1389
      %v1442 = vadd.f32 %v1114, %v1392
      %v1443 = vadd.f32 %v1119, %v1397
      %v1444 = vadd.f32 %v1122, %v1400
      %v1445 = vadd.f32 %v1127, %v1405
      %v1446 = vadd.f32 %v1130, %v1408
      %v1447 = vld [vmem:[#allocation2 + $0x8] sm:$0xe]
      %v1448 = vld [vmem:[#allocation2 + $0xc] sm:$0xf]
      %v1449 = vld [vmem:[#allocation2 + $0x10] sm:$0xf]
      %v1450 = vld [vmem:[#allocation2 + $0x14] sm:$0xf]
      %v1451 = vld [vmem:[#allocation2 + $0x18] sm:$0xf]
      %v1452 = vld [vmem:[#allocation2 + $0x1c] sm:$0xf]
      %v1453 = vld [vmem:[#allocation2 + $0x20] sm:$0xf]
      %v1454 = vld [vmem:[#allocation2 + $0x24] sm:$0xf]
      %v1455 = vld [vmem:[#allocation2 + $0x28] sm:$0xf]
      %v1456 = vld [vmem:[#allocation2 + $0x2c] sm:$0xf]
      %v1457 = vld [vmem:[#allocation2 + $0x30] sm:$0xf]
      %v1458 = vld [vmem:[#allocation2 + $0x34] sm:$0xf]
      %v1459 = vld [vmem:[#allocation2 + $0x38] sm:$0xf]
      %v1460 = vld [vmem:[#allocation2 + $0x3c] sm:$0xf]
      %v1461 = vld [vmem:[#allocation2 + $0x40] sm:$0xf]
      %v1462 = vld [vmem:[#allocation2 + $0x44] sm:$0xf]
      %v1463 = vld [vmem:[#allocation2 + $0x48] sm:$0xf]
      %v1464 = vld [vmem:[#allocation2 + $0x4c] sm:$0xf]
      %v1465 = vld [vmem:[#allocation2 + $0x50] sm:$0xf]
      %v1466 = vld [vmem:[#allocation2 + $0x54] sm:$0xf]
      %v1467 = vld [vmem:[#allocation2 + $0x58] sm:$0xf]
      %v1468 = vld [vmem:[#allocation2 + $0x5c] sm:$0xf]
      %v1469 = vld [vmem:[#allocation2 + $0x60] sm:$0xf]
      %v1470 = vld [vmem:[#allocation2 + $0x64] sm:$0xf]
      %v1471 = vld [vmem:[#allocation2 + $0x68] sm:$0xf]
      %v1472 = vld [vmem:[#allocation2 + $0x6c] sm:$0xf]
      %v1473 = vld [vmem:[#allocation2 + $0x70] sm:$0xf]
      %v1474 = vld [vmem:[#allocation2 + $0x74] sm:$0xf]
      %v1475 = vld [vmem:[#allocation2 + $0x78] sm:$0xf]
      %v1476 = vld [vmem:[#allocation2 + $0x7c] sm:$0xf]
      %v1477 = vld [vmem:[#allocation2 + $0x80] sm:$0xf]
      %v1478 = vld [vmem:[#allocation2 + $0x84] sm:$0xf]
      %v1479 = vld [vmem:[#allocation2 + $0x88] sm:$0xf]
      %v1480 = vld [vmem:[#allocation2 + $0x8c] sm:$0xf]
      %v1481 = vld [vmem:[#allocation2 + $0x90] sm:$0xf]
      %v1482 = vld [vmem:[#allocation2 + $0x94] sm:$0xf]
      %v1483 = vld [vmem:[#allocation2 + $0x98] sm:$0x1]
      %s1484 = scalar_lea.vmem %s2, 6
      %v1485 = vld [vmem:[%s1484] sm:$0x3]
      %v1523 = vunpack.c.l.b16 %v1447
      %v1524 = vunpack.c.l.b16 %v1448
      %v1525 = vunpack.c.l.b16 %v1449
      %v1526 = vunpack.c.l.b16 %v1450
      %v1527 = vunpack.c.l.b16 %v1451
      %v1528 = vunpack.c.l.b16 %v1452
      %v1529 = vunpack.c.l.b16 %v1453
      %v1530 = vunpack.c.l.b16 %v1454
      %v1531 = vunpack.c.l.b16 %v1455
      %v1532 = vunpack.c.l.b16 %v1456
      %v1533 = vunpack.c.l.b16 %v1457
      %v1534 = vunpack.c.l.b16 %v1458
      %v1535 = vunpack.c.l.b16 %v1459
      %v1536 = vunpack.c.l.b16 %v1460
      %v1537 = vunpack.c.l.b16 %v1461
      %v1538 = vunpack.c.l.b16 %v1462
      %v1539 = vunpack.c.l.b16 %v1463
      %v1540 = vunpack.c.l.b16 %v1464
      %v1541 = vunpack.c.l.b16 %v1465
      %v1542 = vunpack.c.l.b16 %v1466
      %v1543 = vunpack.c.l.b16 %v1467
      %v1544 = vunpack.c.l.b16 %v1468
      %v1545 = vunpack.c.l.b16 %v1469
      %v1546 = vunpack.c.l.b16 %v1470
      %v1547 = vunpack.c.l.b16 %v1471
      %v1548 = vunpack.c.l.b16 %v1472
      %v1549 = vunpack.c.l.b16 %v1473
      %v1550 = vunpack.c.l.b16 %v1474
      %v1551 = vunpack.c.l.b16 %v1475
      %v1552 = vunpack.c.l.b16 %v1476
      %v1553 = vunpack.c.l.b16 %v1477
      %v1554 = vunpack.c.l.b16 %v1478
      %v1555 = vunpack.c.l.b16 %v1479
      %v1556 = vunpack.c.l.b16 %v1480
      %v1557 = vunpack.c.l.b16 %v1481
      %v1558 = vunpack.c.l.b16 %v1482
      %v1559 = vunpack.c.l.b16 %v1483
      %v1560 = vpack.c.b16 %v1524, %v1523
      %v1561 = vpack.c.b16 %v1526, %v1525
      %v1562 = vpack.c.b16 %v1528, %v1527
      %v1563 = vpack.c.b16 %v1530, %v1529
      %v1564 = vpack.c.b16 %v1532, %v1531
      %v1565 = vpack.c.b16 %v1534, %v1533
      %v1566 = vpack.c.b16 %v1536, %v1535
      %v1567 = vpack.c.b16 %v1538, %v1537
      %v1568 = vpack.c.b16 %v1540, %v1539
      %v1569 = vpack.c.b16 %v1542, %v1541
      %v1570 = vpack.c.b16 %v1544, %v1543
      %v1571 = vpack.c.b16 %v1546, %v1545
      %v1572 = vpack.c.b16 %v1548, %v1547
      %v1573 = vpack.c.b16 %v1550, %v1549
      %v1574 = vpack.c.b16 %v1552, %v1551
      %v1575 = vpack.c.b16 %v1554, %v1553
      %v1576 = vpack.c.b16 %v1556, %v1555
      %v1577 = vpack.c.b16 %v1558, %v1557
      %v1578 = vpack.c.b16 %v1559, %v1559
      %v1579 = vrot.slane %v1560, 1
      %v1580 = vrot.slane %v1561, 1
      %v1581 = vsel %vm1139, %v1579, %v1580
      %v1582 = vrot.slane %v1562, 1
      %v1583 = vsel %vm1139, %v1580, %v1582
      %v1584 = vrot.slane %v1563, 1
      %v1585 = vsel %vm1139, %v1582, %v1584
      %v1586 = vrot.slane %v1564, 1
      %v1587 = vsel %vm1139, %v1584, %v1586
      %v1588 = vrot.slane %v1565, 1
      %v1589 = vsel %vm1139, %v1586, %v1588
      %v1590 = vrot.slane %v1566, 1
      %v1591 = vsel %vm1139, %v1588, %v1590
      %v1592 = vrot.slane %v1567, 1
      %v1593 = vsel %vm1139, %v1590, %v1592
      %v1594 = vrot.slane %v1568, 1
      %v1595 = vsel %vm1139, %v1592, %v1594
      %v1596 = vrot.slane %v1569, 1
      %v1597 = vsel %vm1139, %v1594, %v1596
      %v1598 = vrot.slane %v1570, 1
      %v1599 = vsel %vm1139, %v1596, %v1598
      %v1600 = vrot.slane %v1571, 1
      %v1601 = vsel %vm1139, %v1598, %v1600
      %v1602 = vrot.slane %v1572, 1
      %v1603 = vsel %vm1139, %v1600, %v1602
      %v1604 = vrot.slane %v1573, 1
      %v1605 = vsel %vm1139, %v1602, %v1604
      %v1606 = vrot.slane %v1574, 1
      %v1607 = vsel %vm1139, %v1604, %v1606
      %v1608 = vrot.slane %v1575, 1
      %v1609 = vsel %vm1139, %v1606, %v1608
      %v1610 = vrot.slane %v1576, 1
      %v1611 = vsel %vm1139, %v1608, %v1610
      %v1612 = vrot.slane %v1577, 1
      %v1613 = vsel %vm1139, %v1610, %v1612
      %v1614 = vrot.slane %v1578, 1
      %v1615 = vsel %vm1139, %v1612, %v1614
      %v1617 = vsel %vm681, %v1581, 0
      %v1620 = vsel %vm681, %v1583, 0
      %v1623 = vsel %vm681, %v1585, 0
      %v1626 = vsel %vm681, %v1587, 0
      %v1629 = vsel %vm681, %v1589, 0
      %v1632 = vsel %vm681, %v1591, 0
      %v1635 = vsel %vm681, %v1593, 0
      %v1638 = vsel %vm681, %v1595, 0
      %v1641 = vsel %vm681, %v1597, 0
      %v1644 = vsel %vm681, %v1599, 0
      %v1647 = vsel %vm681, %v1601, 0
      %v1650 = vsel %vm681, %v1603, 0
      %v1653 = vsel %vm681, %v1605, 0
      %v1656 = vsel %vm681, %v1607, 0
      %v1659 = vsel %vm681, %v1609, 0
      %v1662 = vsel %vm681, %v1611, 0
      %v1665 = vsel %vm681, %v1613, 0
      %v1668 = vsel %vm681, %v1615, 0
      %v1671 = vsel %vm736, %v1485, 0
      %1673 = vmatprep.subr.bf16.mxu0 0
      %1674 = vmatpush1.bf16.msra.mxu0 0
      %1675 = vmatprep.subr.bf16.mxu0 0
      %1676 = vmatpush1.bf16.msra.mxu0 0
      %1677 = vmatprep.subr.bf16.mxu0 0
      %1678 = vmatpush1.bf16.msra.mxu0 0
      %1679 = vmatprep.subr.bf16.mxu0 0
      %1680 = vmatpush1.bf16.msra.mxu0 0
      %1681 = vmatprep.subr.bf16.mxu0 0
      %1682 = vmatpush1.bf16.msra.mxu0 0
      %1683 = vmatprep.subr.bf16.mxu0 0
      %1684 = vmatpush1.bf16.msra.mxu0 0
      %1685 = vmatprep.subr.bf16.mxu0 0
      %1686 = vmatpush1.bf16.msra.mxu0 0
      %1687 = vmatprep.subr.bf16.mxu0 0
      %1688 = vmatpush1.bf16.msra.mxu0 %v1671
      %1689 = vmatprep.subr.bf16.mxu0 0
      %1690 = vmatpush2.bf16.msra.mxu0 0
      %1691 = vmatprep.subr.bf16.mxu0 0
      %1692 = vmatpush2.bf16.msra.mxu0 0
      %1693 = vmatprep.subr.bf16.mxu0 0
      %1694 = vmatpush2.bf16.msra.mxu0 0
      %1695 = vmatprep.subr.bf16.mxu0 0
      %1696 = vmatpush2.bf16.msra.mxu0 0
      %1697 = vmatprep.subr.bf16.mxu0 0
      %1698 = vmatpush2.bf16.msra.mxu0 0
      %1699 = vmatprep.subr.bf16.mxu0 0
      %1700 = vmatpush2.bf16.msra.mxu0 0
      %1701 = vmatprep.subr.bf16.mxu0 0
      %1702 = vmatpush2.bf16.msra.mxu0 0
      %1703 = vmatprep.subr.bf16.mxu0 0
      %1704 = vmatpush2.bf16.msra.mxu0 0
      %1705 = vmatprep.mubr.bf16.mxu0 0
      %1706 = vmatmul.mubr.bf16.gmra.mxu0 %v1617
      %v1707 = vpop.f32.mrf.mxu0
      %v1708 = vadd.f32 0.0, %v1707
      %v1709 = vpop.f32.mrf.mxu0
      %v1710 = vpop.f32.mrf.mxu0
      %v1711 = vadd.f32 0.0, %v1710
      %v1712 = vpop.f32.mrf.mxu0
      %1713 = vmatprep.mubr.bf16.mxu0 0
      %1714 = vmatmul.mubr.bf16.gmra.mxu0 %v1620
      %v1715 = vpop.f32.mrf.mxu0
      %v1716 = vadd.f32 0.0, %v1715
      %v1717 = vpop.f32.mrf.mxu0
      %v1718 = vpop.f32.mrf.mxu0
      %v1719 = vadd.f32 0.0, %v1718
      %v1720 = vpop.f32.mrf.mxu0
      %1721 = vmatprep.mubr.bf16.mxu0 0
      %1722 = vmatmul.mubr.bf16.gmra.mxu0 %v1623
      %v1723 = vpop.f32.mrf.mxu0
      %v1724 = vadd.f32 0.0, %v1723
      %v1725 = vpop.f32.mrf.mxu0
      %v1726 = vpop.f32.mrf.mxu0
      %v1727 = vadd.f32 0.0, %v1726
      %v1728 = vpop.f32.mrf.mxu0
      %1729 = vmatprep.mubr.bf16.mxu0 0
      %1730 = vmatmul.mubr.bf16.gmra.mxu0 %v1626
      %v1731 = vpop.f32.mrf.mxu0
      %v1732 = vadd.f32 0.0, %v1731
      %v1733 = vpop.f32.mrf.mxu0
      %v1734 = vpop.f32.mrf.mxu0
      %v1735 = vadd.f32 0.0, %v1734
      %v1736 = vpop.f32.mrf.mxu0
      %1737 = vmatprep.mubr.bf16.mxu0 0
      %1738 = vmatmul.mubr.bf16.gmra.mxu0 %v1629
      %v1739 = vpop.f32.mrf.mxu0
      %v1740 = vadd.f32 0.0, %v1739
      %v1741 = vpop.f32.mrf.mxu0
      %v1742 = vpop.f32.mrf.mxu0
      %v1743 = vadd.f32 0.0, %v1742
      %v1744 = vpop.f32.mrf.mxu0
      %1745 = vmatprep.mubr.bf16.mxu0 0
      %1746 = vmatmul.mubr.bf16.gmra.mxu0 %v1632
      %v1747 = vpop.f32.mrf.mxu0
      %v1748 = vadd.f32 0.0, %v1747
      %v1749 = vpop.f32.mrf.mxu0
      %v1750 = vpop.f32.mrf.mxu0
      %v1751 = vadd.f32 0.0, %v1750
      %v1752 = vpop.f32.mrf.mxu0
      %1753 = vmatprep.mubr.bf16.mxu0 0
      %1754 = vmatmul.mubr.bf16.gmra.mxu0 %v1635
      %v1755 = vpop.f32.mrf.mxu0
      %v1756 = vadd.f32 0.0, %v1755
      %v1757 = vpop.f32.mrf.mxu0
      %v1758 = vpop.f32.mrf.mxu0
      %v1759 = vadd.f32 0.0, %v1758
      %v1760 = vpop.f32.mrf.mxu0
      %1761 = vmatprep.mubr.bf16.mxu0 0
      %1762 = vmatmul.mubr.bf16.gmra.mxu0 %v1638
      %v1763 = vpop.f32.mrf.mxu0
      %v1764 = vadd.f32 0.0, %v1763
      %v1765 = vpop.f32.mrf.mxu0
      %v1766 = vpop.f32.mrf.mxu0
      %v1767 = vadd.f32 0.0, %v1766
      %v1768 = vpop.f32.mrf.mxu0
      %1769 = vmatprep.mubr.bf16.mxu0 0
      %1770 = vmatmul.mubr.bf16.gmra.mxu0 %v1641
      %v1771 = vpop.f32.mrf.mxu0
      %v1772 = vadd.f32 0.0, %v1771
      %v1773 = vpop.f32.mrf.mxu0
      %v1774 = vpop.f32.mrf.mxu0
      %v1775 = vadd.f32 0.0, %v1774
      %v1776 = vpop.f32.mrf.mxu0
      %1777 = vmatprep.mubr.bf16.mxu0 0
      %1778 = vmatmul.mubr.bf16.gmra.mxu0 %v1644
      %v1779 = vpop.f32.mrf.mxu0
      %v1780 = vadd.f32 0.0, %v1779
      %v1781 = vpop.f32.mrf.mxu0
      %v1782 = vpop.f32.mrf.mxu0
      %v1783 = vadd.f32 0.0, %v1782
      %v1784 = vpop.f32.mrf.mxu0
      %1785 = vmatprep.mubr.bf16.mxu0 0
      %1786 = vmatmul.mubr.bf16.gmra.mxu0 %v1647
      %v1787 = vpop.f32.mrf.mxu0
      %v1788 = vadd.f32 0.0, %v1787
      %v1789 = vpop.f32.mrf.mxu0
      %v1790 = vpop.f32.mrf.mxu0
      %v1791 = vadd.f32 0.0, %v1790
      %v1792 = vpop.f32.mrf.mxu0
      %1793 = vmatprep.mubr.bf16.mxu0 0
      %1794 = vmatmul.mubr.bf16.gmra.mxu0 %v1650
      %v1795 = vpop.f32.mrf.mxu0
      %v1796 = vadd.f32 0.0, %v1795
      %v1797 = vpop.f32.mrf.mxu0
      %v1798 = vpop.f32.mrf.mxu0
      %v1799 = vadd.f32 0.0, %v1798
      %v1800 = vpop.f32.mrf.mxu0
      %1801 = vmatprep.mubr.bf16.mxu0 0
      %1802 = vmatmul.mubr.bf16.gmra.mxu0 %v1653
      %v1803 = vpop.f32.mrf.mxu0
      %v1804 = vadd.f32 0.0, %v1803
      %v1805 = vpop.f32.mrf.mxu0
      %v1806 = vpop.f32.mrf.mxu0
      %v1807 = vadd.f32 0.0, %v1806
      %v1808 = vpop.f32.mrf.mxu0
      %1809 = vmatprep.mubr.bf16.mxu0 0
      %1810 = vmatmul.mubr.bf16.gmra.mxu0 %v1656
      %v1811 = vpop.f32.mrf.mxu0
      %v1812 = vadd.f32 0.0, %v1811
      %v1813 = vpop.f32.mrf.mxu0
      %v1814 = vpop.f32.mrf.mxu0
      %v1815 = vadd.f32 0.0, %v1814
      %v1816 = vpop.f32.mrf.mxu0
      %1817 = vmatprep.mubr.bf16.mxu0 0
      %1818 = vmatmul.mubr.bf16.gmra.mxu0 %v1659
      %v1819 = vpop.f32.mrf.mxu0
      %v1820 = vadd.f32 0.0, %v1819
      %v1821 = vpop.f32.mrf.mxu0
      %v1822 = vpop.f32.mrf.mxu0
      %v1823 = vadd.f32 0.0, %v1822
      %v1824 = vpop.f32.mrf.mxu0
      %1825 = vmatprep.mubr.bf16.mxu0 0
      %1826 = vmatmul.mubr.bf16.gmra.mxu0 %v1662
      %v1827 = vpop.f32.mrf.mxu0
      %v1828 = vadd.f32 0.0, %v1827
      %v1829 = vpop.f32.mrf.mxu0
      %v1830 = vpop.f32.mrf.mxu0
      %v1831 = vadd.f32 0.0, %v1830
      %v1832 = vpop.f32.mrf.mxu0
      %1833 = vmatprep.mubr.bf16.mxu0 0
      %1834 = vmatmul.mubr.bf16.gmra.mxu0 %v1665
      %v1835 = vpop.f32.mrf.mxu0
      %v1836 = vadd.f32 0.0, %v1835
      %v1837 = vpop.f32.mrf.mxu0
      %v1838 = vpop.f32.mrf.mxu0
      %v1839 = vadd.f32 0.0, %v1838
      %v1840 = vpop.f32.mrf.mxu0
      %1841 = vmatprep.mubr.bf16.mxu0 0
      %1842 = vmatmul.mubr.bf16.gmra.mxu0 %v1668
      %v1843 = vpop.f32.mrf.mxu0
      %v1844 = vadd.f32 0.0, %v1843
      %v1845 = vpop.f32.mrf.mxu0
      %v1846 = vpop.f32.mrf.mxu0
      %v1847 = vadd.f32 0.0, %v1846
      %v1848 = vpop.f32.mrf.mxu0
      %1849 = vdwg.mxu0
      %v1850 = vadd.f32 %v1411, %v1708
      %v1851 = vadd.f32 %v1412, %v1711
      %v1852 = vadd.f32 %v1413, %v1716
      %v1853 = vadd.f32 %v1414, %v1719
      %v1854 = vadd.f32 %v1415, %v1724
      %v1855 = vadd.f32 %v1416, %v1727
      %v1856 = vadd.f32 %v1417, %v1732
      %v1857 = vadd.f32 %v1418, %v1735
      %v1858 = vadd.f32 %v1419, %v1740
      %v1859 = vadd.f32 %v1420, %v1743
      %v1860 = vadd.f32 %v1421, %v1748
      %v1861 = vadd.f32 %v1422, %v1751
      %v1862 = vadd.f32 %v1423, %v1756
      %v1863 = vadd.f32 %v1424, %v1759
      %v1864 = vadd.f32 %v1425, %v1764
      %v1865 = vadd.f32 %v1426, %v1767
      %v1866 = vadd.f32 %v1427, %v1772
      %v1867 = vadd.f32 %v1428, %v1775
      %v1868 = vadd.f32 %v1429, %v1780
      %v1869 = vadd.f32 %v1430, %v1783
      %v1870 = vadd.f32 %v1431, %v1788
      %v1871 = vadd.f32 %v1432, %v1791
      %v1872 = vadd.f32 %v1433, %v1796
      %v1873 = vadd.f32 %v1434, %v1799
      %v1874 = vadd.f32 %v1435, %v1804
      %v1875 = vadd.f32 %v1436, %v1807
      %v1876 = vadd.f32 %v1437, %v1812
      %v1877 = vadd.f32 %v1438, %v1815
      %v1878 = vadd.f32 %v1439, %v1820
      %v1879 = vadd.f32 %v1440, %v1823
      %v1880 = vadd.f32 %v1441, %v1828
      %v1881 = vadd.f32 %v1442, %v1831
      %v1882 = vadd.f32 %v1443, %v1836
      %v1883 = vadd.f32 %v1444, %v1839
      %v1884 = vadd.f32 %v1445, %v1844
      %v1885 = vadd.f32 %v1446, %v1847
      %v1886 = vld [vmem:[#allocation2 + $0x98] sm:$0x3]
      %s1887 = scalar_lea.vmem %s2, 8
      %v1888 = vld [vmem:[%s1887] sm:$0x3]
      %v1890 = vunpack.c.l.b16 %v1886
      %v1891 = vpack.c.b16 %v1890, %v1890
      %vm1892 = vsmask.f32 6400
      %v1894 = vshrl.u32 %v1560, 16
      %v1896 = vrot.slane %v1894, 1
      %v1897 = vshll.u32 %v1560, 16
      %v1899 = vrot.slane %v1897, 2
      %v1900 = vor.u32 %v1896, %v1899
      %v1902 = vshrl.u32 %v1561, 16
      %v1904 = vrot.slane %v1902, 1
      %v1905 = vshll.u32 %v1561, 16
      %v1907 = vrot.slane %v1905, 2
      %v1908 = vor.u32 %v1904, %v1907
      %v1909 = vsel %vm1892, %v1900, %v1908
      %v1911 = vshrl.u32 %v1562, 16
      %v1913 = vrot.slane %v1911, 1
      %v1914 = vshll.u32 %v1562, 16
      %v1916 = vrot.slane %v1914, 2
      %v1917 = vor.u32 %v1913, %v1916
      %v1918 = vsel %vm1892, %v1908, %v1917
      %v1920 = vshrl.u32 %v1563, 16
      %v1922 = vrot.slane %v1920, 1
      %v1923 = vshll.u32 %v1563, 16
      %v1925 = vrot.slane %v1923, 2
      %v1926 = vor.u32 %v1922, %v1925
      %v1927 = vsel %vm1892, %v1917, %v1926
      %v1929 = vshrl.u32 %v1564, 16
      %v1931 = vrot.slane %v1929, 1
      %v1932 = vshll.u32 %v1564, 16
      %v1934 = vrot.slane %v1932, 2
      %v1935 = vor.u32 %v1931, %v1934
      %v1936 = vsel %vm1892, %v1926, %v1935
      %v1938 = vshrl.u32 %v1565, 16
      %v1940 = vrot.slane %v1938, 1
      %v1941 = vshll.u32 %v1565, 16
      %v1943 = vrot.slane %v1941, 2
      %v1944 = vor.u32 %v1940, %v1943
      %v1945 = vsel %vm1892, %v1935, %v1944
      %v1947 = vshrl.u32 %v1566, 16
      %v1949 = vrot.slane %v1947, 1
      %v1950 = vshll.u32 %v1566, 16
      %v1952 = vrot.slane %v1950, 2
      %v1953 = vor.u32 %v1949, %v1952
      %v1954 = vsel %vm1892, %v1944, %v1953
      %v1956 = vshrl.u32 %v1567, 16
      %v1958 = vrot.slane %v1956, 1
      %v1959 = vshll.u32 %v1567, 16
      %v1961 = vrot.slane %v1959, 2
      %v1962 = vor.u32 %v1958, %v1961
      %v1963 = vsel %vm1892, %v1953, %v1962
      %v1965 = vshrl.u32 %v1568, 16
      %v1967 = vrot.slane %v1965, 1
      %v1968 = vshll.u32 %v1568, 16
      %v1970 = vrot.slane %v1968, 2
      %v1971 = vor.u32 %v1967, %v1970
      %v1972 = vsel %vm1892, %v1962, %v1971
      %v1974 = vshrl.u32 %v1569, 16
      %v1976 = vrot.slane %v1974, 1
      %v1977 = vshll.u32 %v1569, 16
      %v1979 = vrot.slane %v1977, 2
      %v1980 = vor.u32 %v1976, %v1979
      %v1981 = vsel %vm1892, %v1971, %v1980
      %v1983 = vshrl.u32 %v1570, 16
      %v1985 = vrot.slane %v1983, 1
      %v1986 = vshll.u32 %v1570, 16
      %v1988 = vrot.slane %v1986, 2
      %v1989 = vor.u32 %v1985, %v1988
      %v1990 = vsel %vm1892, %v1980, %v1989
      %v1992 = vshrl.u32 %v1571, 16
      %v1994 = vrot.slane %v1992, 1
      %v1995 = vshll.u32 %v1571, 16
      %v1997 = vrot.slane %v1995, 2
      %v1998 = vor.u32 %v1994, %v1997
      %v1999 = vsel %vm1892, %v1989, %v1998
      %v2001 = vshrl.u32 %v1572, 16
      %v2003 = vrot.slane %v2001, 1
      %v2004 = vshll.u32 %v1572, 16
      %v2006 = vrot.slane %v2004, 2
      %v2007 = vor.u32 %v2003, %v2006
      %v2008 = vsel %vm1892, %v1998, %v2007
      %v2010 = vshrl.u32 %v1573, 16
      %v2012 = vrot.slane %v2010, 1
      %v2013 = vshll.u32 %v1573, 16
      %v2015 = vrot.slane %v2013, 2
      %v2016 = vor.u32 %v2012, %v2015
      %v2017 = vsel %vm1892, %v2007, %v2016
      %v2019 = vshrl.u32 %v1574, 16
      %v2021 = vrot.slane %v2019, 1
      %v2022 = vshll.u32 %v1574, 16
      %v2024 = vrot.slane %v2022, 2
      %v2025 = vor.u32 %v2021, %v2024
      %v2026 = vsel %vm1892, %v2016, %v2025
      %v2028 = vshrl.u32 %v1575, 16
      %v2030 = vrot.slane %v2028, 1
      %v2031 = vshll.u32 %v1575, 16
      %v2033 = vrot.slane %v2031, 2
      %v2034 = vor.u32 %v2030, %v2033
      %v2035 = vsel %vm1892, %v2025, %v2034
      %v2037 = vshrl.u32 %v1576, 16
      %v2039 = vrot.slane %v2037, 1
      %v2040 = vshll.u32 %v1576, 16
      %v2042 = vrot.slane %v2040, 2
      %v2043 = vor.u32 %v2039, %v2042
      %v2044 = vsel %vm1892, %v2034, %v2043
      %v2046 = vshrl.u32 %v1577, 16
      %v2048 = vrot.slane %v2046, 1
      %v2049 = vshll.u32 %v1577, 16
      %v2051 = vrot.slane %v2049, 2
      %v2052 = vor.u32 %v2048, %v2051
      %v2053 = vsel %vm1892, %v2043, %v2052
      %v2055 = vshrl.u32 %v1891, 16
      %v2057 = vrot.slane %v2055, 1
      %v2058 = vshll.u32 %v1891, 16
      %v2060 = vrot.slane %v2058, 2
      %v2061 = vor.u32 %v2057, %v2060
      %v2062 = vsel %vm1892, %v2052, %v2061
      %v2064 = vsel %vm681, %v1909, 0
      %v2067 = vsel %vm681, %v1918, 0
      %v2070 = vsel %vm681, %v1927, 0
      %v2073 = vsel %vm681, %v1936, 0
      %v2076 = vsel %vm681, %v1945, 0
      %v2079 = vsel %vm681, %v1954, 0
      %v2082 = vsel %vm681, %v1963, 0
      %v2085 = vsel %vm681, %v1972, 0
      %v2088 = vsel %vm681, %v1981, 0
      %v2091 = vsel %vm681, %v1990, 0
      %v2094 = vsel %vm681, %v1999, 0
      %v2097 = vsel %vm681, %v2008, 0
      %v2100 = vsel %vm681, %v2017, 0
      %v2103 = vsel %vm681, %v2026, 0
      %v2106 = vsel %vm681, %v2035, 0
      %v2109 = vsel %vm681, %v2044, 0
      %v2112 = vsel %vm681, %v2053, 0
      %v2115 = vsel %vm681, %v2062, 0
      %v2118 = vsel %vm736, %v1888, 0
      %2120 = vmatprep.subr.bf16.mxu0 0
      %2121 = vmatpush1.bf16.msra.mxu0 0
      %2122 = vmatprep.subr.bf16.mxu0 0
      %2123 = vmatpush1.bf16.msra.mxu0 0
      %2124 = vmatprep.subr.bf16.mxu0 0
      %2125 = vmatpush1.bf16.msra.mxu0 0
      %2126 = vmatprep.subr.bf16.mxu0 0
      %2127 = vmatpush1.bf16.msra.mxu0 0
      %2128 = vmatprep.subr.bf16.mxu0 0
      %2129 = vmatpush1.bf16.msra.mxu0 0
      %2130 = vmatprep.subr.bf16.mxu0 0
      %2131 = vmatpush1.bf16.msra.mxu0 0
      %2132 = vmatprep.subr.bf16.mxu0 0
      %2133 = vmatpush1.bf16.msra.mxu0 0
      %2134 = vmatprep.subr.bf16.mxu0 0
      %2135 = vmatpush1.bf16.msra.mxu0 %v2118
      %2136 = vmatprep.subr.bf16.mxu0 0
      %2137 = vmatpush2.bf16.msra.mxu0 0
      %2138 = vmatprep.subr.bf16.mxu0 0
      %2139 = vmatpush2.bf16.msra.mxu0 0
      %2140 = vmatprep.subr.bf16.mxu0 0
      %2141 = vmatpush2.bf16.msra.mxu0 0
      %2142 = vmatprep.subr.bf16.mxu0 0
      %2143 = vmatpush2.bf16.msra.mxu0 0
      %2144 = vmatprep.subr.bf16.mxu0 0
      %2145 = vmatpush2.bf16.msra.mxu0 0
      %2146 = vmatprep.subr.bf16.mxu0 0
      %2147 = vmatpush2.bf16.msra.mxu0 0
      %2148 = vmatprep.subr.bf16.mxu0 0
      %2149 = vmatpush2.bf16.msra.mxu0 0
      %2150 = vmatprep.subr.bf16.mxu0 0
      %2151 = vmatpush2.bf16.msra.mxu0 0
      %2152 = vmatprep.mubr.bf16.mxu0 0
      %2153 = vmatmul.mubr.bf16.gmra.mxu0 %v2064
      %v2154 = vpop.f32.mrf.mxu0
      %v2155 = vadd.f32 0.0, %v2154
      %v2156 = vpop.f32.mrf.mxu0
      %v2157 = vpop.f32.mrf.mxu0
      %v2158 = vadd.f32 0.0, %v2157
      %v2159 = vpop.f32.mrf.mxu0
      %2160 = vmatprep.mubr.bf16.mxu0 0
      %2161 = vmatmul.mubr.bf16.gmra.mxu0 %v2067
      %v2162 = vpop.f32.mrf.mxu0
      %v2163 = vadd.f32 0.0, %v2162
      %v2164 = vpop.f32.mrf.mxu0
      %v2165 = vpop.f32.mrf.mxu0
      %v2166 = vadd.f32 0.0, %v2165
      %v2167 = vpop.f32.mrf.mxu0
      %2168 = vmatprep.mubr.bf16.mxu0 0
      %2169 = vmatmul.mubr.bf16.gmra.mxu0 %v2070
      %v2170 = vpop.f32.mrf.mxu0
      %v2171 = vadd.f32 0.0, %v2170
      %v2172 = vpop.f32.mrf.mxu0
      %v2173 = vpop.f32.mrf.mxu0
      %v2174 = vadd.f32 0.0, %v2173
      %v2175 = vpop.f32.mrf.mxu0
      %2176 = vmatprep.mubr.bf16.mxu0 0
      %2177 = vmatmul.mubr.bf16.gmra.mxu0 %v2073
      %v2178 = vpop.f32.mrf.mxu0
      %v2179 = vadd.f32 0.0, %v2178
      %v2180 = vpop.f32.mrf.mxu0
      %v2181 = vpop.f32.mrf.mxu0
      %v2182 = vadd.f32 0.0, %v2181
      %v2183 = vpop.f32.mrf.mxu0
      %2184 = vmatprep.mubr.bf16.mxu0 0
      %2185 = vmatmul.mubr.bf16.gmra.mxu0 %v2076
      %v2186 = vpop.f32.mrf.mxu0
      %v2187 = vadd.f32 0.0, %v2186
      %v2188 = vpop.f32.mrf.mxu0
      %v2189 = vpop.f32.mrf.mxu0
      %v2190 = vadd.f32 0.0, %v2189
      %v2191 = vpop.f32.mrf.mxu0
      %2192 = vmatprep.mubr.bf16.mxu0 0
      %2193 = vmatmul.mubr.bf16.gmra.mxu0 %v2079
      %v2194 = vpop.f32.mrf.mxu0
      %v2195 = vadd.f32 0.0, %v2194
      %v2196 = vpop.f32.mrf.mxu0
      %v2197 = vpop.f32.mrf.mxu0
      %v2198 = vadd.f32 0.0, %v2197
      %v2199 = vpop.f32.mrf.mxu0
      %2200 = vmatprep.mubr.bf16.mxu0 0
      %2201 = vmatmul.mubr.bf16.gmra.mxu0 %v2082
      %v2202 = vpop.f32.mrf.mxu0
      %v2203 = vadd.f32 0.0, %v2202
      %v2204 = vpop.f32.mrf.mxu0
      %v2205 = vpop.f32.mrf.mxu0
      %v2206 = vadd.f32 0.0, %v2205
      %v2207 = vpop.f32.mrf.mxu0
      %2208 = vmatprep.mubr.bf16.mxu0 0
      %2209 = vmatmul.mubr.bf16.gmra.mxu0 %v2085
      %v2210 = vpop.f32.mrf.mxu0
      %v2211 = vadd.f32 0.0, %v2210
      %v2212 = vpop.f32.mrf.mxu0
      %v2213 = vpop.f32.mrf.mxu0
      %v2214 = vadd.f32 0.0, %v2213
      %v2215 = vpop.f32.mrf.mxu0
      %2216 = vmatprep.mubr.bf16.mxu0 0
      %2217 = vmatmul.mubr.bf16.gmra.mxu0 %v2088
      %v2218 = vpop.f32.mrf.mxu0
      %v2219 = vadd.f32 0.0, %v2218
      %v2220 = vpop.f32.mrf.mxu0
      %v2221 = vpop.f32.mrf.mxu0
      %v2222 = vadd.f32 0.0, %v2221
      %v2223 = vpop.f32.mrf.mxu0
      %2224 = vmatprep.mubr.bf16.mxu0 0
      %2225 = vmatmul.mubr.bf16.gmra.mxu0 %v2091
      %v2226 = vpop.f32.mrf.mxu0
      %v2227 = vadd.f32 0.0, %v2226
      %v2228 = vpop.f32.mrf.mxu0
      %v2229 = vpop.f32.mrf.mxu0
      %v2230 = vadd.f32 0.0, %v2229
      %v2231 = vpop.f32.mrf.mxu0
      %2232 = vmatprep.mubr.bf16.mxu0 0
      %2233 = vmatmul.mubr.bf16.gmra.mxu0 %v2094
      %v2234 = vpop.f32.mrf.mxu0
      %v2235 = vadd.f32 0.0, %v2234
      %v2236 = vpop.f32.mrf.mxu0
      %v2237 = vpop.f32.mrf.mxu0
      %v2238 = vadd.f32 0.0, %v2237
      %v2239 = vpop.f32.mrf.mxu0
      %2240 = vmatprep.mubr.bf16.mxu0 0
      %2241 = vmatmul.mubr.bf16.gmra.mxu0 %v2097
      %v2242 = vpop.f32.mrf.mxu0
      %v2243 = vadd.f32 0.0, %v2242
      %v2244 = vpop.f32.mrf.mxu0
      %v2245 = vpop.f32.mrf.mxu0
      %v2246 = vadd.f32 0.0, %v2245
      %v2247 = vpop.f32.mrf.mxu0
      %2248 = vmatprep.mubr.bf16.mxu0 0
      %2249 = vmatmul.mubr.bf16.gmra.mxu0 %v2100
      %v2250 = vpop.f32.mrf.mxu0
      %v2251 = vadd.f32 0.0, %v2250
      %v2252 = vpop.f32.mrf.mxu0
      %v2253 = vpop.f32.mrf.mxu0
      %v2254 = vadd.f32 0.0, %v2253
      %v2255 = vpop.f32.mrf.mxu0
      %2256 = vmatprep.mubr.bf16.mxu0 0
      %2257 = vmatmul.mubr.bf16.gmra.mxu0 %v2103
      %v2258 = vpop.f32.mrf.mxu0
      %v2259 = vadd.f32 0.0, %v2258
      %v2260 = vpop.f32.mrf.mxu0
      %v2261 = vpop.f32.mrf.mxu0
      %v2262 = vadd.f32 0.0, %v2261
      %v2263 = vpop.f32.mrf.mxu0
      %2264 = vmatprep.mubr.bf16.mxu0 0
      %2265 = vmatmul.mubr.bf16.gmra.mxu0 %v2106
      %v2266 = vpop.f32.mrf.mxu0
      %v2267 = vadd.f32 0.0, %v2266
      %v2268 = vpop.f32.mrf.mxu0
      %v2269 = vpop.f32.mrf.mxu0
      %v2270 = vadd.f32 0.0, %v2269
      %v2271 = vpop.f32.mrf.mxu0
      %2272 = vmatprep.mubr.bf16.mxu0 0
      %2273 = vmatmul.mubr.bf16.gmra.mxu0 %v2109
      %v2274 = vpop.f32.mrf.mxu0
      %v2275 = vadd.f32 0.0, %v2274
      %v2276 = vpop.f32.mrf.mxu0
      %v2277 = vpop.f32.mrf.mxu0
      %v2278 = vadd.f32 0.0, %v2277
      %v2279 = vpop.f32.mrf.mxu0
      %2280 = vmatprep.mubr.bf16.mxu0 0
      %2281 = vmatmul.mubr.bf16.gmra.mxu0 %v2112
      %v2282 = vpop.f32.mrf.mxu0
      %v2283 = vadd.f32 0.0, %v2282
      %v2284 = vpop.f32.mrf.mxu0
      %v2285 = vpop.f32.mrf.mxu0
      %v2286 = vadd.f32 0.0, %v2285
      %v2287 = vpop.f32.mrf.mxu0
      %2288 = vmatprep.mubr.bf16.mxu0 0
      %2289 = vmatmul.mubr.bf16.gmra.mxu0 %v2115
      %v2290 = vpop.f32.mrf.mxu0
      %v2291 = vadd.f32 0.0, %v2290
      %v2292 = vpop.f32.mrf.mxu0
      %v2293 = vpop.f32.mrf.mxu0
      %v2294 = vadd.f32 0.0, %v2293
      %v2295 = vpop.f32.mrf.mxu0
      %2296 = vdwg.mxu0
      %v2297 = vadd.f32 %v1850, %v2155
      %v2298 = vadd.f32 %v1851, %v2158
      %v2299 = vadd.f32 %v1852, %v2163
      %v2300 = vadd.f32 %v1853, %v2166
      %v2301 = vadd.f32 %v1854, %v2171
      %v2302 = vadd.f32 %v1855, %v2174
      %v2303 = vadd.f32 %v1856, %v2179
      %v2304 = vadd.f32 %v1857, %v2182
      %v2305 = vadd.f32 %v1858, %v2187
      %v2306 = vadd.f32 %v1859, %v2190
      %v2307 = vadd.f32 %v1860, %v2195
      %v2308 = vadd.f32 %v1861, %v2198
      %v2309 = vadd.f32 %v1862, %v2203
      %v2310 = vadd.f32 %v1863, %v2206
      %v2311 = vadd.f32 %v1864, %v2211
      %v2312 = vadd.f32 %v1865, %v2214
      %v2313 = vadd.f32 %v1866, %v2219
      %v2314 = vadd.f32 %v1867, %v2222
      %v2315 = vadd.f32 %v1868, %v2227
      %v2316 = vadd.f32 %v1869, %v2230
      %v2317 = vadd.f32 %v1870, %v2235
      %v2318 = vadd.f32 %v1871, %v2238
      %v2319 = vadd.f32 %v1872, %v2243
      %v2320 = vadd.f32 %v1873, %v2246
      %v2321 = vadd.f32 %v1874, %v2251
      %v2322 = vadd.f32 %v1875, %v2254
      %v2323 = vadd.f32 %v1876, %v2259
      %v2324 = vadd.f32 %v1877, %v2262
      %v2325 = vadd.f32 %v1878, %v2267
      %v2326 = vadd.f32 %v1879, %v2270
      %v2327 = vadd.f32 %v1880, %v2275
      %v2328 = vadd.f32 %v1881, %v2278
      %v2329 = vadd.f32 %v1882, %v2283
      %v2330 = vadd.f32 %v1883, %v2286
      %v2331 = vadd.f32 %v1884, %v2291
      %v2332 = vadd.f32 %v1885, %v2294
      %v2333 = vld [vmem:[#allocation2 + $0x8] sm:$0xc]
      %s2334 = scalar_lea.vmem %s2, 10
      %v2335 = vld [vmem:[%s2334] sm:$0x3]
      %v2337 = vunpack.c.l.b16 %v2333
      %v2338 = vpack.c.b16 %v1524, %v2337
      %vm2339 = vcmask 1045504
      %v2340 = vrot.slane %v2338, 2
      %v2341 = vrot.slane %v1561, 2
      %v2342 = vsel %vm2339, %v2340, %v2341
      %v2343 = vrot.slane %v1562, 2
      %v2344 = vsel %vm2339, %v2341, %v2343
      %v2345 = vrot.slane %v1563, 2
      %v2346 = vsel %vm2339, %v2343, %v2345
      %v2347 = vrot.slane %v1564, 2
      %v2348 = vsel %vm2339, %v2345, %v2347
      %v2349 = vrot.slane %v1565, 2
      %v2350 = vsel %vm2339, %v2347, %v2349
      %v2351 = vrot.slane %v1566, 2
      %v2352 = vsel %vm2339, %v2349, %v2351
      %v2353 = vrot.slane %v1567, 2
      %v2354 = vsel %vm2339, %v2351, %v2353
      %v2355 = vrot.slane %v1568, 2
      %v2356 = vsel %vm2339, %v2353, %v2355
      %v2357 = vrot.slane %v1569, 2
      %v2358 = vsel %vm2339, %v2355, %v2357
      %v2359 = vrot.slane %v1570, 2
      %v2360 = vsel %vm2339, %v2357, %v2359
      %v2361 = vrot.slane %v1571, 2
      %v2362 = vsel %vm2339, %v2359, %v2361
      %v2363 = vrot.slane %v1572, 2
      %v2364 = vsel %vm2339, %v2361, %v2363
      %v2365 = vrot.slane %v1573, 2
      %v2366 = vsel %vm2339, %v2363, %v2365
      %v2367 = vrot.slane %v1574, 2
      %v2368 = vsel %vm2339, %v2365, %v2367
      %v2369 = vrot.slane %v1575, 2
      %v2370 = vsel %vm2339, %v2367, %v2369
      %v2371 = vrot.slane %v1576, 2
      %v2372 = vsel %vm2339, %v2369, %v2371
      %v2373 = vrot.slane %v1577, 2
      %v2374 = vsel %vm2339, %v2371, %v2373
      %v2375 = vrot.slane %v1891, 2
      %v2376 = vsel %vm2339, %v2373, %v2375
      %v2378 = vsel %vm681, %v2342, 0
      %v2381 = vsel %vm681, %v2344, 0
      %v2384 = vsel %vm681, %v2346, 0
      %v2387 = vsel %vm681, %v2348, 0
      %v2390 = vsel %vm681, %v2350, 0
      %v2393 = vsel %vm681, %v2352, 0
      %v2396 = vsel %vm681, %v2354, 0
      %v2399 = vsel %vm681, %v2356, 0
      %v2402 = vsel %vm681, %v2358, 0
      %v2405 = vsel %vm681, %v2360, 0
      %v2408 = vsel %vm681, %v2362, 0
      %v2411 = vsel %vm681, %v2364, 0
      %v2414 = vsel %vm681, %v2366, 0
      %v2417 = vsel %vm681, %v2368, 0
      %v2420 = vsel %vm681, %v2370, 0
      %v2423 = vsel %vm681, %v2372, 0
      %v2426 = vsel %vm681, %v2374, 0
      %v2429 = vsel %vm681, %v2376, 0
      %v2432 = vsel %vm736, %v2335, 0
      %2434 = vmatprep.subr.bf16.mxu0 0
      %2435 = vmatpush1.bf16.msra.mxu0 0
      %2436 = vmatprep.subr.bf16.mxu0 0
      %2437 = vmatpush1.bf16.msra.mxu0 0
      %2438 = vmatprep.subr.bf16.mxu0 0
      %2439 = vmatpush1.bf16.msra.mxu0 0
      %2440 = vmatprep.subr.bf16.mxu0 0
      %2441 = vmatpush1.bf16.msra.mxu0 0
      %2442 = vmatprep.subr.bf16.mxu0 0
      %2443 = vmatpush1.bf16.msra.mxu0 0
      %2444 = vmatprep.subr.bf16.mxu0 0
      %2445 = vmatpush1.bf16.msra.mxu0 0
      %2446 = vmatprep.subr.bf16.mxu0 0
      %2447 = vmatpush1.bf16.msra.mxu0 0
      %2448 = vmatprep.subr.bf16.mxu0 0
      %2449 = vmatpush1.bf16.msra.mxu0 %v2432
      %2450 = vmatprep.subr.bf16.mxu0 0
      %2451 = vmatpush2.bf16.msra.mxu0 0
      %2452 = vmatprep.subr.bf16.mxu0 0
      %2453 = vmatpush2.bf16.msra.mxu0 0
      %2454 = vmatprep.subr.bf16.mxu0 0
      %2455 = vmatpush2.bf16.msra.mxu0 0
      %2456 = vmatprep.subr.bf16.mxu0 0
      %2457 = vmatpush2.bf16.msra.mxu0 0
      %2458 = vmatprep.subr.bf16.mxu0 0
      %2459 = vmatpush2.bf16.msra.mxu0 0
      %2460 = vmatprep.subr.bf16.mxu0 0
      %2461 = vmatpush2.bf16.msra.mxu0 0
      %2462 = vmatprep.subr.bf16.mxu0 0
      %2463 = vmatpush2.bf16.msra.mxu0 0
      %2464 = vmatprep.subr.bf16.mxu0 0
      %2465 = vmatpush2.bf16.msra.mxu0 0
      %2466 = vmatprep.mubr.bf16.mxu0 0
      %2467 = vmatmul.mubr.bf16.gmra.mxu0 %v2378
      %v2468 = vpop.f32.mrf.mxu0
      %v2469 = vadd.f32 0.0, %v2468
      %v2470 = vpop.f32.mrf.mxu0
      %v2471 = vpop.f32.mrf.mxu0
      %v2472 = vadd.f32 0.0, %v2471
      %v2473 = vpop.f32.mrf.mxu0
      %2474 = vmatprep.mubr.bf16.mxu0 0
      %2475 = vmatmul.mubr.bf16.gmra.mxu0 %v2381
      %v2476 = vpop.f32.mrf.mxu0
      %v2477 = vadd.f32 0.0, %v2476
      %v2478 = vpop.f32.mrf.mxu0
      %v2479 = vpop.f32.mrf.mxu0
      %v2480 = vadd.f32 0.0, %v2479
      %v2481 = vpop.f32.mrf.mxu0
      %2482 = vmatprep.mubr.bf16.mxu0 0
      %2483 = vmatmul.mubr.bf16.gmra.mxu0 %v2384
      %v2484 = vpop.f32.mrf.mxu0
      %v2485 = vadd.f32 0.0, %v2484
      %v2486 = vpop.f32.mrf.mxu0
      %v2487 = vpop.f32.mrf.mxu0
      %v2488 = vadd.f32 0.0, %v2487
      %v2489 = vpop.f32.mrf.mxu0
      %2490 = vmatprep.mubr.bf16.mxu0 0
      %2491 = vmatmul.mubr.bf16.gmra.mxu0 %v2387
      %v2492 = vpop.f32.mrf.mxu0
      %v2493 = vadd.f32 0.0, %v2492
      %v2494 = vpop.f32.mrf.mxu0
      %v2495 = vpop.f32.mrf.mxu0
      %v2496 = vadd.f32 0.0, %v2495
      %v2497 = vpop.f32.mrf.mxu0
      %2498 = vmatprep.mubr.bf16.mxu0 0
      %2499 = vmatmul.mubr.bf16.gmra.mxu0 %v2390
      %v2500 = vpop.f32.mrf.mxu0
      %v2501 = vadd.f32 0.0, %v2500
      %v2502 = vpop.f32.mrf.mxu0
      %v2503 = vpop.f32.mrf.mxu0
      %v2504 = vadd.f32 0.0, %v2503
      %v2505 = vpop.f32.mrf.mxu0
      %2506 = vmatprep.mubr.bf16.mxu0 0
      %2507 = vmatmul.mubr.bf16.gmra.mxu0 %v2393
      %v2508 = vpop.f32.mrf.mxu0
      %v2509 = vadd.f32 0.0, %v2508
      %v2510 = vpop.f32.mrf.mxu0
      %v2511 = vpop.f32.mrf.mxu0
      %v2512 = vadd.f32 0.0, %v2511
      %v2513 = vpop.f32.mrf.mxu0
      %2514 = vmatprep.mubr.bf16.mxu0 0
      %2515 = vmatmul.mubr.bf16.gmra.mxu0 %v2396
      %v2516 = vpop.f32.mrf.mxu0
      %v2517 = vadd.f32 0.0, %v2516
      %v2518 = vpop.f32.mrf.mxu0
      %v2519 = vpop.f32.mrf.mxu0
      %v2520 = vadd.f32 0.0, %v2519
      %v2521 = vpop.f32.mrf.mxu0
      %2522 = vmatprep.mubr.bf16.mxu0 0
      %2523 = vmatmul.mubr.bf16.gmra.mxu0 %v2399
      %v2524 = vpop.f32.mrf.mxu0
      %v2525 = vadd.f32 0.0, %v2524
      %v2526 = vpop.f32.mrf.mxu0
      %v2527 = vpop.f32.mrf.mxu0
      %v2528 = vadd.f32 0.0, %v2527
      %v2529 = vpop.f32.mrf.mxu0
      %2530 = vmatprep.mubr.bf16.mxu0 0
      %2531 = vmatmul.mubr.bf16.gmra.mxu0 %v2402
      %v2532 = vpop.f32.mrf.mxu0
      %v2533 = vadd.f32 0.0, %v2532
      %v2534 = vpop.f32.mrf.mxu0
      %v2535 = vpop.f32.mrf.mxu0
      %v2536 = vadd.f32 0.0, %v2535
      %v2537 = vpop.f32.mrf.mxu0
      %2538 = vmatprep.mubr.bf16.mxu0 0
      %2539 = vmatmul.mubr.bf16.gmra.mxu0 %v2405
      %v2540 = vpop.f32.mrf.mxu0
      %v2541 = vadd.f32 0.0, %v2540
      %v2542 = vpop.f32.mrf.mxu0
      %v2543 = vpop.f32.mrf.mxu0
      %v2544 = vadd.f32 0.0, %v2543
      %v2545 = vpop.f32.mrf.mxu0
      %2546 = vmatprep.mubr.bf16.mxu0 0
      %2547 = vmatmul.mubr.bf16.gmra.mxu0 %v2408
      %v2548 = vpop.f32.mrf.mxu0
      %v2549 = vadd.f32 0.0, %v2548
      %v2550 = vpop.f32.mrf.mxu0
      %v2551 = vpop.f32.mrf.mxu0
      %v2552 = vadd.f32 0.0, %v2551
      %v2553 = vpop.f32.mrf.mxu0
      %2554 = vmatprep.mubr.bf16.mxu0 0
      %2555 = vmatmul.mubr.bf16.gmra.mxu0 %v2411
      %v2556 = vpop.f32.mrf.mxu0
      %v2557 = vadd.f32 0.0, %v2556
      %v2558 = vpop.f32.mrf.mxu0
      %v2559 = vpop.f32.mrf.mxu0
      %v2560 = vadd.f32 0.0, %v2559
      %v2561 = vpop.f32.mrf.mxu0
      %2562 = vmatprep.mubr.bf16.mxu0 0
      %2563 = vmatmul.mubr.bf16.gmra.mxu0 %v2414
      %v2564 = vpop.f32.mrf.mxu0
      %v2565 = vadd.f32 0.0, %v2564
      %v2566 = vpop.f32.mrf.mxu0
      %v2567 = vpop.f32.mrf.mxu0
      %v2568 = vadd.f32 0.0, %v2567
      %v2569 = vpop.f32.mrf.mxu0
      %2570 = vmatprep.mubr.bf16.mxu0 0
      %2571 = vmatmul.mubr.bf16.gmra.mxu0 %v2417
      %v2572 = vpop.f32.mrf.mxu0
      %v2573 = vadd.f32 0.0, %v2572
      %v2574 = vpop.f32.mrf.mxu0
      %v2575 = vpop.f32.mrf.mxu0
      %v2576 = vadd.f32 0.0, %v2575
      %v2577 = vpop.f32.mrf.mxu0
      %2578 = vmatprep.mubr.bf16.mxu0 0
      %2579 = vmatmul.mubr.bf16.gmra.mxu0 %v2420
      %v2580 = vpop.f32.mrf.mxu0
      %v2581 = vadd.f32 0.0, %v2580
      %v2582 = vpop.f32.mrf.mxu0
      %v2583 = vpop.f32.mrf.mxu0
      %v2584 = vadd.f32 0.0, %v2583
      %v2585 = vpop.f32.mrf.mxu0
      %2586 = vmatprep.mubr.bf16.mxu0 0
      %2587 = vmatmul.mubr.bf16.gmra.mxu0 %v2423
      %v2588 = vpop.f32.mrf.mxu0
      %v2589 = vadd.f32 0.0, %v2588
      %v2590 = vpop.f32.mrf.mxu0
      %v2591 = vpop.f32.mrf.mxu0
      %v2592 = vadd.f32 0.0, %v2591
      %v2593 = vpop.f32.mrf.mxu0
      %2594 = vmatprep.mubr.bf16.mxu0 0
      %2595 = vmatmul.mubr.bf16.gmra.mxu0 %v2426
      %v2596 = vpop.f32.mrf.mxu0
      %v2597 = vadd.f32 0.0, %v2596
      %v2598 = vpop.f32.mrf.mxu0
      %v2599 = vpop.f32.mrf.mxu0
      %v2600 = vadd.f32 0.0, %v2599
      %v2601 = vpop.f32.mrf.mxu0
      %2602 = vmatprep.mubr.bf16.mxu0 0
      %2603 = vmatmul.mubr.bf16.gmra.mxu0 %v2429
      %v2604 = vpop.f32.mrf.mxu0
      %v2605 = vadd.f32 0.0, %v2604
      %v2606 = vpop.f32.mrf.mxu0
      %v2607 = vpop.f32.mrf.mxu0
      %v2608 = vadd.f32 0.0, %v2607
      %v2609 = vpop.f32.mrf.mxu0
      %2610 = vdwg.mxu0
      %v2611 = vadd.f32 %v2297, %v2469
      %v2612 = vadd.f32 %v2298, %v2472
      %v2613 = vadd.f32 %v2299, %v2477
      %v2614 = vadd.f32 %v2300, %v2480
      %v2615 = vadd.f32 %v2301, %v2485
      %v2616 = vadd.f32 %v2302, %v2488
      %v2617 = vadd.f32 %v2303, %v2493
      %v2618 = vadd.f32 %v2304, %v2496
      %v2619 = vadd.f32 %v2305, %v2501
      %v2620 = vadd.f32 %v2306, %v2504
      %v2621 = vadd.f32 %v2307, %v2509
      %v2622 = vadd.f32 %v2308, %v2512
      %v2623 = vadd.f32 %v2309, %v2517
      %v2624 = vadd.f32 %v2310, %v2520
      %v2625 = vadd.f32 %v2311, %v2525
      %v2626 = vadd.f32 %v2312, %v2528
      %v2627 = vadd.f32 %v2313, %v2533
      %v2628 = vadd.f32 %v2314, %v2536
      %v2629 = vadd.f32 %v2315, %v2541
      %v2630 = vadd.f32 %v2316, %v2544
      %v2631 = vadd.f32 %v2317, %v2549
      %v2632 = vadd.f32 %v2318, %v2552
      %v2633 = vadd.f32 %v2319, %v2557
      %v2634 = vadd.f32 %v2320, %v2560
      %v2635 = vadd.f32 %v2321, %v2565
      %v2636 = vadd.f32 %v2322, %v2568
      %v2637 = vadd.f32 %v2323, %v2573
      %v2638 = vadd.f32 %v2324, %v2576
      %v2639 = vadd.f32 %v2325, %v2581
      %v2640 = vadd.f32 %v2326, %v2584
      %v2641 = vadd.f32 %v2327, %v2589
      %v2642 = vadd.f32 %v2328, %v2592
      %v2643 = vadd.f32 %v2329, %v2597
      %v2644 = vadd.f32 %v2330, %v2600
      %v2645 = vadd.f32 %v2331, %v2605
      %v2646 = vadd.f32 %v2332, %v2608
      %v2647 = vld [vmem:[#allocation2 + $0x10] sm:$0xc]
      %v2648 = vld [vmem:[#allocation2 + $0x14] sm:$0xf]
      %v2649 = vld [vmem:[#allocation2 + $0x18] sm:$0xf]
      %v2650 = vld [vmem:[#allocation2 + $0x1c] sm:$0xf]
      %v2651 = vld [vmem:[#allocation2 + $0x20] sm:$0xf]
      %v2652 = vld [vmem:[#allocation2 + $0x24] sm:$0xf]
      %v2653 = vld [vmem:[#allocation2 + $0x28] sm:$0xf]
      %v2654 = vld [vmem:[#allocation2 + $0x2c] sm:$0xf]
      %v2655 = vld [vmem:[#allocation2 + $0x30] sm:$0xf]
      %v2656 = vld [vmem:[#allocation2 + $0x34] sm:$0xf]
      %v2657 = vld [vmem:[#allocation2 + $0x38] sm:$0xf]
      %v2658 = vld [vmem:[#allocation2 + $0x3c] sm:$0xf]
      %v2659 = vld [vmem:[#allocation2 + $0x40] sm:$0xf]
      %v2660 = vld [vmem:[#allocation2 + $0x44] sm:$0xf]
      %v2661 = vld [vmem:[#allocation2 + $0x48] sm:$0xf]
      %v2662 = vld [vmem:[#allocation2 + $0x4c] sm:$0xf]
      %v2663 = vld [vmem:[#allocation2 + $0x50] sm:$0xf]
      %v2664 = vld [vmem:[#allocation2 + $0x54] sm:$0xf]
      %v2665 = vld [vmem:[#allocation2 + $0x58] sm:$0xf]
      %v2666 = vld [vmem:[#allocation2 + $0x5c] sm:$0xf]
      %v2667 = vld [vmem:[#allocation2 + $0x60] sm:$0xf]
      %v2668 = vld [vmem:[#allocation2 + $0x64] sm:$0xf]
      %v2669 = vld [vmem:[#allocation2 + $0x68] sm:$0xf]
      %v2670 = vld [vmem:[#allocation2 + $0x6c] sm:$0xf]
      %v2671 = vld [vmem:[#allocation2 + $0x70] sm:$0xf]
      %v2672 = vld [vmem:[#allocation2 + $0x74] sm:$0xf]
      %v2673 = vld [vmem:[#allocation2 + $0x78] sm:$0xf]
      %v2674 = vld [vmem:[#allocation2 + $0x7c] sm:$0xf]
      %v2675 = vld [vmem:[#allocation2 + $0x80] sm:$0xf]
      %v2676 = vld [vmem:[#allocation2 + $0x84] sm:$0xf]
      %v2677 = vld [vmem:[#allocation2 + $0x88] sm:$0xf]
      %v2678 = vld [vmem:[#allocation2 + $0x8c] sm:$0xf]
      %v2679 = vld [vmem:[#allocation2 + $0x90] sm:$0xf]
      %v2680 = vld [vmem:[#allocation2 + $0x94] sm:$0xf]
      %v2681 = vld [vmem:[#allocation2 + $0x98] sm:$0xf]
      %v2682 = vld [vmem:[#allocation2 + $0x9c] sm:$0xf]
      %v2683 = vld [vmem:[#allocation2 + $0xa0] sm:$0x3]
      %s2684 = scalar_lea.vmem %s2, 12
      %v2685 = vld [vmem:[%s2684] sm:$0x3]
      %v2723 = vunpack.c.l.b16 %v2647
      %v2724 = vunpack.c.l.b16 %v2648
      %v2725 = vunpack.c.l.b16 %v2649
      %v2726 = vunpack.c.l.b16 %v2650
      %v2727 = vunpack.c.l.b16 %v2651
      %v2728 = vunpack.c.l.b16 %v2652
      %v2729 = vunpack.c.l.b16 %v2653
      %v2730 = vunpack.c.l.b16 %v2654
      %v2731 = vunpack.c.l.b16 %v2655
      %v2732 = vunpack.c.l.b16 %v2656
      %v2733 = vunpack.c.l.b16 %v2657
      %v2734 = vunpack.c.l.b16 %v2658
      %v2735 = vunpack.c.l.b16 %v2659
      %v2736 = vunpack.c.l.b16 %v2660
      %v2737 = vunpack.c.l.b16 %v2661
      %v2738 = vunpack.c.l.b16 %v2662
      %v2739 = vunpack.c.l.b16 %v2663
      %v2740 = vunpack.c.l.b16 %v2664
      %v2741 = vunpack.c.l.b16 %v2665
      %v2742 = vunpack.c.l.b16 %v2666
      %v2743 = vunpack.c.l.b16 %v2667
      %v2744 = vunpack.c.l.b16 %v2668
      %v2745 = vunpack.c.l.b16 %v2669
      %v2746 = vunpack.c.l.b16 %v2670
      %v2747 = vunpack.c.l.b16 %v2671
      %v2748 = vunpack.c.l.b16 %v2672
      %v2749 = vunpack.c.l.b16 %v2673
      %v2750 = vunpack.c.l.b16 %v2674
      %v2751 = vunpack.c.l.b16 %v2675
      %v2752 = vunpack.c.l.b16 %v2676
      %v2753 = vunpack.c.l.b16 %v2677
      %v2754 = vunpack.c.l.b16 %v2678
      %v2755 = vunpack.c.l.b16 %v2679
      %v2756 = vunpack.c.l.b16 %v2680
      %v2757 = vunpack.c.l.b16 %v2681
      %v2758 = vunpack.c.l.b16 %v2682
      %v2759 = vunpack.c.l.b16 %v2683
      %v2760 = vpack.c.b16 %v2724, %v2723
      %v2761 = vpack.c.b16 %v2726, %v2725
      %v2762 = vpack.c.b16 %v2728, %v2727
      %v2763 = vpack.c.b16 %v2730, %v2729
      %v2764 = vpack.c.b16 %v2732, %v2731
      %v2765 = vpack.c.b16 %v2734, %v2733
      %v2766 = vpack.c.b16 %v2736, %v2735
      %v2767 = vpack.c.b16 %v2738, %v2737
      %v2768 = vpack.c.b16 %v2740, %v2739
      %v2769 = vpack.c.b16 %v2742, %v2741
      %v2770 = vpack.c.b16 %v2744, %v2743
      %v2771 = vpack.c.b16 %v2746, %v2745
      %v2772 = vpack.c.b16 %v2748, %v2747
      %v2773 = vpack.c.b16 %v2750, %v2749
      %v2774 = vpack.c.b16 %v2752, %v2751
      %v2775 = vpack.c.b16 %v2754, %v2753
      %v2776 = vpack.c.b16 %v2756, %v2755
      %v2777 = vpack.c.b16 %v2758, %v2757
      %v2778 = vpack.c.b16 %v2759, %v2759
      %v2779 = vrot.slane %v2760, 2
      %v2780 = vrot.slane %v2761, 2
      %v2781 = vsel %vm2339, %v2779, %v2780
      %v2782 = vrot.slane %v2762, 2
      %v2783 = vsel %vm2339, %v2780, %v2782
      %v2784 = vrot.slane %v2763, 2
      %v2785 = vsel %vm2339, %v2782, %v2784
      %v2786 = vrot.slane %v2764, 2
      %v2787 = vsel %vm2339, %v2784, %v2786
      %v2788 = vrot.slane %v2765, 2
      %v2789 = vsel %vm2339, %v2786, %v2788
      %v2790 = vrot.slane %v2766, 2
      %v2791 = vsel %vm2339, %v2788, %v2790
      %v2792 = vrot.slane %v2767, 2
      %v2793 = vsel %vm2339, %v2790, %v2792
      %v2794 = vrot.slane %v2768, 2
      %v2795 = vsel %vm2339, %v2792, %v2794
      %v2796 = vrot.slane %v2769, 2
      %v2797 = vsel %vm2339, %v2794, %v2796
      %v2798 = vrot.slane %v2770, 2
      %v2799 = vsel %vm2339, %v2796, %v2798
      %v2800 = vrot.slane %v2771, 2
      %v2801 = vsel %vm2339, %v2798, %v2800
      %v2802 = vrot.slane %v2772, 2
      %v2803 = vsel %vm2339, %v2800, %v2802
      %v2804 = vrot.slane %v2773, 2
      %v2805 = vsel %vm2339, %v2802, %v2804
      %v2806 = vrot.slane %v2774, 2
      %v2807 = vsel %vm2339, %v2804, %v2806
      %v2808 = vrot.slane %v2775, 2
      %v2809 = vsel %vm2339, %v2806, %v2808
      %v2810 = vrot.slane %v2776, 2
      %v2811 = vsel %vm2339, %v2808, %v2810
      %v2812 = vrot.slane %v2777, 2
      %v2813 = vsel %vm2339, %v2810, %v2812
      %v2814 = vrot.slane %v2778, 2
      %v2815 = vsel %vm2339, %v2812, %v2814
      %v2817 = vsel %vm681, %v2781, 0
      %v2820 = vsel %vm681, %v2783, 0
      %v2823 = vsel %vm681, %v2785, 0
      %v2826 = vsel %vm681, %v2787, 0
      %v2829 = vsel %vm681, %v2789, 0
      %v2832 = vsel %vm681, %v2791, 0
      %v2835 = vsel %vm681, %v2793, 0
      %v2838 = vsel %vm681, %v2795, 0
      %v2841 = vsel %vm681, %v2797, 0
      %v2844 = vsel %vm681, %v2799, 0
      %v2847 = vsel %vm681, %v2801, 0
      %v2850 = vsel %vm681, %v2803, 0
      %v2853 = vsel %vm681, %v2805, 0
      %v2856 = vsel %vm681, %v2807, 0
      %v2859 = vsel %vm681, %v2809, 0
      %v2862 = vsel %vm681, %v2811, 0
      %v2865 = vsel %vm681, %v2813, 0
      %v2868 = vsel %vm681, %v2815, 0
      %v2871 = vsel %vm736, %v2685, 0
      %2873 = vmatprep.subr.bf16.mxu0 0
      %2874 = vmatpush1.bf16.msra.mxu0 0
      %2875 = vmatprep.subr.bf16.mxu0 0
      %2876 = vmatpush1.bf16.msra.mxu0 0
      %2877 = vmatprep.subr.bf16.mxu0 0
      %2878 = vmatpush1.bf16.msra.mxu0 0
      %2879 = vmatprep.subr.bf16.mxu0 0
      %2880 = vmatpush1.bf16.msra.mxu0 0
      %2881 = vmatprep.subr.bf16.mxu0 0
      %2882 = vmatpush1.bf16.msra.mxu0 0
      %2883 = vmatprep.subr.bf16.mxu0 0
      %2884 = vmatpush1.bf16.msra.mxu0 0
      %2885 = vmatprep.subr.bf16.mxu0 0
      %2886 = vmatpush1.bf16.msra.mxu0 0
      %2887 = vmatprep.subr.bf16.mxu0 0
      %2888 = vmatpush1.bf16.msra.mxu0 %v2871
      %2889 = vmatprep.subr.bf16.mxu0 0
      %2890 = vmatpush2.bf16.msra.mxu0 0
      %2891 = vmatprep.subr.bf16.mxu0 0
      %2892 = vmatpush2.bf16.msra.mxu0 0
      %2893 = vmatprep.subr.bf16.mxu0 0
      %2894 = vmatpush2.bf16.msra.mxu0 0
      %2895 = vmatprep.subr.bf16.mxu0 0
      %2896 = vmatpush2.bf16.msra.mxu0 0
      %2897 = vmatprep.subr.bf16.mxu0 0
      %2898 = vmatpush2.bf16.msra.mxu0 0
      %2899 = vmatprep.subr.bf16.mxu0 0
      %2900 = vmatpush2.bf16.msra.mxu0 0
      %2901 = vmatprep.subr.bf16.mxu0 0
      %2902 = vmatpush2.bf16.msra.mxu0 0
      %2903 = vmatprep.subr.bf16.mxu0 0
      %2904 = vmatpush2.bf16.msra.mxu0 0
      %2905 = vmatprep.mubr.bf16.mxu0 0
      %2906 = vmatmul.mubr.bf16.gmra.mxu0 %v2817
      %v2907 = vpop.f32.mrf.mxu0
      %v2908 = vadd.f32 0.0, %v2907
      %v2909 = vpop.f32.mrf.mxu0
      %v2910 = vpop.f32.mrf.mxu0
      %v2911 = vadd.f32 0.0, %v2910
      %v2912 = vpop.f32.mrf.mxu0
      %2913 = vmatprep.mubr.bf16.mxu0 0
      %2914 = vmatmul.mubr.bf16.gmra.mxu0 %v2820
      %v2915 = vpop.f32.mrf.mxu0
      %v2916 = vadd.f32 0.0, %v2915
      %v2917 = vpop.f32.mrf.mxu0
      %v2918 = vpop.f32.mrf.mxu0
      %v2919 = vadd.f32 0.0, %v2918
      %v2920 = vpop.f32.mrf.mxu0
      %2921 = vmatprep.mubr.bf16.mxu0 0
      %2922 = vmatmul.mubr.bf16.gmra.mxu0 %v2823
      %v2923 = vpop.f32.mrf.mxu0
      %v2924 = vadd.f32 0.0, %v2923
      %v2925 = vpop.f32.mrf.mxu0
      %v2926 = vpop.f32.mrf.mxu0
      %v2927 = vadd.f32 0.0, %v2926
      %v2928 = vpop.f32.mrf.mxu0
      %2929 = vmatprep.mubr.bf16.mxu0 0
      %2930 = vmatmul.mubr.bf16.gmra.mxu0 %v2826
      %v2931 = vpop.f32.mrf.mxu0
      %v2932 = vadd.f32 0.0, %v2931
      %v2933 = vpop.f32.mrf.mxu0
      %v2934 = vpop.f32.mrf.mxu0
      %v2935 = vadd.f32 0.0, %v2934
      %v2936 = vpop.f32.mrf.mxu0
      %2937 = vmatprep.mubr.bf16.mxu0 0
      %2938 = vmatmul.mubr.bf16.gmra.mxu0 %v2829
      %v2939 = vpop.f32.mrf.mxu0
      %v2940 = vadd.f32 0.0, %v2939
      %v2941 = vpop.f32.mrf.mxu0
      %v2942 = vpop.f32.mrf.mxu0
      %v2943 = vadd.f32 0.0, %v2942
      %v2944 = vpop.f32.mrf.mxu0
      %2945 = vmatprep.mubr.bf16.mxu0 0
      %2946 = vmatmul.mubr.bf16.gmra.mxu0 %v2832
      %v2947 = vpop.f32.mrf.mxu0
      %v2948 = vadd.f32 0.0, %v2947
      %v2949 = vpop.f32.mrf.mxu0
      %v2950 = vpop.f32.mrf.mxu0
      %v2951 = vadd.f32 0.0, %v2950
      %v2952 = vpop.f32.mrf.mxu0
      %2953 = vmatprep.mubr.bf16.mxu0 0
      %2954 = vmatmul.mubr.bf16.gmra.mxu0 %v2835
      %v2955 = vpop.f32.mrf.mxu0
      %v2956 = vadd.f32 0.0, %v2955
      %v2957 = vpop.f32.mrf.mxu0
      %v2958 = vpop.f32.mrf.mxu0
      %v2959 = vadd.f32 0.0, %v2958
      %v2960 = vpop.f32.mrf.mxu0
      %2961 = vmatprep.mubr.bf16.mxu0 0
      %2962 = vmatmul.mubr.bf16.gmra.mxu0 %v2838
      %v2963 = vpop.f32.mrf.mxu0
      %v2964 = vadd.f32 0.0, %v2963
      %v2965 = vpop.f32.mrf.mxu0
      %v2966 = vpop.f32.mrf.mxu0
      %v2967 = vadd.f32 0.0, %v2966
      %v2968 = vpop.f32.mrf.mxu0
      %2969 = vmatprep.mubr.bf16.mxu0 0
      %2970 = vmatmul.mubr.bf16.gmra.mxu0 %v2841
      %v2971 = vpop.f32.mrf.mxu0
      %v2972 = vadd.f32 0.0, %v2971
      %v2973 = vpop.f32.mrf.mxu0
      %v2974 = vpop.f32.mrf.mxu0
      %v2975 = vadd.f32 0.0, %v2974
      %v2976 = vpop.f32.mrf.mxu0
      %2977 = vmatprep.mubr.bf16.mxu0 0
      %2978 = vmatmul.mubr.bf16.gmra.mxu0 %v2844
      %v2979 = vpop.f32.mrf.mxu0
      %v2980 = vadd.f32 0.0, %v2979
      %v2981 = vpop.f32.mrf.mxu0
      %v2982 = vpop.f32.mrf.mxu0
      %v2983 = vadd.f32 0.0, %v2982
      %v2984 = vpop.f32.mrf.mxu0
      %2985 = vmatprep.mubr.bf16.mxu0 0
      %2986 = vmatmul.mubr.bf16.gmra.mxu0 %v2847
      %v2987 = vpop.f32.mrf.mxu0
      %v2988 = vadd.f32 0.0, %v2987
      %v2989 = vpop.f32.mrf.mxu0
      %v2990 = vpop.f32.mrf.mxu0
      %v2991 = vadd.f32 0.0, %v2990
      %v2992 = vpop.f32.mrf.mxu0
      %2993 = vmatprep.mubr.bf16.mxu0 0
      %2994 = vmatmul.mubr.bf16.gmra.mxu0 %v2850
      %v2995 = vpop.f32.mrf.mxu0
      %v2996 = vadd.f32 0.0, %v2995
      %v2997 = vpop.f32.mrf.mxu0
      %v2998 = vpop.f32.mrf.mxu0
      %v2999 = vadd.f32 0.0, %v2998
      %v3000 = vpop.f32.mrf.mxu0
      %3001 = vmatprep.mubr.bf16.mxu0 0
      %3002 = vmatmul.mubr.bf16.gmra.mxu0 %v2853
      %v3003 = vpop.f32.mrf.mxu0
      %v3004 = vadd.f32 0.0, %v3003
      %v3005 = vpop.f32.mrf.mxu0
      %v3006 = vpop.f32.mrf.mxu0
      %v3007 = vadd.f32 0.0, %v3006
      %v3008 = vpop.f32.mrf.mxu0
      %3009 = vmatprep.mubr.bf16.mxu0 0
      %3010 = vmatmul.mubr.bf16.gmra.mxu0 %v2856
      %v3011 = vpop.f32.mrf.mxu0
      %v3012 = vadd.f32 0.0, %v3011
      %v3013 = vpop.f32.mrf.mxu0
      %v3014 = vpop.f32.mrf.mxu0
      %v3015 = vadd.f32 0.0, %v3014
      %v3016 = vpop.f32.mrf.mxu0
      %3017 = vmatprep.mubr.bf16.mxu0 0
      %3018 = vmatmul.mubr.bf16.gmra.mxu0 %v2859
      %v3019 = vpop.f32.mrf.mxu0
      %v3020 = vadd.f32 0.0, %v3019
      %v3021 = vpop.f32.mrf.mxu0
      %v3022 = vpop.f32.mrf.mxu0
      %v3023 = vadd.f32 0.0, %v3022
      %v3024 = vpop.f32.mrf.mxu0
      %3025 = vmatprep.mubr.bf16.mxu0 0
      %3026 = vmatmul.mubr.bf16.gmra.mxu0 %v2862
      %v3027 = vpop.f32.mrf.mxu0
      %v3028 = vadd.f32 0.0, %v3027
      %v3029 = vpop.f32.mrf.mxu0
      %v3030 = vpop.f32.mrf.mxu0
      %v3031 = vadd.f32 0.0, %v3030
      %v3032 = vpop.f32.mrf.mxu0
      %3033 = vmatprep.mubr.bf16.mxu0 0
      %3034 = vmatmul.mubr.bf16.gmra.mxu0 %v2865
      %v3035 = vpop.f32.mrf.mxu0
      %v3036 = vadd.f32 0.0, %v3035
      %v3037 = vpop.f32.mrf.mxu0
      %v3038 = vpop.f32.mrf.mxu0
      %v3039 = vadd.f32 0.0, %v3038
      %v3040 = vpop.f32.mrf.mxu0
      %3041 = vmatprep.mubr.bf16.mxu0 0
      %3042 = vmatmul.mubr.bf16.gmra.mxu0 %v2868
      %v3043 = vpop.f32.mrf.mxu0
      %v3044 = vadd.f32 0.0, %v3043
      %v3045 = vpop.f32.mrf.mxu0
      %v3046 = vpop.f32.mrf.mxu0
      %v3047 = vadd.f32 0.0, %v3046
      %v3048 = vpop.f32.mrf.mxu0
      %3049 = vdwg.mxu0
      %v3050 = vadd.f32 %v2611, %v2908
      %v3051 = vadd.f32 %v2612, %v2911
      %v3052 = vadd.f32 %v2613, %v2916
      %v3053 = vadd.f32 %v2614, %v2919
      %v3054 = vadd.f32 %v2615, %v2924
      %v3055 = vadd.f32 %v2616, %v2927
      %v3056 = vadd.f32 %v2617, %v2932
      %v3057 = vadd.f32 %v2618, %v2935
      %v3058 = vadd.f32 %v2619, %v2940
      %v3059 = vadd.f32 %v2620, %v2943
      %v3060 = vadd.f32 %v2621, %v2948
      %v3061 = vadd.f32 %v2622, %v2951
      %v3062 = vadd.f32 %v2623, %v2956
      %v3063 = vadd.f32 %v2624, %v2959
      %v3064 = vadd.f32 %v2625, %v2964
      %v3065 = vadd.f32 %v2626, %v2967
      %v3066 = vadd.f32 %v2627, %v2972
      %v3067 = vadd.f32 %v2628, %v2975
      %v3068 = vadd.f32 %v2629, %v2980
      %v3069 = vadd.f32 %v2630, %v2983
      %v3070 = vadd.f32 %v2631, %v2988
      %v3071 = vadd.f32 %v2632, %v2991
      %v3072 = vadd.f32 %v2633, %v2996
      %v3073 = vadd.f32 %v2634, %v2999
      %v3074 = vadd.f32 %v2635, %v3004
      %v3075 = vadd.f32 %v2636, %v3007
      %v3076 = vadd.f32 %v2637, %v3012
      %v3077 = vadd.f32 %v2638, %v3015
      %v3078 = vadd.f32 %v2639, %v3020
      %v3079 = vadd.f32 %v2640, %v3023
      %v3080 = vadd.f32 %v2641, %v3028
      %v3081 = vadd.f32 %v2642, %v3031
      %v3082 = vadd.f32 %v2643, %v3036
      %v3083 = vadd.f32 %v2644, %v3039
      %v3084 = vadd.f32 %v2645, %v3044
      %v3085 = vadd.f32 %v2646, %v3047
      %v3086 = vld [vmem:[#allocation2 + $0xa0] sm:$0x7]
      %s3087 = scalar_lea.vmem %s2, 14
      %v3088 = vld [vmem:[%s3087] sm:$0x3]
      %v3090 = vunpack.c.l.b16 %v3086
      %v3091 = vpack.c.b16 %v3090, %v3090
      %vm3092 = vsmask.f32 5376
      %v3094 = vshrl.u32 %v2760, 16
      %v3096 = vrot.slane %v3094, 2
      %v3097 = vshll.u32 %v2760, 16
      %v3099 = vrot.slane %v3097, 3
      %v3100 = vor.u32 %v3096, %v3099
      %v3102 = vshrl.u32 %v2761, 16
      %v3104 = vrot.slane %v3102, 2
      %v3105 = vshll.u32 %v2761, 16
      %v3107 = vrot.slane %v3105, 3
      %v3108 = vor.u32 %v3104, %v3107
      %v3109 = vsel %vm3092, %v3100, %v3108
      %v3111 = vshrl.u32 %v2762, 16
      %v3113 = vrot.slane %v3111, 2
      %v3114 = vshll.u32 %v2762, 16
      %v3116 = vrot.slane %v3114, 3
      %v3117 = vor.u32 %v3113, %v3116
      %v3118 = vsel %vm3092, %v3108, %v3117
      %v3120 = vshrl.u32 %v2763, 16
      %v3122 = vrot.slane %v3120, 2
      %v3123 = vshll.u32 %v2763, 16
      %v3125 = vrot.slane %v3123, 3
      %v3126 = vor.u32 %v3122, %v3125
      %v3127 = vsel %vm3092, %v3117, %v3126
      %v3129 = vshrl.u32 %v2764, 16
      %v3131 = vrot.slane %v3129, 2
      %v3132 = vshll.u32 %v2764, 16
      %v3134 = vrot.slane %v3132, 3
      %v3135 = vor.u32 %v3131, %v3134
      %v3136 = vsel %vm3092, %v3126, %v3135
      %v3138 = vshrl.u32 %v2765, 16
      %v3140 = vrot.slane %v3138, 2
      %v3141 = vshll.u32 %v2765, 16
      %v3143 = vrot.slane %v3141, 3
      %v3144 = vor.u32 %v3140, %v3143
      %v3145 = vsel %vm3092, %v3135, %v3144
      %v3147 = vshrl.u32 %v2766, 16
      %v3149 = vrot.slane %v3147, 2
      %v3150 = vshll.u32 %v2766, 16
      %v3152 = vrot.slane %v3150, 3
      %v3153 = vor.u32 %v3149, %v3152
      %v3154 = vsel %vm3092, %v3144, %v3153
      %v3156 = vshrl.u32 %v2767, 16
      %v3158 = vrot.slane %v3156, 2
      %v3159 = vshll.u32 %v2767, 16
      %v3161 = vrot.slane %v3159, 3
      %v3162 = vor.u32 %v3158, %v3161
      %v3163 = vsel %vm3092, %v3153, %v3162
      %v3165 = vshrl.u32 %v2768, 16
      %v3167 = vrot.slane %v3165, 2
      %v3168 = vshll.u32 %v2768, 16
      %v3170 = vrot.slane %v3168, 3
      %v3171 = vor.u32 %v3167, %v3170
      %v3172 = vsel %vm3092, %v3162, %v3171
      %v3174 = vshrl.u32 %v2769, 16
      %v3176 = vrot.slane %v3174, 2
      %v3177 = vshll.u32 %v2769, 16
      %v3179 = vrot.slane %v3177, 3
      %v3180 = vor.u32 %v3176, %v3179
      %v3181 = vsel %vm3092, %v3171, %v3180
      %v3183 = vshrl.u32 %v2770, 16
      %v3185 = vrot.slane %v3183, 2
      %v3186 = vshll.u32 %v2770, 16
      %v3188 = vrot.slane %v3186, 3
      %v3189 = vor.u32 %v3185, %v3188
      %v3190 = vsel %vm3092, %v3180, %v3189
      %v3192 = vshrl.u32 %v2771, 16
      %v3194 = vrot.slane %v3192, 2
      %v3195 = vshll.u32 %v2771, 16
      %v3197 = vrot.slane %v3195, 3
      %v3198 = vor.u32 %v3194, %v3197
      %v3199 = vsel %vm3092, %v3189, %v3198
      %v3201 = vshrl.u32 %v2772, 16
      %v3203 = vrot.slane %v3201, 2
      %v3204 = vshll.u32 %v2772, 16
      %v3206 = vrot.slane %v3204, 3
      %v3207 = vor.u32 %v3203, %v3206
      %v3208 = vsel %vm3092, %v3198, %v3207
      %v3210 = vshrl.u32 %v2773, 16
      %v3212 = vrot.slane %v3210, 2
      %v3213 = vshll.u32 %v2773, 16
      %v3215 = vrot.slane %v3213, 3
      %v3216 = vor.u32 %v3212, %v3215
      %v3217 = vsel %vm3092, %v3207, %v3216
      %v3219 = vshrl.u32 %v2774, 16
      %v3221 = vrot.slane %v3219, 2
      %v3222 = vshll.u32 %v2774, 16
      %v3224 = vrot.slane %v3222, 3
      %v3225 = vor.u32 %v3221, %v3224
      %v3226 = vsel %vm3092, %v3216, %v3225
      %v3228 = vshrl.u32 %v2775, 16
      %v3230 = vrot.slane %v3228, 2
      %v3231 = vshll.u32 %v2775, 16
      %v3233 = vrot.slane %v3231, 3
      %v3234 = vor.u32 %v3230, %v3233
      %v3235 = vsel %vm3092, %v3225, %v3234
      %v3237 = vshrl.u32 %v2776, 16
      %v3239 = vrot.slane %v3237, 2
      %v3240 = vshll.u32 %v2776, 16
      %v3242 = vrot.slane %v3240, 3
      %v3243 = vor.u32 %v3239, %v3242
      %v3244 = vsel %vm3092, %v3234, %v3243
      %v3246 = vshrl.u32 %v2777, 16
      %v3248 = vrot.slane %v3246, 2
      %v3249 = vshll.u32 %v2777, 16
      %v3251 = vrot.slane %v3249, 3
      %v3252 = vor.u32 %v3248, %v3251
      %v3253 = vsel %vm3092, %v3243, %v3252
      %v3255 = vshrl.u32 %v3091, 16
      %v3257 = vrot.slane %v3255, 2
      %v3258 = vshll.u32 %v3091, 16
      %v3260 = vrot.slane %v3258, 3
      %v3261 = vor.u32 %v3257, %v3260
      %v3262 = vsel %vm3092, %v3252, %v3261
      %v3264 = vsel %vm681, %v3109, 0
      %v3267 = vsel %vm681, %v3118, 0
      %v3270 = vsel %vm681, %v3127, 0
      %v3273 = vsel %vm681, %v3136, 0
      %v3276 = vsel %vm681, %v3145, 0
      %v3279 = vsel %vm681, %v3154, 0
      %v3282 = vsel %vm681, %v3163, 0
      %v3285 = vsel %vm681, %v3172, 0
      %v3288 = vsel %vm681, %v3181, 0
      %v3291 = vsel %vm681, %v3190, 0
      %v3294 = vsel %vm681, %v3199, 0
      %v3297 = vsel %vm681, %v3208, 0
      %v3300 = vsel %vm681, %v3217, 0
      %v3303 = vsel %vm681, %v3226, 0
      %v3306 = vsel %vm681, %v3235, 0
      %v3309 = vsel %vm681, %v3244, 0
      %v3312 = vsel %vm681, %v3253, 0
      %v3315 = vsel %vm681, %v3262, 0
      %v3318 = vsel %vm736, %v3088, 0
      %3320 = vmatprep.subr.bf16.mxu0 0
      %3321 = vmatpush1.bf16.msra.mxu0 0
      %3322 = vmatprep.subr.bf16.mxu0 0
      %3323 = vmatpush1.bf16.msra.mxu0 0
      %3324 = vmatprep.subr.bf16.mxu0 0
      %3325 = vmatpush1.bf16.msra.mxu0 0
      %3326 = vmatprep.subr.bf16.mxu0 0
      %3327 = vmatpush1.bf16.msra.mxu0 0
      %3328 = vmatprep.subr.bf16.mxu0 0
      %3329 = vmatpush1.bf16.msra.mxu0 0
      %3330 = vmatprep.subr.bf16.mxu0 0
      %3331 = vmatpush1.bf16.msra.mxu0 0
      %3332 = vmatprep.subr.bf16.mxu0 0
      %3333 = vmatpush1.bf16.msra.mxu0 0
      %3334 = vmatprep.subr.bf16.mxu0 0
      %3335 = vmatpush1.bf16.msra.mxu0 %v3318
      %3336 = vmatprep.subr.bf16.mxu0 0
      %3337 = vmatpush2.bf16.msra.mxu0 0
      %3338 = vmatprep.subr.bf16.mxu0 0
      %3339 = vmatpush2.bf16.msra.mxu0 0
      %3340 = vmatprep.subr.bf16.mxu0 0
      %3341 = vmatpush2.bf16.msra.mxu0 0
      %3342 = vmatprep.subr.bf16.mxu0 0
      %3343 = vmatpush2.bf16.msra.mxu0 0
      %3344 = vmatprep.subr.bf16.mxu0 0
      %3345 = vmatpush2.bf16.msra.mxu0 0
      %3346 = vmatprep.subr.bf16.mxu0 0
      %3347 = vmatpush2.bf16.msra.mxu0 0
      %3348 = vmatprep.subr.bf16.mxu0 0
      %3349 = vmatpush2.bf16.msra.mxu0 0
      %3350 = vmatprep.subr.bf16.mxu0 0
      %3351 = vmatpush2.bf16.msra.mxu0 0
      %3352 = vmatprep.mubr.bf16.mxu0 0
      %3353 = vmatmul.mubr.bf16.gmra.mxu0 %v3264
      %v3354 = vpop.f32.mrf.mxu0
      %v3355 = vadd.f32 0.0, %v3354
      %v3356 = vpop.f32.mrf.mxu0
      %v3357 = vpop.f32.mrf.mxu0
      %v3358 = vadd.f32 0.0, %v3357
      %v3359 = vpop.f32.mrf.mxu0
      %3360 = vmatprep.mubr.bf16.mxu0 0
      %3361 = vmatmul.mubr.bf16.gmra.mxu0 %v3267
      %v3362 = vpop.f32.mrf.mxu0
      %v3363 = vadd.f32 0.0, %v3362
      %v3364 = vpop.f32.mrf.mxu0
      %v3365 = vpop.f32.mrf.mxu0
      %v3366 = vadd.f32 0.0, %v3365
      %v3367 = vpop.f32.mrf.mxu0
      %3368 = vmatprep.mubr.bf16.mxu0 0
      %3369 = vmatmul.mubr.bf16.gmra.mxu0 %v3270
      %v3370 = vpop.f32.mrf.mxu0
      %v3371 = vadd.f32 0.0, %v3370
      %v3372 = vpop.f32.mrf.mxu0
      %v3373 = vpop.f32.mrf.mxu0
      %v3374 = vadd.f32 0.0, %v3373
      %v3375 = vpop.f32.mrf.mxu0
      %3376 = vmatprep.mubr.bf16.mxu0 0
      %3377 = vmatmul.mubr.bf16.gmra.mxu0 %v3273
      %v3378 = vpop.f32.mrf.mxu0
      %v3379 = vadd.f32 0.0, %v3378
      %v3380 = vpop.f32.mrf.mxu0
      %v3381 = vpop.f32.mrf.mxu0
      %v3382 = vadd.f32 0.0, %v3381
      %v3383 = vpop.f32.mrf.mxu0
      %3384 = vmatprep.mubr.bf16.mxu0 0
      %3385 = vmatmul.mubr.bf16.gmra.mxu0 %v3276
      %v3386 = vpop.f32.mrf.mxu0
      %v3387 = vadd.f32 0.0, %v3386
      %v3388 = vpop.f32.mrf.mxu0
      %v3389 = vpop.f32.mrf.mxu0
      %v3390 = vadd.f32 0.0, %v3389
      %v3391 = vpop.f32.mrf.mxu0
      %3392 = vmatprep.mubr.bf16.mxu0 0
      %3393 = vmatmul.mubr.bf16.gmra.mxu0 %v3279
      %v3394 = vpop.f32.mrf.mxu0
      %v3395 = vadd.f32 0.0, %v3394
      %v3396 = vpop.f32.mrf.mxu0
      %v3397 = vpop.f32.mrf.mxu0
      %v3398 = vadd.f32 0.0, %v3397
      %v3399 = vpop.f32.mrf.mxu0
      %3400 = vmatprep.mubr.bf16.mxu0 0
      %3401 = vmatmul.mubr.bf16.gmra.mxu0 %v3282
      %v3402 = vpop.f32.mrf.mxu0
      %v3403 = vadd.f32 0.0, %v3402
      %v3404 = vpop.f32.mrf.mxu0
      %v3405 = vpop.f32.mrf.mxu0
      %v3406 = vadd.f32 0.0, %v3405
      %v3407 = vpop.f32.mrf.mxu0
      %3408 = vmatprep.mubr.bf16.mxu0 0
      %3409 = vmatmul.mubr.bf16.gmra.mxu0 %v3285
      %v3410 = vpop.f32.mrf.mxu0
      %v3411 = vadd.f32 0.0, %v3410
      %v3412 = vpop.f32.mrf.mxu0
      %v3413 = vpop.f32.mrf.mxu0
      %v3414 = vadd.f32 0.0, %v3413
      %v3415 = vpop.f32.mrf.mxu0
      %3416 = vmatprep.mubr.bf16.mxu0 0
      %3417 = vmatmul.mubr.bf16.gmra.mxu0 %v3288
      %v3418 = vpop.f32.mrf.mxu0
      %v3419 = vadd.f32 0.0, %v3418
      %v3420 = vpop.f32.mrf.mxu0
      %v3421 = vpop.f32.mrf.mxu0
      %v3422 = vadd.f32 0.0, %v3421
      %v3423 = vpop.f32.mrf.mxu0
      %3424 = vmatprep.mubr.bf16.mxu0 0
      %3425 = vmatmul.mubr.bf16.gmra.mxu0 %v3291
      %v3426 = vpop.f32.mrf.mxu0
      %v3427 = vadd.f32 0.0, %v3426
      %v3428 = vpop.f32.mrf.mxu0
      %v3429 = vpop.f32.mrf.mxu0
      %v3430 = vadd.f32 0.0, %v3429
      %v3431 = vpop.f32.mrf.mxu0
      %3432 = vmatprep.mubr.bf16.mxu0 0
      %3433 = vmatmul.mubr.bf16.gmra.mxu0 %v3294
      %v3434 = vpop.f32.mrf.mxu0
      %v3435 = vadd.f32 0.0, %v3434
      %v3436 = vpop.f32.mrf.mxu0
      %v3437 = vpop.f32.mrf.mxu0
      %v3438 = vadd.f32 0.0, %v3437
      %v3439 = vpop.f32.mrf.mxu0
      %3440 = vmatprep.mubr.bf16.mxu0 0
      %3441 = vmatmul.mubr.bf16.gmra.mxu0 %v3297
      %v3442 = vpop.f32.mrf.mxu0
      %v3443 = vadd.f32 0.0, %v3442
      %v3444 = vpop.f32.mrf.mxu0
      %v3445 = vpop.f32.mrf.mxu0
      %v3446 = vadd.f32 0.0, %v3445
      %v3447 = vpop.f32.mrf.mxu0
      %3448 = vmatprep.mubr.bf16.mxu0 0
      %3449 = vmatmul.mubr.bf16.gmra.mxu0 %v3300
      %v3450 = vpop.f32.mrf.mxu0
      %v3451 = vadd.f32 0.0, %v3450
      %v3452 = vpop.f32.mrf.mxu0
      %v3453 = vpop.f32.mrf.mxu0
      %v3454 = vadd.f32 0.0, %v3453
      %v3455 = vpop.f32.mrf.mxu0
      %3456 = vmatprep.mubr.bf16.mxu0 0
      %3457 = vmatmul.mubr.bf16.gmra.mxu0 %v3303
      %v3458 = vpop.f32.mrf.mxu0
      %v3459 = vadd.f32 0.0, %v3458
      %v3460 = vpop.f32.mrf.mxu0
      %v3461 = vpop.f32.mrf.mxu0
      %v3462 = vadd.f32 0.0, %v3461
      %v3463 = vpop.f32.mrf.mxu0
      %3464 = vmatprep.mubr.bf16.mxu0 0
      %3465 = vmatmul.mubr.bf16.gmra.mxu0 %v3306
      %v3466 = vpop.f32.mrf.mxu0
      %v3467 = vadd.f32 0.0, %v3466
      %v3468 = vpop.f32.mrf.mxu0
      %v3469 = vpop.f32.mrf.mxu0
      %v3470 = vadd.f32 0.0, %v3469
      %v3471 = vpop.f32.mrf.mxu0
      %3472 = vmatprep.mubr.bf16.mxu0 0
      %3473 = vmatmul.mubr.bf16.gmra.mxu0 %v3309
      %v3474 = vpop.f32.mrf.mxu0
      %v3475 = vadd.f32 0.0, %v3474
      %v3476 = vpop.f32.mrf.mxu0
      %v3477 = vpop.f32.mrf.mxu0
      %v3478 = vadd.f32 0.0, %v3477
      %v3479 = vpop.f32.mrf.mxu0
      %3480 = vmatprep.mubr.bf16.mxu0 0
      %3481 = vmatmul.mubr.bf16.gmra.mxu0 %v3312
      %v3482 = vpop.f32.mrf.mxu0
      %v3483 = vadd.f32 0.0, %v3482
      %v3484 = vpop.f32.mrf.mxu0
      %v3485 = vpop.f32.mrf.mxu0
      %v3486 = vadd.f32 0.0, %v3485
      %v3487 = vpop.f32.mrf.mxu0
      %3488 = vmatprep.mubr.bf16.mxu0 0
      %3489 = vmatmul.mubr.bf16.gmra.mxu0 %v3315
      %v3490 = vpop.f32.mrf.mxu0
      %v3491 = vadd.f32 0.0, %v3490
      %v3492 = vpop.f32.mrf.mxu0
      %v3493 = vpop.f32.mrf.mxu0
      %v3494 = vadd.f32 0.0, %v3493
      %v3495 = vpop.f32.mrf.mxu0
      %3496 = vdwg.mxu0
      %v3497 = vadd.f32 %v3050, %v3355
      %v3498 = vadd.f32 %v3051, %v3358
      %v3499 = vadd.f32 %v3052, %v3363
      %v3500 = vadd.f32 %v3053, %v3366
      %v3501 = vadd.f32 %v3054, %v3371
      %v3502 = vadd.f32 %v3055, %v3374
      %v3503 = vadd.f32 %v3056, %v3379
      %v3504 = vadd.f32 %v3057, %v3382
      %v3505 = vadd.f32 %v3058, %v3387
      %v3506 = vadd.f32 %v3059, %v3390
      %v3507 = vadd.f32 %v3060, %v3395
      %v3508 = vadd.f32 %v3061, %v3398
      %v3509 = vadd.f32 %v3062, %v3403
      %v3510 = vadd.f32 %v3063, %v3406
      %v3511 = vadd.f32 %v3064, %v3411
      %v3512 = vadd.f32 %v3065, %v3414
      %v3513 = vadd.f32 %v3066, %v3419
      %v3514 = vadd.f32 %v3067, %v3422
      %v3515 = vadd.f32 %v3068, %v3427
      %v3516 = vadd.f32 %v3069, %v3430
      %v3517 = vadd.f32 %v3070, %v3435
      %v3518 = vadd.f32 %v3071, %v3438
      %v3519 = vadd.f32 %v3072, %v3443
      %v3520 = vadd.f32 %v3073, %v3446
      %v3521 = vadd.f32 %v3074, %v3451
      %v3522 = vadd.f32 %v3075, %v3454
      %v3523 = vadd.f32 %v3076, %v3459
      %v3524 = vadd.f32 %v3077, %v3462
      %v3525 = vadd.f32 %v3078, %v3467
      %v3526 = vadd.f32 %v3079, %v3470
      %v3527 = vadd.f32 %v3080, %v3475
      %v3528 = vadd.f32 %v3081, %v3478
      %v3529 = vadd.f32 %v3082, %v3483
      %v3530 = vadd.f32 %v3083, %v3486
      %v3531 = vadd.f32 %v3084, %v3491
      %v3532 = vadd.f32 %v3085, %v3494
      %v3533 = vld [vmem:[#allocation2 + $0x10] sm:$0x8]
      %s3534 = scalar_lea.vmem %s2, 16
      %v3535 = vld [vmem:[%s3534] sm:$0x3]
      %v3537 = vunpack.c.l.b16 %v3533
      %v3538 = vpack.c.b16 %v2724, %v3537
      %vm3539 = vcmask 1044480
      %v3540 = vrot.slane %v3538, 3
      %v3541 = vrot.slane %v2761, 3
      %v3542 = vsel %vm3539, %v3540, %v3541
      %v3543 = vrot.slane %v2762, 3
      %v3544 = vsel %vm3539, %v3541, %v3543
      %v3545 = vrot.slane %v2763, 3
      %v3546 = vsel %vm3539, %v3543, %v3545
      %v3547 = vrot.slane %v2764, 3
      %v3548 = vsel %vm3539, %v3545, %v3547
      %v3549 = vrot.slane %v2765, 3
      %v3550 = vsel %vm3539, %v3547, %v3549
      %v3551 = vrot.slane %v2766, 3
      %v3552 = vsel %vm3539, %v3549, %v3551
      %v3553 = vrot.slane %v2767, 3
      %v3554 = vsel %vm3539, %v3551, %v3553
      %v3555 = vrot.slane %v2768, 3
      %v3556 = vsel %vm3539, %v3553, %v3555
      %v3557 = vrot.slane %v2769, 3
      %v3558 = vsel %vm3539, %v3555, %v3557
      %v3559 = vrot.slane %v2770, 3
      %v3560 = vsel %vm3539, %v3557, %v3559
      %v3561 = vrot.slane %v2771, 3
      %v3562 = vsel %vm3539, %v3559, %v3561
      %v3563 = vrot.slane %v2772, 3
      %v3564 = vsel %vm3539, %v3561, %v3563
      %v3565 = vrot.slane %v2773, 3
      %v3566 = vsel %vm3539, %v3563, %v3565
      %v3567 = vrot.slane %v2774, 3
      %v3568 = vsel %vm3539, %v3565, %v3567
      %v3569 = vrot.slane %v2775, 3
      %v3570 = vsel %vm3539, %v3567, %v3569
      %v3571 = vrot.slane %v2776, 3
      %v3572 = vsel %vm3539, %v3569, %v3571
      %v3573 = vrot.slane %v2777, 3
      %v3574 = vsel %vm3539, %v3571, %v3573
      %v3575 = vrot.slane %v3091, 3
      %v3576 = vsel %vm3539, %v3573, %v3575
      %v3578 = vsel %vm681, %v3542, 0
      %v3581 = vsel %vm681, %v3544, 0
      %v3584 = vsel %vm681, %v3546, 0
      %v3587 = vsel %vm681, %v3548, 0
      %v3590 = vsel %vm681, %v3550, 0
      %v3593 = vsel %vm681, %v3552, 0
      %v3596 = vsel %vm681, %v3554, 0
      %v3599 = vsel %vm681, %v3556, 0
      %v3602 = vsel %vm681, %v3558, 0
      %v3605 = vsel %vm681, %v3560, 0
      %v3608 = vsel %vm681, %v3562, 0
      %v3611 = vsel %vm681, %v3564, 0
      %v3614 = vsel %vm681, %v3566, 0
      %v3617 = vsel %vm681, %v3568, 0
      %v3620 = vsel %vm681, %v3570, 0
      %v3623 = vsel %vm681, %v3572, 0
      %v3626 = vsel %vm681, %v3574, 0
      %v3629 = vsel %vm681, %v3576, 0
      %v3632 = vsel %vm736, %v3535, 0
      %3634 = vmatprep.subr.bf16.mxu0 0
      %3635 = vmatpush1.bf16.msra.mxu0 0
      %3636 = vmatprep.subr.bf16.mxu0 0
      %3637 = vmatpush1.bf16.msra.mxu0 0
      %3638 = vmatprep.subr.bf16.mxu0 0
      %3639 = vmatpush1.bf16.msra.mxu0 0
      %3640 = vmatprep.subr.bf16.mxu0 0
      %3641 = vmatpush1.bf16.msra.mxu0 0
      %3642 = vmatprep.subr.bf16.mxu0 0
      %3643 = vmatpush1.bf16.msra.mxu0 0
      %3644 = vmatprep.subr.bf16.mxu0 0
      %3645 = vmatpush1.bf16.msra.mxu0 0
      %3646 = vmatprep.subr.bf16.mxu0 0
      %3647 = vmatpush1.bf16.msra.mxu0 0
      %3648 = vmatprep.subr.bf16.mxu0 0
      %3649 = vmatpush1.bf16.msra.mxu0 %v3632
      %3650 = vmatprep.subr.bf16.mxu0 0
      %3651 = vmatpush2.bf16.msra.mxu0 0
      %3652 = vmatprep.subr.bf16.mxu0 0
      %3653 = vmatpush2.bf16.msra.mxu0 0
      %3654 = vmatprep.subr.bf16.mxu0 0
      %3655 = vmatpush2.bf16.msra.mxu0 0
      %3656 = vmatprep.subr.bf16.mxu0 0
      %3657 = vmatpush2.bf16.msra.mxu0 0
      %3658 = vmatprep.subr.bf16.mxu0 0
      %3659 = vmatpush2.bf16.msra.mxu0 0
      %3660 = vmatprep.subr.bf16.mxu0 0
      %3661 = vmatpush2.bf16.msra.mxu0 0
      %3662 = vmatprep.subr.bf16.mxu0 0
      %3663 = vmatpush2.bf16.msra.mxu0 0
      %3664 = vmatprep.subr.bf16.mxu0 0
      %3665 = vmatpush2.bf16.msra.mxu0 0
      %3666 = vmatprep.mubr.bf16.mxu0 0
      %3667 = vmatmul.mubr.bf16.gmra.mxu0 %v3578
      %v3668 = vpop.f32.mrf.mxu0
      %v3669 = vadd.f32 0.0, %v3668
      %v3670 = vpop.f32.mrf.mxu0
      %v3671 = vpop.f32.mrf.mxu0
      %v3672 = vadd.f32 0.0, %v3671
      %v3673 = vpop.f32.mrf.mxu0
      %3674 = vmatprep.mubr.bf16.mxu0 0
      %3675 = vmatmul.mubr.bf16.gmra.mxu0 %v3581
      %v3676 = vpop.f32.mrf.mxu0
      %v3677 = vadd.f32 0.0, %v3676
      %v3678 = vpop.f32.mrf.mxu0
      %v3679 = vpop.f32.mrf.mxu0
      %v3680 = vadd.f32 0.0, %v3679
      %v3681 = vpop.f32.mrf.mxu0
      %3682 = vmatprep.mubr.bf16.mxu0 0
      %3683 = vmatmul.mubr.bf16.gmra.mxu0 %v3584
      %v3684 = vpop.f32.mrf.mxu0
      %v3685 = vadd.f32 0.0, %v3684
      %v3686 = vpop.f32.mrf.mxu0
      %v3687 = vpop.f32.mrf.mxu0
      %v3688 = vadd.f32 0.0, %v3687
      %v3689 = vpop.f32.mrf.mxu0
      %3690 = vmatprep.mubr.bf16.mxu0 0
      %3691 = vmatmul.mubr.bf16.gmra.mxu0 %v3587
      %v3692 = vpop.f32.mrf.mxu0
      %v3693 = vadd.f32 0.0, %v3692
      %v3694 = vpop.f32.mrf.mxu0
      %v3695 = vpop.f32.mrf.mxu0
      %v3696 = vadd.f32 0.0, %v3695
      %v3697 = vpop.f32.mrf.mxu0
      %3698 = vmatprep.mubr.bf16.mxu0 0
      %3699 = vmatmul.mubr.bf16.gmra.mxu0 %v3590
      %v3700 = vpop.f32.mrf.mxu0
      %v3701 = vadd.f32 0.0, %v3700
      %v3702 = vpop.f32.mrf.mxu0
      %v3703 = vpop.f32.mrf.mxu0
      %v3704 = vadd.f32 0.0, %v3703
      %v3705 = vpop.f32.mrf.mxu0
      %3706 = vmatprep.mubr.bf16.mxu0 0
      %3707 = vmatmul.mubr.bf16.gmra.mxu0 %v3593
      %v3708 = vpop.f32.mrf.mxu0
      %v3709 = vadd.f32 0.0, %v3708
      %v3710 = vpop.f32.mrf.mxu0
      %v3711 = vpop.f32.mrf.mxu0
      %v3712 = vadd.f32 0.0, %v3711
      %v3713 = vpop.f32.mrf.mxu0
      %3714 = vmatprep.mubr.bf16.mxu0 0
      %3715 = vmatmul.mubr.bf16.gmra.mxu0 %v3596
      %v3716 = vpop.f32.mrf.mxu0
      %v3717 = vadd.f32 0.0, %v3716
      %v3718 = vpop.f32.mrf.mxu0
      %v3719 = vpop.f32.mrf.mxu0
      %v3720 = vadd.f32 0.0, %v3719
      %v3721 = vpop.f32.mrf.mxu0
      %3722 = vmatprep.mubr.bf16.mxu0 0
      %3723 = vmatmul.mubr.bf16.gmra.mxu0 %v3599
      %v3724 = vpop.f32.mrf.mxu0
      %v3725 = vadd.f32 0.0, %v3724
      %v3726 = vpop.f32.mrf.mxu0
      %v3727 = vpop.f32.mrf.mxu0
      %v3728 = vadd.f32 0.0, %v3727
      %v3729 = vpop.f32.mrf.mxu0
      %3730 = vmatprep.mubr.bf16.mxu0 0
      %3731 = vmatmul.mubr.bf16.gmra.mxu0 %v3602
      %v3732 = vpop.f32.mrf.mxu0
      %v3733 = vadd.f32 0.0, %v3732
      %v3734 = vpop.f32.mrf.mxu0
      %v3735 = vpop.f32.mrf.mxu0
      %v3736 = vadd.f32 0.0, %v3735
      %v3737 = vpop.f32.mrf.mxu0
      %3738 = vmatprep.mubr.bf16.mxu0 0
      %3739 = vmatmul.mubr.bf16.gmra.mxu0 %v3605
      %v3740 = vpop.f32.mrf.mxu0
      %v3741 = vadd.f32 0.0, %v3740
      %v3742 = vpop.f32.mrf.mxu0
      %v3743 = vpop.f32.mrf.mxu0
      %v3744 = vadd.f32 0.0, %v3743
      %v3745 = vpop.f32.mrf.mxu0
      %3746 = vmatprep.mubr.bf16.mxu0 0
      %3747 = vmatmul.mubr.bf16.gmra.mxu0 %v3608
      %v3748 = vpop.f32.mrf.mxu0
      %v3749 = vadd.f32 0.0, %v3748
      %v3750 = vpop.f32.mrf.mxu0
      %v3751 = vpop.f32.mrf.mxu0
      %v3752 = vadd.f32 0.0, %v3751
      %v3753 = vpop.f32.mrf.mxu0
      %3754 = vmatprep.mubr.bf16.mxu0 0
      %3755 = vmatmul.mubr.bf16.gmra.mxu0 %v3611
      %v3756 = vpop.f32.mrf.mxu0
      %v3757 = vadd.f32 0.0, %v3756
      %v3758 = vpop.f32.mrf.mxu0
      %v3759 = vpop.f32.mrf.mxu0
      %v3760 = vadd.f32 0.0, %v3759
      %v3761 = vpop.f32.mrf.mxu0
      %3762 = vmatprep.mubr.bf16.mxu0 0
      %3763 = vmatmul.mubr.bf16.gmra.mxu0 %v3614
      %v3764 = vpop.f32.mrf.mxu0
      %v3765 = vadd.f32 0.0, %v3764
      %v3766 = vpop.f32.mrf.mxu0
      %v3767 = vpop.f32.mrf.mxu0
      %v3768 = vadd.f32 0.0, %v3767
      %v3769 = vpop.f32.mrf.mxu0
      %3770 = vmatprep.mubr.bf16.mxu0 0
      %3771 = vmatmul.mubr.bf16.gmra.mxu0 %v3617
      %v3772 = vpop.f32.mrf.mxu0
      %v3773 = vadd.f32 0.0, %v3772
      %v3774 = vpop.f32.mrf.mxu0
      %v3775 = vpop.f32.mrf.mxu0
      %v3776 = vadd.f32 0.0, %v3775
      %v3777 = vpop.f32.mrf.mxu0
      %3778 = vmatprep.mubr.bf16.mxu0 0
      %3779 = vmatmul.mubr.bf16.gmra.mxu0 %v3620
      %v3780 = vpop.f32.mrf.mxu0
      %v3781 = vadd.f32 0.0, %v3780
      %v3782 = vpop.f32.mrf.mxu0
      %v3783 = vpop.f32.mrf.mxu0
      %v3784 = vadd.f32 0.0, %v3783
      %v3785 = vpop.f32.mrf.mxu0
      %3786 = vmatprep.mubr.bf16.mxu0 0
      %3787 = vmatmul.mubr.bf16.gmra.mxu0 %v3623
      %v3788 = vpop.f32.mrf.mxu0
      %v3789 = vadd.f32 0.0, %v3788
      %v3790 = vpop.f32.mrf.mxu0
      %v3791 = vpop.f32.mrf.mxu0
      %v3792 = vadd.f32 0.0, %v3791
      %v3793 = vpop.f32.mrf.mxu0
      %3794 = vmatprep.mubr.bf16.mxu0 0
      %3795 = vmatmul.mubr.bf16.gmra.mxu0 %v3626
      %v3796 = vpop.f32.mrf.mxu0
      %v3797 = vadd.f32 0.0, %v3796
      %v3798 = vpop.f32.mrf.mxu0
      %v3799 = vpop.f32.mrf.mxu0
      %v3800 = vadd.f32 0.0, %v3799
      %v3801 = vpop.f32.mrf.mxu0
      %3802 = vmatprep.mubr.bf16.mxu0 0
      %3803 = vmatmul.mubr.bf16.gmra.mxu0 %v3629
      %v3804 = vpop.f32.mrf.mxu0
      %v3805 = vadd.f32 0.0, %v3804
      %v3806 = vpop.f32.mrf.mxu0
      %v3807 = vpop.f32.mrf.mxu0
      %v3808 = vadd.f32 0.0, %v3807
      %v3809 = vpop.f32.mrf.mxu0
      %3810 = vdwg.mxu0
      %v3811 = vadd.f32 %v3497, %v3669
      %v3812 = vadd.f32 %v3498, %v3672
      %v3813 = vadd.f32 %v3499, %v3677
      %v3814 = vadd.f32 %v3500, %v3680
      %v3815 = vadd.f32 %v3501, %v3685
      %v3816 = vadd.f32 %v3502, %v3688
      %v3817 = vadd.f32 %v3503, %v3693
      %v3818 = vadd.f32 %v3504, %v3696
      %v3819 = vadd.f32 %v3505, %v3701
      %v3820 = vadd.f32 %v3506, %v3704
      %v3821 = vadd.f32 %v3507, %v3709
      %v3822 = vadd.f32 %v3508, %v3712
      %v3823 = vadd.f32 %v3509, %v3717
      %v3824 = vadd.f32 %v3510, %v3720
      %v3825 = vadd.f32 %v3511, %v3725
      %v3826 = vadd.f32 %v3512, %v3728
      %v3827 = vadd.f32 %v3513, %v3733
      %v3828 = vadd.f32 %v3514, %v3736
      %v3829 = vadd.f32 %v3515, %v3741
      %v3830 = vadd.f32 %v3516, %v3744
      %v3831 = vadd.f32 %v3517, %v3749
      %v3832 = vadd.f32 %v3518, %v3752
      %v3833 = vadd.f32 %v3519, %v3757
      %v3834 = vadd.f32 %v3520, %v3760
      %v3835 = vadd.f32 %v3521, %v3765
      %v3836 = vadd.f32 %v3522, %v3768
      %v3837 = vadd.f32 %v3523, %v3773
      %v3838 = vadd.f32 %v3524, %v3776
      %v3839 = vadd.f32 %v3525, %v3781
      %v3840 = vadd.f32 %v3526, %v3784
      %v3841 = vadd.f32 %v3527, %v3789
      %v3842 = vadd.f32 %v3528, %v3792
      %v3843 = vadd.f32 %v3529, %v3797
      %v3844 = vadd.f32 %v3530, %v3800
      %v3845 = vadd.f32 %v3531, %v3805
      %v3846 = vadd.f32 %v3532, %v3808
      %v3847 = vld [vmem:[%s3] sm:$0x1]
      %v3849 = vlaneseq
      %v3850 = vshrl.u32 %v3849, 7
      %v3851 = vsub.s32 0, %v3850
      %v3852 = vrot.slane %v3847, %v3851
      %v3854 = vadd.f32 %v3811, %v3852
      %v3855 = vadd.f32 %v3812, %v3852
      %v3856 = vadd.f32 %v3813, %v3852
      %v3857 = vadd.f32 %v3814, %v3852
      %v3858 = vadd.f32 %v3815, %v3852
      %v3859 = vadd.f32 %v3816, %v3852
      %v3860 = vadd.f32 %v3817, %v3852
      %v3861 = vadd.f32 %v3818, %v3852
      %v3862 = vadd.f32 %v3819, %v3852
      %v3863 = vadd.f32 %v3820, %v3852
      %v3864 = vadd.f32 %v3821, %v3852
      %v3865 = vadd.f32 %v3822, %v3852
      %v3866 = vadd.f32 %v3823, %v3852
      %v3867 = vadd.f32 %v3824, %v3852
      %v3868 = vadd.f32 %v3825, %v3852
      %v3869 = vadd.f32 %v3826, %v3852
      %v3870 = vadd.f32 %v3827, %v3852
      %v3871 = vadd.f32 %v3828, %v3852
      %v3872 = vadd.f32 %v3829, %v3852
      %v3873 = vadd.f32 %v3830, %v3852
      %v3874 = vadd.f32 %v3831, %v3852
      %v3875 = vadd.f32 %v3832, %v3852
      %v3876 = vadd.f32 %v3833, %v3852
      %v3877 = vadd.f32 %v3834, %v3852
      %v3878 = vadd.f32 %v3835, %v3852
      %v3879 = vadd.f32 %v3836, %v3852
      %v3880 = vadd.f32 %v3837, %v3852
      %v3881 = vadd.f32 %v3838, %v3852
      %v3882 = vadd.f32 %v3839, %v3852
      %v3883 = vadd.f32 %v3840, %v3852
      %v3884 = vadd.f32 %v3841, %v3852
      %v3885 = vadd.f32 %v3842, %v3852
      %v3886 = vadd.f32 %v3843, %v3852
      %v3887 = vadd.f32 %v3844, %v3852
      %v3888 = vadd.f32 %v3845, %v3852
      %v3889 = vadd.f32 %v3846, %v3852
      %v3890 = vmul.f32 %v3854, %v3854
      %v3891 = vmul.f32 %v3855, %v3855
      %v3892 = vmul.f32 %v3856, %v3856
      %v3893 = vmul.f32 %v3857, %v3857
      %v3894 = vmul.f32 %v3858, %v3858
      %v3895 = vmul.f32 %v3859, %v3859
      %v3896 = vmul.f32 %v3860, %v3860
      %v3897 = vmul.f32 %v3861, %v3861
      %v3898 = vmul.f32 %v3862, %v3862
      %v3899 = vmul.f32 %v3863, %v3863
      %v3900 = vmul.f32 %v3864, %v3864
      %v3901 = vmul.f32 %v3865, %v3865
      %v3902 = vmul.f32 %v3866, %v3866
      %v3903 = vmul.f32 %v3867, %v3867
      %v3904 = vmul.f32 %v3868, %v3868
      %v3905 = vmul.f32 %v3869, %v3869
      %v3906 = vmul.f32 %v3870, %v3870
      %v3907 = vmul.f32 %v3871, %v3871
      %v3908 = vmul.f32 %v3872, %v3872
      %v3909 = vmul.f32 %v3873, %v3873
      %v3910 = vmul.f32 %v3874, %v3874
      %v3911 = vmul.f32 %v3875, %v3875
      %v3912 = vmul.f32 %v3876, %v3876
      %v3913 = vmul.f32 %v3877, %v3877
      %v3914 = vmul.f32 %v3878, %v3878
      %v3915 = vmul.f32 %v3879, %v3879
      %v3916 = vmul.f32 %v3880, %v3880
      %v3917 = vmul.f32 %v3881, %v3881
      %v3918 = vmul.f32 %v3882, %v3882
      %v3919 = vmul.f32 %v3883, %v3883
      %v3920 = vmul.f32 %v3884, %v3884
      %v3921 = vmul.f32 %v3885, %v3885
      %v3922 = vmul.f32 %v3886, %v3886
      %v3923 = vmul.f32 %v3887, %v3887
      %v3924 = vmul.f32 %v3888, %v3888
      %v3925 = vmul.f32 %v3889, %v3889
      %3926 = vadd.xlane.f32.xlu0 %v3890
      %v3927 = vpop.xlane.xlu0 %3926
      %3928 = vadd.xlane.f32.xlu0 %v3891
      %v3929 = vpop.xlane.xlu0 %3928
      %3930 = vadd.xlane.f32.xlu0 %v3892
      %v3931 = vpop.xlane.xlu0 %3930
      %3932 = vadd.xlane.f32.xlu0 %v3893
      %v3933 = vpop.xlane.xlu0 %3932
      %3934 = vadd.xlane.f32.xlu0 %v3894
      %v3935 = vpop.xlane.xlu0 %3934
      %3936 = vadd.xlane.f32.xlu0 %v3895
      %v3937 = vpop.xlane.xlu0 %3936
      %3938 = vadd.xlane.f32.xlu0 %v3896
      %v3939 = vpop.xlane.xlu0 %3938
      %3940 = vadd.xlane.f32.xlu0 %v3897
      %v3941 = vpop.xlane.xlu0 %3940
      %3942 = vadd.xlane.f32.xlu0 %v3898
      %v3943 = vpop.xlane.xlu0 %3942
      %3944 = vadd.xlane.f32.xlu0 %v3899
      %v3945 = vpop.xlane.xlu0 %3944
      %3946 = vadd.xlane.f32.xlu0 %v3900
      %v3947 = vpop.xlane.xlu0 %3946
      %3948 = vadd.xlane.f32.xlu0 %v3901
      %v3949 = vpop.xlane.xlu0 %3948
      %3950 = vadd.xlane.f32.xlu0 %v3902
      %v3951 = vpop.xlane.xlu0 %3950
      %3952 = vadd.xlane.f32.xlu0 %v3903
      %v3953 = vpop.xlane.xlu0 %3952
      %3954 = vadd.xlane.f32.xlu0 %v3904
      %v3955 = vpop.xlane.xlu0 %3954
      %3956 = vadd.xlane.f32.xlu0 %v3905
      %v3957 = vpop.xlane.xlu0 %3956
      %3958 = vadd.xlane.f32.xlu0 %v3906
      %v3959 = vpop.xlane.xlu0 %3958
      %3960 = vadd.xlane.f32.xlu0 %v3907
      %v3961 = vpop.xlane.xlu0 %3960
      %3962 = vadd.xlane.f32.xlu0 %v3908
      %v3963 = vpop.xlane.xlu0 %3962
      %3964 = vadd.xlane.f32.xlu0 %v3909
      %v3965 = vpop.xlane.xlu0 %3964
      %3966 = vadd.xlane.f32.xlu0 %v3910
      %v3967 = vpop.xlane.xlu0 %3966
      %3968 = vadd.xlane.f32.xlu0 %v3911
      %v3969 = vpop.xlane.xlu0 %3968
      %3970 = vadd.xlane.f32.xlu0 %v3912
      %v3971 = vpop.xlane.xlu0 %3970
      %3972 = vadd.xlane.f32.xlu0 %v3913
      %v3973 = vpop.xlane.xlu0 %3972
      %3974 = vadd.xlane.f32.xlu0 %v3914
      %v3975 = vpop.xlane.xlu0 %3974
      %3976 = vadd.xlane.f32.xlu0 %v3915
      %v3977 = vpop.xlane.xlu0 %3976
      %3978 = vadd.xlane.f32.xlu0 %v3916
      %v3979 = vpop.xlane.xlu0 %3978
      %3980 = vadd.xlane.f32.xlu0 %v3917
      %v3981 = vpop.xlane.xlu0 %3980
      %3982 = vadd.xlane.f32.xlu0 %v3918
      %v3983 = vpop.xlane.xlu0 %3982
      %3984 = vadd.xlane.f32.xlu0 %v3919
      %v3985 = vpop.xlane.xlu0 %3984
      %3986 = vadd.xlane.f32.xlu0 %v3920
      %v3987 = vpop.xlane.xlu0 %3986
      %3988 = vadd.xlane.f32.xlu0 %v3921
      %v3989 = vpop.xlane.xlu0 %3988
      %3990 = vadd.xlane.f32.xlu0 %v3922
      %v3991 = vpop.xlane.xlu0 %3990
      %3992 = vadd.xlane.f32.xlu0 %v3923
      %v3993 = vpop.xlane.xlu0 %3992
      %3994 = vadd.xlane.f32.xlu0 %v3924
      %v3995 = vpop.xlane.xlu0 %3994
      %3996 = vadd.xlane.f32.xlu0 %v3925
      %v3997 = vpop.xlane.xlu0 %3996
      %v3998 = vmul.f32 %v3927, 0.125
      %v3999 = vmul.f32 %v3929, 0.125
      %v4000 = vmul.f32 %v3931, 0.125
      %v4001 = vmul.f32 %v3933, 0.125
      %v4002 = vmul.f32 %v3935, 0.125
      %v4003 = vmul.f32 %v3937, 0.125
      %v4004 = vmul.f32 %v3939, 0.125
      %v4005 = vmul.f32 %v3941, 0.125
      %v4006 = vmul.f32 %v3943, 0.125
      %v4007 = vmul.f32 %v3945, 0.125
      %v4008 = vmul.f32 %v3947, 0.125
      %v4009 = vmul.f32 %v3949, 0.125
      %v4010 = vmul.f32 %v3951, 0.125
      %v4011 = vmul.f32 %v3953, 0.125
      %v4012 = vmul.f32 %v3955, 0.125
      %v4013 = vmul.f32 %v3957, 0.125
      %v4014 = vmul.f32 %v3959, 0.125
      %v4015 = vmul.f32 %v3961, 0.125
      %v4016 = vmul.f32 %v3963, 0.125
      %v4017 = vmul.f32 %v3965, 0.125
      %v4018 = vmul.f32 %v3967, 0.125
      %v4019 = vmul.f32 %v3969, 0.125
      %v4020 = vmul.f32 %v3971, 0.125
      %v4021 = vmul.f32 %v3973, 0.125
      %v4022 = vmul.f32 %v3975, 0.125
      %v4023 = vmul.f32 %v3977, 0.125
      %v4024 = vmul.f32 %v3979, 0.125
      %v4025 = vmul.f32 %v3981, 0.125
      %v4026 = vmul.f32 %v3983, 0.125
      %v4027 = vmul.f32 %v3985, 0.125
      %v4028 = vmul.f32 %v3987, 0.125
      %v4029 = vmul.f32 %v3989, 0.125
      %v4030 = vmul.f32 %v3991, 0.125
      %v4031 = vmul.f32 %v3993, 0.125
      %v4032 = vmul.f32 %v3995, 0.125
      %v4033 = vmul.f32 %v3997, 0.125
      %v4034 = vadd.f32 %v3998, 1e-08
      %v4035 = vadd.f32 %v3999, 1e-08
      %v4036 = vadd.f32 %v4000, 1e-08
      %v4037 = vadd.f32 %v4001, 1e-08
      %v4038 = vadd.f32 %v4002, 1e-08
      %v4039 = vadd.f32 %v4003, 1e-08
      %v4040 = vadd.f32 %v4004, 1e-08
      %v4041 = vadd.f32 %v4005, 1e-08
      %v4042 = vadd.f32 %v4006, 1e-08
      %v4043 = vadd.f32 %v4007, 1e-08
      %v4044 = vadd.f32 %v4008, 1e-08
      %v4045 = vadd.f32 %v4009, 1e-08
      %v4046 = vadd.f32 %v4010, 1e-08
      %v4047 = vadd.f32 %v4011, 1e-08
      %v4048 = vadd.f32 %v4012, 1e-08
      %v4049 = vadd.f32 %v4013, 1e-08
      %v4050 = vadd.f32 %v4014, 1e-08
      %v4051 = vadd.f32 %v4015, 1e-08
      %v4052 = vadd.f32 %v4016, 1e-08
      %v4053 = vadd.f32 %v4017, 1e-08
      %v4054 = vadd.f32 %v4018, 1e-08
      %v4055 = vadd.f32 %v4019, 1e-08
      %v4056 = vadd.f32 %v4020, 1e-08
      %v4057 = vadd.f32 %v4021, 1e-08
      %v4058 = vadd.f32 %v4022, 1e-08
      %v4059 = vadd.f32 %v4023, 1e-08
      %v4060 = vadd.f32 %v4024, 1e-08
      %v4061 = vadd.f32 %v4025, 1e-08
      %v4062 = vadd.f32 %v4026, 1e-08
      %v4063 = vadd.f32 %v4027, 1e-08
      %v4064 = vadd.f32 %v4028, 1e-08
      %v4065 = vadd.f32 %v4029, 1e-08
      %v4066 = vadd.f32 %v4030, 1e-08
      %v4067 = vadd.f32 %v4031, 1e-08
      %v4068 = vadd.f32 %v4032, 1e-08
      %v4069 = vadd.f32 %v4033, 1e-08
      %v4070 = vrsqrt.pop %v4034
      %v4071 = vrsqrt.pop %v4035
      %v4072 = vrsqrt.pop %v4036
      %v4073 = vrsqrt.pop %v4037
      %v4074 = vrsqrt.pop %v4038
      %v4075 = vrsqrt.pop %v4039
      %v4076 = vrsqrt.pop %v4040
      %v4077 = vrsqrt.pop %v4041
      %v4078 = vrsqrt.pop %v4042
      %v4079 = vrsqrt.pop %v4043
      %v4080 = vrsqrt.pop %v4044
      %v4081 = vrsqrt.pop %v4045
      %v4082 = vrsqrt.pop %v4046
      %v4083 = vrsqrt.pop %v4047
      %v4084 = vrsqrt.pop %v4048
      %v4085 = vrsqrt.pop %v4049
      %v4086 = vrsqrt.pop %v4050
      %v4087 = vrsqrt.pop %v4051
      %v4088 = vrsqrt.pop %v4052
      %v4089 = vrsqrt.pop %v4053
      %v4090 = vrsqrt.pop %v4054
      %v4091 = vrsqrt.pop %v4055
      %v4092 = vrsqrt.pop %v4056
      %v4093 = vrsqrt.pop %v4057
      %v4094 = vrsqrt.pop %v4058
      %v4095 = vrsqrt.pop %v4059
      %v4096 = vrsqrt.pop %v4060
      %v4097 = vrsqrt.pop %v4061
      %v4098 = vrsqrt.pop %v4062
      %v4099 = vrsqrt.pop %v4063
      %v4100 = vrsqrt.pop %v4064
      %v4101 = vrsqrt.pop %v4065
      %v4102 = vrsqrt.pop %v4066
      %v4103 = vrsqrt.pop %v4067
      %v4104 = vrsqrt.pop %v4068
      %v4105 = vrsqrt.pop %v4069
      %v4106 = vmul.f32 %v3854, %v4070
      %v4107 = vmul.f32 %v3855, %v4071
      %v4108 = vmul.f32 %v3856, %v4072
      %v4109 = vmul.f32 %v3857, %v4073
      %v4110 = vmul.f32 %v3858, %v4074
      %v4111 = vmul.f32 %v3859, %v4075
      %v4112 = vmul.f32 %v3860, %v4076
      %v4113 = vmul.f32 %v3861, %v4077
      %v4114 = vmul.f32 %v3862, %v4078
      %v4115 = vmul.f32 %v3863, %v4079
      %v4116 = vmul.f32 %v3864, %v4080
      %v4117 = vmul.f32 %v3865, %v4081
      %v4118 = vmul.f32 %v3866, %v4082
      %v4119 = vmul.f32 %v3867, %v4083
      %v4120 = vmul.f32 %v3868, %v4084
      %v4121 = vmul.f32 %v3869, %v4085
      %v4122 = vmul.f32 %v3870, %v4086
      %v4123 = vmul.f32 %v3871, %v4087
      %v4124 = vmul.f32 %v3872, %v4088
      %v4125 = vmul.f32 %v3873, %v4089
      %v4126 = vmul.f32 %v3874, %v4090
      %v4127 = vmul.f32 %v3875, %v4091
      %v4128 = vmul.f32 %v3876, %v4092
      %v4129 = vmul.f32 %v3877, %v4093
      %v4130 = vmul.f32 %v3878, %v4094
      %v4131 = vmul.f32 %v3879, %v4095
      %v4132 = vmul.f32 %v3880, %v4096
      %v4133 = vmul.f32 %v3881, %v4097
      %v4134 = vmul.f32 %v3882, %v4098
      %v4135 = vmul.f32 %v3883, %v4099
      %v4136 = vmul.f32 %v3884, %v4100
      %v4137 = vmul.f32 %v3885, %v4101
      %v4138 = vmul.f32 %v3886, %v4102
      %v4139 = vmul.f32 %v3887, %v4103
      %v4140 = vmul.f32 %v3888, %v4104
      %v4141 = vmul.f32 %v3889, %v4105
      %vm4142 = vcmp.ge.f32.partialorder %v4106, 0.0
      %vm4143 = vcmp.ge.f32.partialorder %v4107, 0.0
      %vm4144 = vcmp.ge.f32.partialorder %v4108, 0.0
      %vm4145 = vcmp.ge.f32.partialorder %v4109, 0.0
      %vm4146 = vcmp.ge.f32.partialorder %v4110, 0.0
      %vm4147 = vcmp.ge.f32.partialorder %v4111, 0.0
      %vm4148 = vcmp.ge.f32.partialorder %v4112, 0.0
      %vm4149 = vcmp.ge.f32.partialorder %v4113, 0.0
      %vm4150 = vcmp.ge.f32.partialorder %v4114, 0.0
      %vm4151 = vcmp.ge.f32.partialorder %v4115, 0.0
      %vm4152 = vcmp.ge.f32.partialorder %v4116, 0.0
      %vm4153 = vcmp.ge.f32.partialorder %v4117, 0.0
      %vm4154 = vcmp.ge.f32.partialorder %v4118, 0.0
      %vm4155 = vcmp.ge.f32.partialorder %v4119, 0.0
      %vm4156 = vcmp.ge.f32.partialorder %v4120, 0.0
      %vm4157 = vcmp.ge.f32.partialorder %v4121, 0.0
      %vm4158 = vcmp.ge.f32.partialorder %v4122, 0.0
      %vm4159 = vcmp.ge.f32.partialorder %v4123, 0.0
      %vm4160 = vcmp.ge.f32.partialorder %v4124, 0.0
      %vm4161 = vcmp.ge.f32.partialorder %v4125, 0.0
      %vm4162 = vcmp.ge.f32.partialorder %v4126, 0.0
      %vm4163 = vcmp.ge.f32.partialorder %v4127, 0.0
      %vm4164 = vcmp.ge.f32.partialorder %v4128, 0.0
      %vm4165 = vcmp.ge.f32.partialorder %v4129, 0.0
      %vm4166 = vcmp.ge.f32.partialorder %v4130, 0.0
      %vm4167 = vcmp.ge.f32.partialorder %v4131, 0.0
      %vm4168 = vcmp.ge.f32.partialorder %v4132, 0.0
      %vm4169 = vcmp.ge.f32.partialorder %v4133, 0.0
      %vm4170 = vcmp.ge.f32.partialorder %v4134, 0.0
      %vm4171 = vcmp.ge.f32.partialorder %v4135, 0.0
      %vm4172 = vcmp.ge.f32.partialorder %v4136, 0.0
      %vm4173 = vcmp.ge.f32.partialorder %v4137, 0.0
      %vm4174 = vcmp.ge.f32.partialorder %v4138, 0.0
      %vm4175 = vcmp.ge.f32.partialorder %v4139, 0.0
      %vm4176 = vcmp.ge.f32.partialorder %v4140, 0.0
      %vm4177 = vcmp.ge.f32.partialorder %v4141, 0.0
      %v4178 = vmul.f32 %v4106, 0.2
      %v4179 = vmul.f32 %v4107, 0.2
      %v4180 = vmul.f32 %v4108, 0.2
      %v4181 = vmul.f32 %v4109, 0.2
      %v4182 = vmul.f32 %v4110, 0.2
      %v4183 = vmul.f32 %v4111, 0.2
      %v4184 = vmul.f32 %v4112, 0.2
      %v4185 = vmul.f32 %v4113, 0.2
      %v4186 = vmul.f32 %v4114, 0.2
      %v4187 = vmul.f32 %v4115, 0.2
      %v4188 = vmul.f32 %v4116, 0.2
      %v4189 = vmul.f32 %v4117, 0.2
      %v4190 = vmul.f32 %v4118, 0.2
      %v4191 = vmul.f32 %v4119, 0.2
      %v4192 = vmul.f32 %v4120, 0.2
      %v4193 = vmul.f32 %v4121, 0.2
      %v4194 = vmul.f32 %v4122, 0.2
      %v4195 = vmul.f32 %v4123, 0.2
      %v4196 = vmul.f32 %v4124, 0.2
      %v4197 = vmul.f32 %v4125, 0.2
      %v4198 = vmul.f32 %v4126, 0.2
      %v4199 = vmul.f32 %v4127, 0.2
      %v4200 = vmul.f32 %v4128, 0.2
      %v4201 = vmul.f32 %v4129, 0.2
      %v4202 = vmul.f32 %v4130, 0.2
      %v4203 = vmul.f32 %v4131, 0.2
      %v4204 = vmul.f32 %v4132, 0.2
      %v4205 = vmul.f32 %v4133, 0.2
      %v4206 = vmul.f32 %v4134, 0.2
      %v4207 = vmul.f32 %v4135, 0.2
      %v4208 = vmul.f32 %v4136, 0.2
      %v4209 = vmul.f32 %v4137, 0.2
      %v4210 = vmul.f32 %v4138, 0.2
      %v4211 = vmul.f32 %v4139, 0.2
      %v4212 = vmul.f32 %v4140, 0.2
      %v4213 = vmul.f32 %v4141, 0.2
      %v4214 = vsel %vm4142, %v4106, %v4178
      %v4215 = vsel %vm4143, %v4107, %v4179
      %v4216 = vsel %vm4144, %v4108, %v4180
      %v4217 = vsel %vm4145, %v4109, %v4181
      %v4218 = vsel %vm4146, %v4110, %v4182
      %v4219 = vsel %vm4147, %v4111, %v4183
      %v4220 = vsel %vm4148, %v4112, %v4184
      %v4221 = vsel %vm4149, %v4113, %v4185
      %v4222 = vsel %vm4150, %v4114, %v4186
      %v4223 = vsel %vm4151, %v4115, %v4187
      %v4224 = vsel %vm4152, %v4116, %v4188
      %v4225 = vsel %vm4153, %v4117, %v4189
      %v4226 = vsel %vm4154, %v4118, %v4190
      %v4227 = vsel %vm4155, %v4119, %v4191
      %v4228 = vsel %vm4156, %v4120, %v4192
      %v4229 = vsel %vm4157, %v4121, %v4193
      %v4230 = vsel %vm4158, %v4122, %v4194
      %v4231 = vsel %vm4159, %v4123, %v4195
      %v4232 = vsel %vm4160, %v4124, %v4196
      %v4233 = vsel %vm4161, %v4125, %v4197
      %v4234 = vsel %vm4162, %v4126, %v4198
      %v4235 = vsel %vm4163, %v4127, %v4199
      %v4236 = vsel %vm4164, %v4128, %v4200
      %v4237 = vsel %vm4165, %v4129, %v4201
      %v4238 = vsel %vm4166, %v4130, %v4202
      %v4239 = vsel %vm4167, %v4131, %v4203
      %v4240 = vsel %vm4168, %v4132, %v4204
      %v4241 = vsel %vm4169, %v4133, %v4205
      %v4242 = vsel %vm4170, %v4134, %v4206
      %v4243 = vsel %vm4171, %v4135, %v4207
      %v4244 = vsel %vm4172, %v4136, %v4208
      %v4245 = vsel %vm4173, %v4137, %v4209
      %v4246 = vsel %vm4174, %v4138, %v4210
      %v4247 = vsel %vm4175, %v4139, %v4211
      %v4248 = vsel %vm4176, %v4140, %v4212
      %v4249 = vsel %vm4177, %v4141, %v4213
      %4250 = vst [vmem:[%s305] sm:$0xff] %v4214
      %4251 = vst [vmem:[%s305 + $0x8] sm:$0xff] %v4215
      %4252 = vst [vmem:[%s305 + $0x10] sm:$0xff] %v4216
      %4253 = vst [vmem:[%s305 + $0x18] sm:$0xff] %v4217
      %4254 = vst [vmem:[%s305 + $0x20] sm:$0xff] %v4218
      %4255 = vst [vmem:[%s305 + $0x28] sm:$0xff] %v4219
      %4256 = vst [vmem:[%s305 + $0x30] sm:$0xff] %v4220
      %4257 = vst [vmem:[%s305 + $0x38] sm:$0xff] %v4221
      %4258 = vst [vmem:[%s305 + $0x40] sm:$0xff] %v4222
      %4259 = vst [vmem:[%s305 + $0x48] sm:$0xff] %v4223
      %4260 = vst [vmem:[%s305 + $0x50] sm:$0xff] %v4224
      %4261 = vst [vmem:[%s305 + $0x58] sm:$0xff] %v4225
      %4262 = vst [vmem:[%s305 + $0x60] sm:$0xff] %v4226
      %4263 = vst [vmem:[%s305 + $0x68] sm:$0xff] %v4227
      %4264 = vst [vmem:[%s305 + $0x70] sm:$0xff] %v4228
      %4265 = vst [vmem:[%s305 + $0x78] sm:$0xff] %v4229
      %4266 = vst [vmem:[%s305 + $0x80] sm:$0xff] %v4230
      %4267 = vst [vmem:[%s305 + $0x88] sm:$0xff] %v4231
      %4268 = vst [vmem:[%s305 + $0x90] sm:$0xff] %v4232
      %4269 = vst [vmem:[%s305 + $0x98] sm:$0xff] %v4233
      %4270 = vst [vmem:[%s305 + $0xa0] sm:$0xff] %v4234
      %4271 = vst [vmem:[%s305 + $0xa8] sm:$0xff] %v4235
      %4272 = vst [vmem:[%s305 + $0xb0] sm:$0xff] %v4236
      %4273 = vst [vmem:[%s305 + $0xb8] sm:$0xff] %v4237
      %4274 = vst [vmem:[%s305 + $0xc0] sm:$0xff] %v4238
      %4275 = vst [vmem:[%s305 + $0xc8] sm:$0xff] %v4239
      %4276 = vst [vmem:[%s305 + $0xd0] sm:$0xff] %v4240
      %4277 = vst [vmem:[%s305 + $0xd8] sm:$0xff] %v4241
      %4278 = vst [vmem:[%s305 + $0xe0] sm:$0xff] %v4242
      %4279 = vst [vmem:[%s305 + $0xe8] sm:$0xff] %v4243
      %4280 = vst [vmem:[%s305 + $0xf0] sm:$0xff] %v4244
      %4281 = vst [vmem:[%s305 + $0xf8] sm:$0xff] %v4245
      %4282 = vst [vmem:[%s305 + $0x100] sm:$0xff] %v4246
      %4283 = vst [vmem:[%s305 + $0x108] sm:$0xff] %v4247
      %4284 = vst [vmem:[%s305 + $0x110] sm:$0xff] %v4248
      %4285 = vst [vmem:[%s305 + $0x118] sm:$0xff] %v4249
      %s4286 = smul.u32 36, %s20
      %p4287 = scmp.lt.s32.totalorder %s19, 1
      %s4288 = scalar_select %p4287, %s19, 1
      %p4289 = scmp.lt.s32.totalorder %s4286, 35
      %s4290 = scalar_select %p4289, %s4286, 35
      %s4291 = smul.addr %s4288, 36
      %s4292 = sadd.s32 %s4290, %s4291
      %s4293 = smul.addr %s4292, 8
      %s4294 = scalar_lea.vmem %s4, %s4293
      // Predicated region
      $region37: #{conv_block.1} parent=35 // pred_check
        %p4295 = pneg %p149
      $region38: #{conv_block.1} parent=35 // pred_check_branch
        %4297 = sbr.rel (%p4295) target = $region40
      $region39: #{conv_block.1} parent=35 // pred_region
        %s4298 = smul.u32 36, %s20
      $region40: #{conv_block.1} parent=35 // pred_fallthru
        _
    $region36: #{conv_block.1} parent=5 // pred_fallthru
      _
    %p4299 = scmp.le.s32.totalorder 2, %s10
    // Predicated region
    $region41: #{conv_block.1} parent=5 // pred_check
      %p4300 = pneg %p4299
    $region42: #{conv_block.1} parent=5 // pred_check_branch
      %4302 = sbr.rel (%p4300) target = $region44
    $region43: #{conv_block.1} parent=5 // pred_region
      %s4303 = ssub.s32 %s10, 2
      // Predicated region
      $region45: #{conv_block.1} parent=43 // pred_check
        %p4304 = pneg %p155
      $region46: #{conv_block.1} parent=43 // pred_check_branch
        %4306 = sbr.rel (%p4304) target = $region48
      $region47: #{conv_block.1} parent=43 // pred_region
        %s4307 = smul.u32 36, %s22
        %p4308 = scmp.lt.s32.totalorder %s21, 1
        %s4309 = scalar_select %p4308, %s21, 1
        %p4310 = scmp.lt.s32.totalorder %s4307, 35
        %s4311 = scalar_select %p4310, %s4307, 35
        %s4312 = smul.addr %s4309, 36
        %s4313 = sadd.s32 %s4311, %s4312
        %s4314 = smul.addr %s4313, 8
        %s4315 = scalar_lea.vmem %s4, %s4314
      $region48: #{conv_block.1} parent=43 // pred_fallthru
        _
    $region44: #{conv_block.1} parent=5 // pred_fallthru
      _
  $region6: #{conv_block.1} parent=0 // loop_footer
    %s14 = sadd.s32 1, %s10
  $region7: #{conv_block.1} parent=0 // loop_footer_branch
    %9 = sbr.rel target = $region3
  $region8: #{conv_block.1} parent=0 // loop_exit
    _

</llo_original>
